<compile_context>
chip_gen: v5e
topology: v5e:2x2
jax: 0.10.0
libtpu: 0.0.40
codegen_flags: <defaults>
</compile_context>

<pallas_src>
import numpy as np
import jax
import jax.numpy as jnp
from jax import lax
from jax.experimental import pallas as pl
from jax.experimental.pallas import tpu as pltpu

CMID = 64  # conv channels (fixed by the module)


# ----------------------------------------------------------------------------
# Fused kernel.
#   x_ref  : (L, Bt, Cin)     input (unpadded; zero taps built in-kernel)
#   w1_ref : (3, Cin, 64)     per-tap conv1 weights (f32)
#   b1_ref : (1, 64)
#   w2_ref : (3, 64, 64)      per-tap conv2 weights (compute dtype)
#   b2_ref : (1, 64)
#   wl_ref : (L, 64, 128)     linear weight, wl[l, c, d] = lin_w[d, c*L + l]
#   bl_ref : (1, 128)
#   wq_ref : (128, H*A)       value + advantage heads folded into one matrix
#   bq_ref : (1, H*A)
#   out_ref: (Bt, H*A)        q-values, single lane-contiguous store
# ----------------------------------------------------------------------------
def _dqn_kernel(x_ref, w1_ref, b1_ref, w2_ref, b2_ref, wl_ref, bl_ref,
                wq_ref, bq_ref, out_ref):
    L, bt, cin = x_ref.shape
    cdt = w2_ref.dtype  # compute dtype of the big matmuls (f32 or bf16)

    # ---- conv1: three accumulating K=cin matmuls, one per tap (k-1, k, k+1). ----
    x = x_ref[...].astype(jnp.float32)
    zx = jnp.zeros((1, bt, cin), jnp.float32)
    xm = jnp.concatenate([zx, x[:L - 1]], axis=0).reshape(L * bt, cin)   # x[l-1]
    xc = x.reshape(L * bt, cin)                                          # x[l]
    xp = jnp.concatenate([x[1:], zx], axis=0).reshape(L * bt, cin)       # x[l+1]

    h1 = (jnp.dot(xm, w1_ref[0], preferred_element_type=jnp.float32)
          + jnp.dot(xc, w1_ref[1], preferred_element_type=jnp.float32)
          + jnp.dot(xp, w1_ref[2], preferred_element_type=jnp.float32))
    h1 = jnp.maximum(h1 + b1_ref[...], 0.0).reshape(L, bt, CMID)

    # ---- conv2: same 3-tap accumulating form (no 192-lane im2col concat). ----
    zh = jnp.zeros((1, bt, CMID), jnp.float32)
    h1m = jnp.concatenate([zh, h1[:L - 1]], axis=0).reshape(L * bt, CMID).astype(cdt)
    h1c = h1.reshape(L * bt, CMID).astype(cdt)
    h1p = jnp.concatenate([h1[1:], zh], axis=0).reshape(L * bt, CMID).astype(cdt)

    h2 = (jnp.dot(h1m, w2_ref[0], preferred_element_type=jnp.float32)
          + jnp.dot(h1c, w2_ref[1], preferred_element_type=jnp.float32)
          + jnp.dot(h1p, w2_ref[2], preferred_element_type=jnp.float32))
    h2 = jnp.maximum(h2 + b2_ref[...], 0.0).reshape(L, bt, CMID).astype(cdt)

    # ---- Linear(64*L -> 128): per-position accumulation, MXU does the reduce. ----
    # lin[b, d] = sum_l h2[l, b, :] @ wl[l, :, :].  Static trip count, sequential
    # accumulator => live state is a handful of vregs (no (L, Bt, 128) intermediate).
    acc = jnp.zeros((bt, 128), jnp.float32)
    for l in range(L):
        acc = acc + jnp.dot(h2[l], wl_ref[l], preferred_element_type=jnp.float32)
    lin = jnp.maximum(acc + bl_ref[...], 0.0)                             # (Bt, 128)

    # ---- heads (value stream / dueling combine pre-folded into wq, bq). ----
    # TODO(synk): pad wq/bq columns to a multiple of 128 for a lane-dense store if
    # the action space ever grows; at H*A=12 it is not worth it.
    q = jnp.dot(lin.astype(cdt), wq_ref[...], preferred_element_type=jnp.float32)
    out_ref[...] = (q + bq_ref[...]).astype(out_ref.dtype)


# ----------------------------------------------------------------------------
# One-time weight repacking (hoisted out of the forward pass).
# ----------------------------------------------------------------------------
def pack_params(params, dueling, compute_dtype=jnp.bfloat16):
    f32 = jnp.float32
    cin = params["conv1_w"].shape[1]
    L = params["lin_w"].shape[1] // CMID

    # conv weights -> per-tap layout: w[k, i, o] = conv_w[o, i, k].
    w1 = jnp.transpose(params["conv1_w"], (2, 1, 0)).astype(f32)              # (3,cin,64)
    w2 = jnp.transpose(params["conv2_w"], (2, 1, 0)).astype(compute_dtype)    # (3,64,64)

    # PyTorch flattens NCL as (c, l); kernel activations are (l, b, c), so
    # wl[l, c, d] = lin_w[d, c*L + l]  -> identical numerics to x.view(B, -1) @ W.T.
    wl = (jnp.transpose(params["lin_w"].reshape(128, CMID, L), (2, 1, 0))
          .astype(compute_dtype))                                             # (L,64,128)

    # Fold value stream + dueling combine into the head weights.  The combine
    # q = value + (adv - mean(adv)) is linear in the 128-d feature, so this is exact.
    a_sizes = {w.shape[0] for w in params["adv_w"]}
    assert len(a_sizes) == 1, "heads are packed into one matrix -> equal action dims"
    adv_w = jnp.stack(params["adv_w"], axis=0)   # (H, A, 128)
    adv_b = jnp.stack(params["adv_b"], axis=0)   # (H, A)
    H, A, _ = adv_w.shape
    if dueling:
        adv_w = adv_w - jnp.mean(adv_w, axis=1, keepdims=True) + params["val_w"][None, :, :]
        adv_b = adv_b - jnp.mean(adv_b, axis=1, keepdims=True) + params["val_b"][None, :]
    wq = jnp.transpose(adv_w.reshape(H * A, 128), (1, 0)).astype(compute_dtype)

    return {
        "w1": w1, "b1": params["conv1_b"].reshape(1, CMID).astype(f32),
        "w2": w2, "b2": params["conv2_b"].reshape(1, CMID).astype(f32),
        "wl": wl, "bl": params["lin_b"].reshape(1, 128).astype(f32),
        "wq": wq, "bq": adv_b.reshape(1, H * A).astype(f32),
    }


def _full_spec(arr):
    nd = arr.ndim
    return pl.BlockSpec(arr.shape, lambda *_, _nd=nd: (0,) * _nd)


def _num_batch_tiles():
    """Generation-aware grid: 1 step on single-TC v5e/v6e, 2 on dual-TC v7x."""
    try:
        kind = (getattr(jax.devices()[0], "device_kind", "") or "").lower()
        if "v7" in kind:
            return 2
    except Exception:
        pass
    return 1


# ----------------------------------------------------------------------------
# Wrapper (forward pass).  Only input-dependent prep (transpose of x) runs per
# call; everything weight-related is already packed.
# ----------------------------------------------------------------------------
def dqn_forward(x, packed, num_heads):
    """x: (B, input_size, 3*max_notes) float32 -> q-values (B, H, A)."""
    B, cin, L = x.shape
    ha = packed["wq"].shape[1]

    # NCL -> (L, B, C).  No padding here: zero taps are built inside the kernel.
    x_t = jnp.transpose(x, (2, 0, 1))

    # Batch tile: whole batch on single-TC chips; B/2 across the two TensorCores
    # on v7x (only when the resulting tile keeps sublane alignment).
    nt = _num_batch_tiles()
    if nt > 1 and B % nt == 0 and (B // nt) % 8 == 0:
        bt = B // nt
    else:
        bt = B

    weights = (packed["w1"], packed["b1"], packed["w2"], packed["b2"],
               packed["wl"], packed["bl"], packed["wq"], packed["bq"])

    out = pl.pallas_call(
        _dqn_kernel,
        out_shape=jax.ShapeDtypeStruct((B, ha), jnp.float32),
        grid_spec=pltpu.PrefetchScalarGridSpec(
            num_scalar_prefetch=0,
            grid=(B // bt,),
            in_specs=[pl.BlockSpec((L, bt, cin), lambda i: (0, i, 0))]
            + [_full_spec(a) for a in weights],
            out_specs=pl.BlockSpec((bt, ha), lambda i: (i, 0)),
        ),
        compiler_params=pltpu.CompilerParams(dimension_semantics=("parallel",)),
    )(x_t, *weights)

    return out.reshape(B, num_heads, ha // num_heads)


# ----------------------------------------------------------------------------
# Deterministic parameter init (PyTorch-convention shapes)
# ----------------------------------------------------------------------------
def init_params(key, input_size, max_notes, action_space):
    L = 3 * max_notes
    keys = jax.random.split(key, 8 + 2 * len(action_space))

    def u(k, shape, fan_in):
        b = 1.0 / np.sqrt(fan_in)
        return jax.random.uniform(k, shape, jnp.float32, -b, b)

    return {
        "conv1_w": u(keys[0], (CMID, input_size, 3), input_size * 3),
        "conv1_b": u(keys[1], (CMID,), input_size * 3),
        "conv2_w": u(keys[2], (CMID, CMID, 3), CMID * 3),
        "conv2_b": u(keys[3], (CMID,), CMID * 3),
        "lin_w": u(keys[4], (128, CMID * L), CMID * L),
        "lin_b": u(keys[5], (128,), CMID * L),
        "val_w": u(keys[6], (1, 128), 128),
        "val_b": u(keys[7], (1,), 128),
        "adv_w": [u(keys[8 + 2 * i], (a, 128), 128) for i, a in enumerate(action_space)],
        "adv_b": [u(keys[9 + 2 * i], (a,), 128) for i, a in enumerate(action_space)],
    }


# ----------------------------------------------------------------------------
# Pure-JAX reference (mirrors the PyTorch forward exactly, NCL layout)
# ----------------------------------------------------------------------------
def ref_forward(x, params, dueling):
    def conv1d(x_ncl, w, b):
        y = lax.conv_general_dilated(
            x_ncl, w, window_strides=(1,), padding=((1, 1),),
            dimension_numbers=("NCH", "OIH", "NCH"))
        return y + b[None, :, None]

    h = jax.nn.relu(conv1d(x, params["conv1_w"], params["conv1_b"]))
    h = jax.nn.relu(conv1d(h, params["conv2_w"], params["conv2_b"]))
    B = x.shape[0]
    flat = h.reshape(B, -1)
    lin = jax.nn.relu(flat @ params["lin_w"].T + params["lin_b"])
    adv = jnp.stack(
        [lin @ w.T + b for w, b in zip(params["adv_w"], params["adv_b"])], axis=1)
    if dueling:
        value = (lin @ params["val_w"].T + params["val_b"])[:, :, None]  # (B,1,1)
        return value + (adv - adv.mean(axis=2, keepdims=True))
    return adv


if __name__ == "__main__":
    B = 32
    input_size = 4
    max_notes = 8
    action_space = [6, 6]        # torch.cat requires equal head dims anyway
    L = 3 * max_notes            # 24
    H = len(action_space)

    key = jax.random.PRNGKey(0)
    k_param, k_x = jax.random.split(key)
    params = init_params(k_param, input_size, max_notes, action_space)
    x = jax.random.normal(k_x, (B, input_size, L), jnp.float32)

    fwd = jax.jit(dqn_forward, static_argnums=(2,))

    for dueling in (False, True):
        ref = jax.block_until_ready(ref_forward(x, params, dueling))

        # exact f32 path
        out = jax.block_until_ready(fwd(x, pack_params(params, dueling, jnp.float32), H))
        assert out.shape == (B, H, action_space[0]), out.shape
        np.testing.assert_allclose(np.asarray(out), np.asarray(ref),
                                   rtol=1e-4, atol=1e-4)

        # default bf16-weight fast path (f32 accumulation on the MXU)
        out16 = jax.block_until_ready(fwd(x, pack_params(params, dueling), H))
        np.testing.assert_allclose(np.asarray(out16), np.asarray(ref),
                                   rtol=5e-2, atol=5e-2)

    print("KERNEL_OK")
</pallas_src>

<mosaic_0001>
module attributes {stable_mosaic.version = 11 : i64} {
  func.func @_dqn_kernel(%arg0: i32, %arg1: memref<24x32x4xf32, #tpu.memory_space<vmem>>, %arg2: memref<3x4x64xf32, #tpu.memory_space<vmem>>, %arg3: memref<1x64xf32, #tpu.memory_space<vmem>>, %arg4: memref<3x64x64xf32, #tpu.memory_space<vmem>>, %arg5: memref<1x64xf32, #tpu.memory_space<vmem>>, %arg6: memref<24x64x128xf32, #tpu.memory_space<vmem>>, %arg7: memref<1x128xf32, #tpu.memory_space<vmem>>, %arg8: memref<128x12xf32, #tpu.memory_space<vmem>>, %arg9: memref<1x12xf32, #tpu.memory_space<vmem>>, %arg10: memref<32x12xf32, #tpu.memory_space<vmem>>) attributes {dimension_semantics = [#tpu.dimension_semantics<parallel>], iteration_bounds = array<i64: 1>, scalar_prefetch = 0 : i64, scratch_operands = 0 : i64, tpu.core_type = #tpu.core_type<tc>, window_params = [{transform_indices = @transform_0, window_bounds = array<i64: 24, 32, 4>}, {pipeline_mode = #tpu.pipeline_mode<synchronous>, transform_indices = @transform_1, window_bounds = array<i64: 3, 4, 64>}, {pipeline_mode = #tpu.pipeline_mode<synchronous>, transform_indices = @transform_2, window_bounds = array<i64: 1, 64>}, {pipeline_mode = #tpu.pipeline_mode<synchronous>, transform_indices = @transform_3, window_bounds = array<i64: 3, 64, 64>}, {pipeline_mode = #tpu.pipeline_mode<synchronous>, transform_indices = @transform_4, window_bounds = array<i64: 1, 64>}, {pipeline_mode = #tpu.pipeline_mode<synchronous>, transform_indices = @transform_5, window_bounds = array<i64: 24, 64, 128>}, {pipeline_mode = #tpu.pipeline_mode<synchronous>, transform_indices = @transform_6, window_bounds = array<i64: 1, 128>}, {pipeline_mode = #tpu.pipeline_mode<synchronous>, transform_indices = @transform_7, window_bounds = array<i64: 128, 12>}, {pipeline_mode = #tpu.pipeline_mode<synchronous>, transform_indices = @transform_8, window_bounds = array<i64: 1, 12>}, {transform_indices = @transform_9, window_bounds = array<i64: 32, 12>}]} {
    %c0 = arith.constant 0 : index
    %c0_0 = arith.constant 0 : index
    %c0_1 = arith.constant 0 : index
    %0 = vector.load %arg1[%c0, %c0_0, %c0_1] : memref<24x32x4xf32, #tpu.memory_space<vmem>>, vector<24x32x4xf32>
    %cst = arith.constant 0.000000e+00 : f32
    %1 = vector.broadcast %cst : f32 to vector<1x32x4xf32>
    %2 = vector.extract_strided_slice %0 {offsets = [0, 0, 0], sizes = [23, 32, 4], strides = [1, 1, 1]} : vector<24x32x4xf32> to vector<23x32x4xf32>
    %3 = tpu.concatenate %1, %2 in 0 : vector<1x32x4xf32>, vector<23x32x4xf32> -> vector<24x32x4xf32>
    %4 = vector.shape_cast %3 : vector<24x32x4xf32> to vector<768x4xf32>
    %5 = vector.shape_cast %0 : vector<24x32x4xf32> to vector<768x4xf32>
    %6 = vector.extract_strided_slice %0 {offsets = [1, 0, 0], sizes = [23, 32, 4], strides = [1, 1, 1]} : vector<24x32x4xf32> to vector<23x32x4xf32>
    %7 = tpu.concatenate %6, %1 in 0 : vector<23x32x4xf32>, vector<1x32x4xf32> -> vector<24x32x4xf32>
    %8 = vector.shape_cast %7 : vector<24x32x4xf32> to vector<768x4xf32>
    %c0_2 = arith.constant 0 : index
    %c0_3 = arith.constant 0 : index
    %c0_4 = arith.constant 0 : index
    %9 = vector.load %arg2[%c0_2, %c0_3, %c0_4] : memref<3x4x64xf32, #tpu.memory_space<vmem>>, vector<1x4x64xf32>
    %10 = vector.shape_cast %9 : vector<1x4x64xf32> to vector<4x64xf32>
    %cst_5 = arith.constant dense<0.000000e+00> : vector<768x64xf32>
    %11 = tpu.matmul %4, %10, %cst_5 {dimension_numbers = #tpu.dot_dimension_numbers<[1], [0], [0], [1], [0, 0, 1, 1], [], []>} : vector<768x4xf32>, vector<4x64xf32>, vector<768x64xf32> -> vector<768x64xf32>
    %c1 = arith.constant 1 : index
    %c0_6 = arith.constant 0 : index
    %c0_7 = arith.constant 0 : index
    %12 = vector.load %arg2[%c1, %c0_6, %c0_7] : memref<3x4x64xf32, #tpu.memory_space<vmem>>, vector<1x4x64xf32>
    %13 = vector.shape_cast %12 : vector<1x4x64xf32> to vector<4x64xf32>
    %cst_8 = arith.constant dense<0.000000e+00> : vector<768x64xf32>
    %14 = tpu.matmul %5, %13, %cst_8 {dimension_numbers = #tpu.dot_dimension_numbers<[1], [0], [0], [1], [0, 0, 1, 1], [], []>} : vector<768x4xf32>, vector<4x64xf32>, vector<768x64xf32> -> vector<768x64xf32>
    %15 = arith.addf %11, %14 : vector<768x64xf32>
    %c2 = arith.constant 2 : index
    %c0_9 = arith.constant 0 : index
    %c0_10 = arith.constant 0 : index
    %16 = vector.load %arg2[%c2, %c0_9, %c0_10] : memref<3x4x64xf32, #tpu.memory_space<vmem>>, vector<1x4x64xf32>
    %17 = vector.shape_cast %16 : vector<1x4x64xf32> to vector<4x64xf32>
    %cst_11 = arith.constant dense<0.000000e+00> : vector<768x64xf32>
    %18 = tpu.matmul %8, %17, %cst_11 {dimension_numbers = #tpu.dot_dimension_numbers<[1], [0], [0], [1], [0, 0, 1, 1], [], []>} : vector<768x4xf32>, vector<4x64xf32>, vector<768x64xf32> -> vector<768x64xf32>
    %19 = arith.addf %15, %18 : vector<768x64xf32>
    %c0_12 = arith.constant 0 : index
    %c0_13 = arith.constant 0 : index
    %20 = vector.load %arg3[%c0_12, %c0_13] : memref<1x64xf32, #tpu.memory_space<vmem>>, vector<1x64xf32>
    %21 = vector.broadcast %20 : vector<1x64xf32> to vector<768x64xf32>
    %22 = arith.addf %19, %21 : vector<768x64xf32>
    %cst_14 = arith.constant 0.000000e+00 : f32
    %23 = vector.broadcast %cst_14 : f32 to vector<768x64xf32>
    %24 = arith.maximumf %22, %23 : vector<768x64xf32>
    %25 = vector.shape_cast %24 : vector<768x64xf32> to vector<24x32x64xf32>
    %cst_15 = arith.constant 0.000000e+00 : f32
    %26 = vector.broadcast %cst_15 : f32 to vector<1x32x64xf32>
    %27 = vector.extract_strided_slice %25 {offsets = [0, 0, 0], sizes = [23, 32, 64], strides = [1, 1, 1]} : vector<24x32x64xf32> to vector<23x32x64xf32>
    %28 = tpu.concatenate %26, %27 in 0 : vector<1x32x64xf32>, vector<23x32x64xf32> -> vector<24x32x64xf32>
    %29 = vector.shape_cast %28 : vector<24x32x64xf32> to vector<768x64xf32>
    %30 = vector.shape_cast %25 : vector<24x32x64xf32> to vector<768x64xf32>
    %31 = vector.extract_strided_slice %25 {offsets = [1, 0, 0], sizes = [23, 32, 64], strides = [1, 1, 1]} : vector<24x32x64xf32> to vector<23x32x64xf32>
    %32 = tpu.concatenate %31, %26 in 0 : vector<23x32x64xf32>, vector<1x32x64xf32> -> vector<24x32x64xf32>
    %33 = vector.shape_cast %32 : vector<24x32x64xf32> to vector<768x64xf32>
    %c0_16 = arith.constant 0 : index
    %c0_17 = arith.constant 0 : index
    %c0_18 = arith.constant 0 : index
    %34 = vector.load %arg4[%c0_16, %c0_17, %c0_18] : memref<3x64x64xf32, #tpu.memory_space<vmem>>, vector<1x64x64xf32>
    %35 = vector.shape_cast %34 : vector<1x64x64xf32> to vector<64x64xf32>
    %cst_19 = arith.constant dense<0.000000e+00> : vector<768x64xf32>
    %36 = tpu.matmul %29, %35, %cst_19 {dimension_numbers = #tpu.dot_dimension_numbers<[1], [0], [0], [1], [0, 0, 1, 1], [], []>} : vector<768x64xf32>, vector<64x64xf32>, vector<768x64xf32> -> vector<768x64xf32>
    %c1_20 = arith.constant 1 : index
    %c0_21 = arith.constant 0 : index
    %c0_22 = arith.constant 0 : index
    %37 = vector.load %arg4[%c1_20, %c0_21, %c0_22] : memref<3x64x64xf32, #tpu.memory_space<vmem>>, vector<1x64x64xf32>
    %38 = vector.shape_cast %37 : vector<1x64x64xf32> to vector<64x64xf32>
    %cst_23 = arith.constant dense<0.000000e+00> : vector<768x64xf32>
    %39 = tpu.matmul %30, %38, %cst_23 {dimension_numbers = #tpu.dot_dimension_numbers<[1], [0], [0], [1], [0, 0, 1, 1], [], []>} : vector<768x64xf32>, vector<64x64xf32>, vector<768x64xf32> -> vector<768x64xf32>
    %40 = arith.addf %36, %39 : vector<768x64xf32>
    %c2_24 = arith.constant 2 : index
    %c0_25 = arith.constant 0 : index
    %c0_26 = arith.constant 0 : index
    %41 = vector.load %arg4[%c2_24, %c0_25, %c0_26] : memref<3x64x64xf32, #tpu.memory_space<vmem>>, vector<1x64x64xf32>
    %42 = vector.shape_cast %41 : vector<1x64x64xf32> to vector<64x64xf32>
    %cst_27 = arith.constant dense<0.000000e+00> : vector<768x64xf32>
    %43 = tpu.matmul %33, %42, %cst_27 {dimension_numbers = #tpu.dot_dimension_numbers<[1], [0], [0], [1], [0, 0, 1, 1], [], []>} : vector<768x64xf32>, vector<64x64xf32>, vector<768x64xf32> -> vector<768x64xf32>
    %44 = arith.addf %40, %43 : vector<768x64xf32>
    %c0_28 = arith.constant 0 : index
    %c0_29 = arith.constant 0 : index
    %45 = vector.load %arg5[%c0_28, %c0_29] : memref<1x64xf32, #tpu.memory_space<vmem>>, vector<1x64xf32>
    %46 = vector.broadcast %45 : vector<1x64xf32> to vector<768x64xf32>
    %47 = arith.addf %44, %46 : vector<768x64xf32>
    %cst_30 = arith.constant 0.000000e+00 : f32
    %48 = vector.broadcast %cst_30 : f32 to vector<768x64xf32>
    %49 = arith.maximumf %47, %48 : vector<768x64xf32>
    %50 = vector.shape_cast %49 : vector<768x64xf32> to vector<24x32x64xf32>
    %cst_31 = arith.constant 0.000000e+00 : f32
    %51 = vector.broadcast %cst_31 : f32 to vector<32x128xf32>
    %52 = vector.extract_strided_slice %50 {offsets = [0, 0, 0], sizes = [1, 32, 64], strides = [1, 1, 1]} : vector<24x32x64xf32> to vector<1x32x64xf32>
    %53 = vector.shape_cast %52 : vector<1x32x64xf32> to vector<32x64xf32>
    %c0_32 = arith.constant 0 : index
    %c0_33 = arith.constant 0 : index
    %c0_34 = arith.constant 0 : index
    %54 = vector.load %arg6[%c0_32, %c0_33, %c0_34] : memref<24x64x128xf32, #tpu.memory_space<vmem>>, vector<1x64x128xf32>
    %55 = vector.shape_cast %54 : vector<1x64x128xf32> to vector<64x128xf32>
    %cst_35 = arith.constant dense<0.000000e+00> : vector<32x128xf32>
    %56 = tpu.matmul %53, %55, %cst_35 {dimension_numbers = #tpu.dot_dimension_numbers<[1], [0], [0], [1], [0, 0, 1, 1], [], []>} : vector<32x64xf32>, vector<64x128xf32>, vector<32x128xf32> -> vector<32x128xf32>
    %57 = arith.addf %51, %56 : vector<32x128xf32>
    %58 = vector.extract_strided_slice %50 {offsets = [1, 0, 0], sizes = [1, 32, 64], strides = [1, 1, 1]} : vector<24x32x64xf32> to vector<1x32x64xf32>
    %59 = vector.shape_cast %58 : vector<1x32x64xf32> to vector<32x64xf32>
    %c1_36 = arith.constant 1 : index
    %c0_37 = arith.constant 0 : index
    %c0_38 = arith.constant 0 : index
    %60 = vector.load %arg6[%c1_36, %c0_37, %c0_38] : memref<24x64x128xf32, #tpu.memory_space<vmem>>, vector<1x64x128xf32>
    %61 = vector.shape_cast %60 : vector<1x64x128xf32> to vector<64x128xf32>
    %cst_39 = arith.constant dense<0.000000e+00> : vector<32x128xf32>
    %62 = tpu.matmul %59, %61, %cst_39 {dimension_numbers = #tpu.dot_dimension_numbers<[1], [0], [0], [1], [0, 0, 1, 1], [], []>} : vector<32x64xf32>, vector<64x128xf32>, vector<32x128xf32> -> vector<32x128xf32>
    %63 = arith.addf %57, %62 : vector<32x128xf32>
    %64 = vector.extract_strided_slice %50 {offsets = [2, 0, 0], sizes = [1, 32, 64], strides = [1, 1, 1]} : vector<24x32x64xf32> to vector<1x32x64xf32>
    %65 = vector.shape_cast %64 : vector<1x32x64xf32> to vector<32x64xf32>
    %c2_40 = arith.constant 2 : index
    %c0_41 = arith.constant 0 : index
    %c0_42 = arith.constant 0 : index
    %66 = vector.load %arg6[%c2_40, %c0_41, %c0_42] : memref<24x64x128xf32, #tpu.memory_space<vmem>>, vector<1x64x128xf32>
    %67 = vector.shape_cast %66 : vector<1x64x128xf32> to vector<64x128xf32>
    %cst_43 = arith.constant dense<0.000000e+00> : vector<32x128xf32>
    %68 = tpu.matmul %65, %67, %cst_43 {dimension_numbers = #tpu.dot_dimension_numbers<[1], [0], [0], [1], [0, 0, 1, 1], [], []>} : vector<32x64xf32>, vector<64x128xf32>, vector<32x128xf32> -> vector<32x128xf32>
    %69 = arith.addf %63, %68 : vector<32x128xf32>
    %70 = vector.extract_strided_slice %50 {offsets = [3, 0, 0], sizes = [1, 32, 64], strides = [1, 1, 1]} : vector<24x32x64xf32> to vector<1x32x64xf32>
    %71 = vector.shape_cast %70 : vector<1x32x64xf32> to vector<32x64xf32>
    %c3 = arith.constant 3 : index
    %c0_44 = arith.constant 0 : index
    %c0_45 = arith.constant 0 : index
    %72 = vector.load %arg6[%c3, %c0_44, %c0_45] : memref<24x64x128xf32, #tpu.memory_space<vmem>>, vector<1x64x128xf32>
    %73 = vector.shape_cast %72 : vector<1x64x128xf32> to vector<64x128xf32>
    %cst_46 = arith.constant dense<0.000000e+00> : vector<32x128xf32>
    %74 = tpu.matmul %71, %73, %cst_46 {dimension_numbers = #tpu.dot_dimension_numbers<[1], [0], [0], [1], [0, 0, 1, 1], [], []>} : vector<32x64xf32>, vector<64x128xf32>, vector<32x128xf32> -> vector<32x128xf32>
    %75 = arith.addf %69, %74 : vector<32x128xf32>
    %76 = vector.extract_strided_slice %50 {offsets = [4, 0, 0], sizes = [1, 32, 64], strides = [1, 1, 1]} : vector<24x32x64xf32> to vector<1x32x64xf32>
    %77 = vector.shape_cast %76 : vector<1x32x64xf32> to vector<32x64xf32>
    %c4 = arith.constant 4 : index
    %c0_47 = arith.constant 0 : index
    %c0_48 = arith.constant 0 : index
    %78 = vector.load %arg6[%c4, %c0_47, %c0_48] : memref<24x64x128xf32, #tpu.memory_space<vmem>>, vector<1x64x128xf32>
    %79 = vector.shape_cast %78 : vector<1x64x128xf32> to vector<64x128xf32>
    %cst_49 = arith.constant dense<0.000000e+00> : vector<32x128xf32>
    %80 = tpu.matmul %77, %79, %cst_49 {dimension_numbers = #tpu.dot_dimension_numbers<[1], [0], [0], [1], [0, 0, 1, 1], [], []>} : vector<32x64xf32>, vector<64x128xf32>, vector<32x128xf32> -> vector<32x128xf32>
    %81 = arith.addf %75, %80 : vector<32x128xf32>
    %82 = vector.extract_strided_slice %50 {offsets = [5, 0, 0], sizes = [1, 32, 64], strides = [1, 1, 1]} : vector<24x32x64xf32> to vector<1x32x64xf32>
    %83 = vector.shape_cast %82 : vector<1x32x64xf32> to vector<32x64xf32>
    %c5 = arith.constant 5 : index
    %c0_50 = arith.constant 0 : index
    %c0_51 = arith.constant 0 : index
    %84 = vector.load %arg6[%c5, %c0_50, %c0_51] : memref<24x64x128xf32, #tpu.memory_space<vmem>>, vector<1x64x128xf32>
    %85 = vector.shape_cast %84 : vector<1x64x128xf32> to vector<64x128xf32>
    %cst_52 = arith.constant dense<0.000000e+00> : vector<32x128xf32>
    %86 = tpu.matmul %83, %85, %cst_52 {dimension_numbers = #tpu.dot_dimension_numbers<[1], [0], [0], [1], [0, 0, 1, 1], [], []>} : vector<32x64xf32>, vector<64x128xf32>, vector<32x128xf32> -> vector<32x128xf32>
    %87 = arith.addf %81, %86 : vector<32x128xf32>
    %88 = vector.extract_strided_slice %50 {offsets = [6, 0, 0], sizes = [1, 32, 64], strides = [1, 1, 1]} : vector<24x32x64xf32> to vector<1x32x64xf32>
    %89 = vector.shape_cast %88 : vector<1x32x64xf32> to vector<32x64xf32>
    %c6 = arith.constant 6 : index
    %c0_53 = arith.constant 0 : index
    %c0_54 = arith.constant 0 : index
    %90 = vector.load %arg6[%c6, %c0_53, %c0_54] : memref<24x64x128xf32, #tpu.memory_space<vmem>>, vector<1x64x128xf32>
    %91 = vector.shape_cast %90 : vector<1x64x128xf32> to vector<64x128xf32>
    %cst_55 = arith.constant dense<0.000000e+00> : vector<32x128xf32>
    %92 = tpu.matmul %89, %91, %cst_55 {dimension_numbers = #tpu.dot_dimension_numbers<[1], [0], [0], [1], [0, 0, 1, 1], [], []>} : vector<32x64xf32>, vector<64x128xf32>, vector<32x128xf32> -> vector<32x128xf32>
    %93 = arith.addf %87, %92 : vector<32x128xf32>
    %94 = vector.extract_strided_slice %50 {offsets = [7, 0, 0], sizes = [1, 32, 64], strides = [1, 1, 1]} : vector<24x32x64xf32> to vector<1x32x64xf32>
    %95 = vector.shape_cast %94 : vector<1x32x64xf32> to vector<32x64xf32>
    %c7 = arith.constant 7 : index
    %c0_56 = arith.constant 0 : index
    %c0_57 = arith.constant 0 : index
    %96 = vector.load %arg6[%c7, %c0_56, %c0_57] : memref<24x64x128xf32, #tpu.memory_space<vmem>>, vector<1x64x128xf32>
    %97 = vector.shape_cast %96 : vector<1x64x128xf32> to vector<64x128xf32>
    %cst_58 = arith.constant dense<0.000000e+00> : vector<32x128xf32>
    %98 = tpu.matmul %95, %97, %cst_58 {dimension_numbers = #tpu.dot_dimension_numbers<[1], [0], [0], [1], [0, 0, 1, 1], [], []>} : vector<32x64xf32>, vector<64x128xf32>, vector<32x128xf32> -> vector<32x128xf32>
    %99 = arith.addf %93, %98 : vector<32x128xf32>
    %100 = vector.extract_strided_slice %50 {offsets = [8, 0, 0], sizes = [1, 32, 64], strides = [1, 1, 1]} : vector<24x32x64xf32> to vector<1x32x64xf32>
    %101 = vector.shape_cast %100 : vector<1x32x64xf32> to vector<32x64xf32>
    %c8 = arith.constant 8 : index
    %c0_59 = arith.constant 0 : index
    %c0_60 = arith.constant 0 : index
    %102 = vector.load %arg6[%c8, %c0_59, %c0_60] : memref<24x64x128xf32, #tpu.memory_space<vmem>>, vector<1x64x128xf32>
    %103 = vector.shape_cast %102 : vector<1x64x128xf32> to vector<64x128xf32>
    %cst_61 = arith.constant dense<0.000000e+00> : vector<32x128xf32>
    %104 = tpu.matmul %101, %103, %cst_61 {dimension_numbers = #tpu.dot_dimension_numbers<[1], [0], [0], [1], [0, 0, 1, 1], [], []>} : vector<32x64xf32>, vector<64x128xf32>, vector<32x128xf32> -> vector<32x128xf32>
    %105 = arith.addf %99, %104 : vector<32x128xf32>
    %106 = vector.extract_strided_slice %50 {offsets = [9, 0, 0], sizes = [1, 32, 64], strides = [1, 1, 1]} : vector<24x32x64xf32> to vector<1x32x64xf32>
    %107 = vector.shape_cast %106 : vector<1x32x64xf32> to vector<32x64xf32>
    %c9 = arith.constant 9 : index
    %c0_62 = arith.constant 0 : index
    %c0_63 = arith.constant 0 : index
    %108 = vector.load %arg6[%c9, %c0_62, %c0_63] : memref<24x64x128xf32, #tpu.memory_space<vmem>>, vector<1x64x128xf32>
    %109 = vector.shape_cast %108 : vector<1x64x128xf32> to vector<64x128xf32>
    %cst_64 = arith.constant dense<0.000000e+00> : vector<32x128xf32>
    %110 = tpu.matmul %107, %109, %cst_64 {dimension_numbers = #tpu.dot_dimension_numbers<[1], [0], [0], [1], [0, 0, 1, 1], [], []>} : vector<32x64xf32>, vector<64x128xf32>, vector<32x128xf32> -> vector<32x128xf32>
    %111 = arith.addf %105, %110 : vector<32x128xf32>
    %112 = vector.extract_strided_slice %50 {offsets = [10, 0, 0], sizes = [1, 32, 64], strides = [1, 1, 1]} : vector<24x32x64xf32> to vector<1x32x64xf32>
    %113 = vector.shape_cast %112 : vector<1x32x64xf32> to vector<32x64xf32>
    %c10 = arith.constant 10 : index
    %c0_65 = arith.constant 0 : index
    %c0_66 = arith.constant 0 : index
    %114 = vector.load %arg6[%c10, %c0_65, %c0_66] : memref<24x64x128xf32, #tpu.memory_space<vmem>>, vector<1x64x128xf32>
    %115 = vector.shape_cast %114 : vector<1x64x128xf32> to vector<64x128xf32>
    %cst_67 = arith.constant dense<0.000000e+00> : vector<32x128xf32>
    %116 = tpu.matmul %113, %115, %cst_67 {dimension_numbers = #tpu.dot_dimension_numbers<[1], [0], [0], [1], [0, 0, 1, 1], [], []>} : vector<32x64xf32>, vector<64x128xf32>, vector<32x128xf32> -> vector<32x128xf32>
    %117 = arith.addf %111, %116 : vector<32x128xf32>
    %118 = vector.extract_strided_slice %50 {offsets = [11, 0, 0], sizes = [1, 32, 64], strides = [1, 1, 1]} : vector<24x32x64xf32> to vector<1x32x64xf32>
    %119 = vector.shape_cast %118 : vector<1x32x64xf32> to vector<32x64xf32>
    %c11 = arith.constant 11 : index
    %c0_68 = arith.constant 0 : index
    %c0_69 = arith.constant 0 : index
    %120 = vector.load %arg6[%c11, %c0_68, %c0_69] : memref<24x64x128xf32, #tpu.memory_space<vmem>>, vector<1x64x128xf32>
    %121 = vector.shape_cast %120 : vector<1x64x128xf32> to vector<64x128xf32>
    %cst_70 = arith.constant dense<0.000000e+00> : vector<32x128xf32>
    %122 = tpu.matmul %119, %121, %cst_70 {dimension_numbers = #tpu.dot_dimension_numbers<[1], [0], [0], [1], [0, 0, 1, 1], [], []>} : vector<32x64xf32>, vector<64x128xf32>, vector<32x128xf32> -> vector<32x128xf32>
    %123 = arith.addf %117, %122 : vector<32x128xf32>
    %124 = vector.extract_strided_slice %50 {offsets = [12, 0, 0], sizes = [1, 32, 64], strides = [1, 1, 1]} : vector<24x32x64xf32> to vector<1x32x64xf32>
    %125 = vector.shape_cast %124 : vector<1x32x64xf32> to vector<32x64xf32>
    %c12 = arith.constant 12 : index
    %c0_71 = arith.constant 0 : index
    %c0_72 = arith.constant 0 : index
    %126 = vector.load %arg6[%c12, %c0_71, %c0_72] : memref<24x64x128xf32, #tpu.memory_space<vmem>>, vector<1x64x128xf32>
    %127 = vector.shape_cast %126 : vector<1x64x128xf32> to vector<64x128xf32>
    %cst_73 = arith.constant dense<0.000000e+00> : vector<32x128xf32>
    %128 = tpu.matmul %125, %127, %cst_73 {dimension_numbers = #tpu.dot_dimension_numbers<[1], [0], [0], [1], [0, 0, 1, 1], [], []>} : vector<32x64xf32>, vector<64x128xf32>, vector<32x128xf32> -> vector<32x128xf32>
    %129 = arith.addf %123, %128 : vector<32x128xf32>
    %130 = vector.extract_strided_slice %50 {offsets = [13, 0, 0], sizes = [1, 32, 64], strides = [1, 1, 1]} : vector<24x32x64xf32> to vector<1x32x64xf32>
    %131 = vector.shape_cast %130 : vector<1x32x64xf32> to vector<32x64xf32>
    %c13 = arith.constant 13 : index
    %c0_74 = arith.constant 0 : index
    %c0_75 = arith.constant 0 : index
    %132 = vector.load %arg6[%c13, %c0_74, %c0_75] : memref<24x64x128xf32, #tpu.memory_space<vmem>>, vector<1x64x128xf32>
    %133 = vector.shape_cast %132 : vector<1x64x128xf32> to vector<64x128xf32>
    %cst_76 = arith.constant dense<0.000000e+00> : vector<32x128xf32>
    %134 = tpu.matmul %131, %133, %cst_76 {dimension_numbers = #tpu.dot_dimension_numbers<[1], [0], [0], [1], [0, 0, 1, 1], [], []>} : vector<32x64xf32>, vector<64x128xf32>, vector<32x128xf32> -> vector<32x128xf32>
    %135 = arith.addf %129, %134 : vector<32x128xf32>
    %136 = vector.extract_strided_slice %50 {offsets = [14, 0, 0], sizes = [1, 32, 64], strides = [1, 1, 1]} : vector<24x32x64xf32> to vector<1x32x64xf32>
    %137 = vector.shape_cast %136 : vector<1x32x64xf32> to vector<32x64xf32>
    %c14 = arith.constant 14 : index
    %c0_77 = arith.constant 0 : index
    %c0_78 = arith.constant 0 : index
    %138 = vector.load %arg6[%c14, %c0_77, %c0_78] : memref<24x64x128xf32, #tpu.memory_space<vmem>>, vector<1x64x128xf32>
    %139 = vector.shape_cast %138 : vector<1x64x128xf32> to vector<64x128xf32>
    %cst_79 = arith.constant dense<0.000000e+00> : vector<32x128xf32>
    %140 = tpu.matmul %137, %139, %cst_79 {dimension_numbers = #tpu.dot_dimension_numbers<[1], [0], [0], [1], [0, 0, 1, 1], [], []>} : vector<32x64xf32>, vector<64x128xf32>, vector<32x128xf32> -> vector<32x128xf32>
    %141 = arith.addf %135, %140 : vector<32x128xf32>
    %142 = vector.extract_strided_slice %50 {offsets = [15, 0, 0], sizes = [1, 32, 64], strides = [1, 1, 1]} : vector<24x32x64xf32> to vector<1x32x64xf32>
    %143 = vector.shape_cast %142 : vector<1x32x64xf32> to vector<32x64xf32>
    %c15 = arith.constant 15 : index
    %c0_80 = arith.constant 0 : index
    %c0_81 = arith.constant 0 : index
    %144 = vector.load %arg6[%c15, %c0_80, %c0_81] : memref<24x64x128xf32, #tpu.memory_space<vmem>>, vector<1x64x128xf32>
    %145 = vector.shape_cast %144 : vector<1x64x128xf32> to vector<64x128xf32>
    %cst_82 = arith.constant dense<0.000000e+00> : vector<32x128xf32>
    %146 = tpu.matmul %143, %145, %cst_82 {dimension_numbers = #tpu.dot_dimension_numbers<[1], [0], [0], [1], [0, 0, 1, 1], [], []>} : vector<32x64xf32>, vector<64x128xf32>, vector<32x128xf32> -> vector<32x128xf32>
    %147 = arith.addf %141, %146 : vector<32x128xf32>
    %148 = vector.extract_strided_slice %50 {offsets = [16, 0, 0], sizes = [1, 32, 64], strides = [1, 1, 1]} : vector<24x32x64xf32> to vector<1x32x64xf32>
    %149 = vector.shape_cast %148 : vector<1x32x64xf32> to vector<32x64xf32>
    %c16 = arith.constant 16 : index
    %c0_83 = arith.constant 0 : index
    %c0_84 = arith.constant 0 : index
    %150 = vector.load %arg6[%c16, %c0_83, %c0_84] : memref<24x64x128xf32, #tpu.memory_space<vmem>>, vector<1x64x128xf32>
    %151 = vector.shape_cast %150 : vector<1x64x128xf32> to vector<64x128xf32>
    %cst_85 = arith.constant dense<0.000000e+00> : vector<32x128xf32>
    %152 = tpu.matmul %149, %151, %cst_85 {dimension_numbers = #tpu.dot_dimension_numbers<[1], [0], [0], [1], [0, 0, 1, 1], [], []>} : vector<32x64xf32>, vector<64x128xf32>, vector<32x128xf32> -> vector<32x128xf32>
    %153 = arith.addf %147, %152 : vector<32x128xf32>
    %154 = vector.extract_strided_slice %50 {offsets = [17, 0, 0], sizes = [1, 32, 64], strides = [1, 1, 1]} : vector<24x32x64xf32> to vector<1x32x64xf32>
    %155 = vector.shape_cast %154 : vector<1x32x64xf32> to vector<32x64xf32>
    %c17 = arith.constant 17 : index
    %c0_86 = arith.constant 0 : index
    %c0_87 = arith.constant 0 : index
    %156 = vector.load %arg6[%c17, %c0_86, %c0_87] : memref<24x64x128xf32, #tpu.memory_space<vmem>>, vector<1x64x128xf32>
    %157 = vector.shape_cast %156 : vector<1x64x128xf32> to vector<64x128xf32>
    %cst_88 = arith.constant dense<0.000000e+00> : vector<32x128xf32>
    %158 = tpu.matmul %155, %157, %cst_88 {dimension_numbers = #tpu.dot_dimension_numbers<[1], [0], [0], [1], [0, 0, 1, 1], [], []>} : vector<32x64xf32>, vector<64x128xf32>, vector<32x128xf32> -> vector<32x128xf32>
    %159 = arith.addf %153, %158 : vector<32x128xf32>
    %160 = vector.extract_strided_slice %50 {offsets = [18, 0, 0], sizes = [1, 32, 64], strides = [1, 1, 1]} : vector<24x32x64xf32> to vector<1x32x64xf32>
    %161 = vector.shape_cast %160 : vector<1x32x64xf32> to vector<32x64xf32>
    %c18 = arith.constant 18 : index
    %c0_89 = arith.constant 0 : index
    %c0_90 = arith.constant 0 : index
    %162 = vector.load %arg6[%c18, %c0_89, %c0_90] : memref<24x64x128xf32, #tpu.memory_space<vmem>>, vector<1x64x128xf32>
    %163 = vector.shape_cast %162 : vector<1x64x128xf32> to vector<64x128xf32>
    %cst_91 = arith.constant dense<0.000000e+00> : vector<32x128xf32>
    %164 = tpu.matmul %161, %163, %cst_91 {dimension_numbers = #tpu.dot_dimension_numbers<[1], [0], [0], [1], [0, 0, 1, 1], [], []>} : vector<32x64xf32>, vector<64x128xf32>, vector<32x128xf32> -> vector<32x128xf32>
    %165 = arith.addf %159, %164 : vector<32x128xf32>
    %166 = vector.extract_strided_slice %50 {offsets = [19, 0, 0], sizes = [1, 32, 64], strides = [1, 1, 1]} : vector<24x32x64xf32> to vector<1x32x64xf32>
    %167 = vector.shape_cast %166 : vector<1x32x64xf32> to vector<32x64xf32>
    %c19 = arith.constant 19 : index
    %c0_92 = arith.constant 0 : index
    %c0_93 = arith.constant 0 : index
    %168 = vector.load %arg6[%c19, %c0_92, %c0_93] : memref<24x64x128xf32, #tpu.memory_space<vmem>>, vector<1x64x128xf32>
    %169 = vector.shape_cast %168 : vector<1x64x128xf32> to vector<64x128xf32>
    %cst_94 = arith.constant dense<0.000000e+00> : vector<32x128xf32>
    %170 = tpu.matmul %167, %169, %cst_94 {dimension_numbers = #tpu.dot_dimension_numbers<[1], [0], [0], [1], [0, 0, 1, 1], [], []>} : vector<32x64xf32>, vector<64x128xf32>, vector<32x128xf32> -> vector<32x128xf32>
    %171 = arith.addf %165, %170 : vector<32x128xf32>
    %172 = vector.extract_strided_slice %50 {offsets = [20, 0, 0], sizes = [1, 32, 64], strides = [1, 1, 1]} : vector<24x32x64xf32> to vector<1x32x64xf32>
    %173 = vector.shape_cast %172 : vector<1x32x64xf32> to vector<32x64xf32>
    %c20 = arith.constant 20 : index
    %c0_95 = arith.constant 0 : index
    %c0_96 = arith.constant 0 : index
    %174 = vector.load %arg6[%c20, %c0_95, %c0_96] : memref<24x64x128xf32, #tpu.memory_space<vmem>>, vector<1x64x128xf32>
    %175 = vector.shape_cast %174 : vector<1x64x128xf32> to vector<64x128xf32>
    %cst_97 = arith.constant dense<0.000000e+00> : vector<32x128xf32>
    %176 = tpu.matmul %173, %175, %cst_97 {dimension_numbers = #tpu.dot_dimension_numbers<[1], [0], [0], [1], [0, 0, 1, 1], [], []>} : vector<32x64xf32>, vector<64x128xf32>, vector<32x128xf32> -> vector<32x128xf32>
    %177 = arith.addf %171, %176 : vector<32x128xf32>
    %178 = vector.extract_strided_slice %50 {offsets = [21, 0, 0], sizes = [1, 32, 64], strides = [1, 1, 1]} : vector<24x32x64xf32> to vector<1x32x64xf32>
    %179 = vector.shape_cast %178 : vector<1x32x64xf32> to vector<32x64xf32>
    %c21 = arith.constant 21 : index
    %c0_98 = arith.constant 0 : index
    %c0_99 = arith.constant 0 : index
    %180 = vector.load %arg6[%c21, %c0_98, %c0_99] : memref<24x64x128xf32, #tpu.memory_space<vmem>>, vector<1x64x128xf32>
    %181 = vector.shape_cast %180 : vector<1x64x128xf32> to vector<64x128xf32>
    %cst_100 = arith.constant dense<0.000000e+00> : vector<32x128xf32>
    %182 = tpu.matmul %179, %181, %cst_100 {dimension_numbers = #tpu.dot_dimension_numbers<[1], [0], [0], [1], [0, 0, 1, 1], [], []>} : vector<32x64xf32>, vector<64x128xf32>, vector<32x128xf32> -> vector<32x128xf32>
    %183 = arith.addf %177, %182 : vector<32x128xf32>
    %184 = vector.extract_strided_slice %50 {offsets = [22, 0, 0], sizes = [1, 32, 64], strides = [1, 1, 1]} : vector<24x32x64xf32> to vector<1x32x64xf32>
    %185 = vector.shape_cast %184 : vector<1x32x64xf32> to vector<32x64xf32>
    %c22 = arith.constant 22 : index
    %c0_101 = arith.constant 0 : index
    %c0_102 = arith.constant 0 : index
    %186 = vector.load %arg6[%c22, %c0_101, %c0_102] : memref<24x64x128xf32, #tpu.memory_space<vmem>>, vector<1x64x128xf32>
    %187 = vector.shape_cast %186 : vector<1x64x128xf32> to vector<64x128xf32>
    %cst_103 = arith.constant dense<0.000000e+00> : vector<32x128xf32>
    %188 = tpu.matmul %185, %187, %cst_103 {dimension_numbers = #tpu.dot_dimension_numbers<[1], [0], [0], [1], [0, 0, 1, 1], [], []>} : vector<32x64xf32>, vector<64x128xf32>, vector<32x128xf32> -> vector<32x128xf32>
    %189 = arith.addf %183, %188 : vector<32x128xf32>
    %190 = vector.extract_strided_slice %50 {offsets = [23, 0, 0], sizes = [1, 32, 64], strides = [1, 1, 1]} : vector<24x32x64xf32> to vector<1x32x64xf32>
    %191 = vector.shape_cast %190 : vector<1x32x64xf32> to vector<32x64xf32>
    %c23 = arith.constant 23 : index
    %c0_104 = arith.constant 0 : index
    %c0_105 = arith.constant 0 : index
    %192 = vector.load %arg6[%c23, %c0_104, %c0_105] : memref<24x64x128xf32, #tpu.memory_space<vmem>>, vector<1x64x128xf32>
    %193 = vector.shape_cast %192 : vector<1x64x128xf32> to vector<64x128xf32>
    %cst_106 = arith.constant dense<0.000000e+00> : vector<32x128xf32>
    %194 = tpu.matmul %191, %193, %cst_106 {dimension_numbers = #tpu.dot_dimension_numbers<[1], [0], [0], [1], [0, 0, 1, 1], [], []>} : vector<32x64xf32>, vector<64x128xf32>, vector<32x128xf32> -> vector<32x128xf32>
    %195 = arith.addf %189, %194 : vector<32x128xf32>
    %c0_107 = arith.constant 0 : index
    %c0_108 = arith.constant 0 : index
    %196 = vector.load %arg7[%c0_107, %c0_108] : memref<1x128xf32, #tpu.memory_space<vmem>>, vector<1x128xf32>
    %197 = vector.broadcast %196 : vector<1x128xf32> to vector<32x128xf32>
    %198 = arith.addf %195, %197 : vector<32x128xf32>
    %cst_109 = arith.constant 0.000000e+00 : f32
    %199 = vector.broadcast %cst_109 : f32 to vector<32x128xf32>
    %200 = arith.maximumf %198, %199 : vector<32x128xf32>
    %c0_110 = arith.constant 0 : index
    %c0_111 = arith.constant 0 : index
    %201 = vector.load %arg8[%c0_110, %c0_111] : memref<128x12xf32, #tpu.memory_space<vmem>>, vector<128x12xf32>
    %cst_112 = arith.constant dense<0.000000e+00> : vector<32x12xf32>
    %202 = tpu.matmul %200, %201, %cst_112 {dimension_numbers = #tpu.dot_dimension_numbers<[1], [0], [0], [1], [0, 0, 1, 1], [], []>} : vector<32x128xf32>, vector<128x12xf32>, vector<32x12xf32> -> vector<32x12xf32>
    %c0_113 = arith.constant 0 : index
    %c0_114 = arith.constant 0 : index
    %203 = vector.load %arg9[%c0_113, %c0_114] : memref<1x12xf32, #tpu.memory_space<vmem>>, vector<1x12xf32>
    %204 = vector.broadcast %203 : vector<1x12xf32> to vector<32x12xf32>
    %205 = arith.addf %202, %204 : vector<32x12xf32>
    %c0_115 = arith.constant 0 : index
    %c0_116 = arith.constant 0 : index
    %206 = vector.load %arg10[%c0_115, %c0_116] : memref<32x12xf32, #tpu.memory_space<vmem>>, vector<32x12xf32>
    tpu.vector_store %arg10[%c0_115, %c0_116], %205 {strides = array<i32>} : memref<32x12xf32, #tpu.memory_space<vmem>>, vector<32x12xf32>,
    return
  }
  func.func @transform_0(%arg0: i32) -> (i32, i32, i32) {
    %c0_i32 = arith.constant 0 : i32
    %c0_i32_0 = arith.constant 0 : i32
    %c0_i32_1 = arith.constant 0 : i32
    return %c0_i32, %arg0, %c0_i32_0 : i32, i32, i32
  }
  func.func @transform_1(%arg0: i32) -> (i32, i32, i32) {
    %c0_i32 = arith.constant 0 : i32
    %c0_i32_0 = arith.constant 0 : i32
    %c0_i32_1 = arith.constant 0 : i32
    %c0_i32_2 = arith.constant 0 : i32
    return %c0_i32, %c0_i32_0, %c0_i32_1 : i32, i32, i32
  }
  func.func @transform_2(%arg0: i32) -> (i32, i32) {
    %c0_i32 = arith.constant 0 : i32
    %c0_i32_0 = arith.constant 0 : i32
    %c0_i32_1 = arith.constant 0 : i32
    return %c0_i32, %c0_i32_0 : i32, i32
  }
  func.func @transform_3(%arg0: i32) -> (i32, i32, i32) {
    %c0_i32 = arith.constant 0 : i32
    %c0_i32_0 = arith.constant 0 : i32
    %c0_i32_1 = arith.constant 0 : i32
    %c0_i32_2 = arith.constant 0 : i32
    return %c0_i32, %c0_i32_0, %c0_i32_1 : i32, i32, i32
  }
  func.func @transform_4(%arg0: i32) -> (i32, i32) {
    %c0_i32 = arith.constant 0 : i32
    %c0_i32_0 = arith.constant 0 : i32
    %c0_i32_1 = arith.constant 0 : i32
    return %c0_i32, %c0_i32_0 : i32, i32
  }
  func.func @transform_5(%arg0: i32) -> (i32, i32, i32) {
    %c0_i32 = arith.constant 0 : i32
    %c0_i32_0 = arith.constant 0 : i32
    %c0_i32_1 = arith.constant 0 : i32
    %c0_i32_2 = arith.constant 0 : i32
    return %c0_i32, %c0_i32_0, %c0_i32_1 : i32, i32, i32
  }
  func.func @transform_6(%arg0: i32) -> (i32, i32) {
    %c0_i32 = arith.constant 0 : i32
    %c0_i32_0 = arith.constant 0 : i32
    %c0_i32_1 = arith.constant 0 : i32
    return %c0_i32, %c0_i32_0 : i32, i32
  }
  func.func @transform_7(%arg0: i32) -> (i32, i32) {
    %c0_i32 = arith.constant 0 : i32
    %c0_i32_0 = arith.constant 0 : i32
    %c0_i32_1 = arith.constant 0 : i32
    return %c0_i32, %c0_i32_0 : i32, i32
  }
  func.func @transform_8(%arg0: i32) -> (i32, i32) {
    %c0_i32 = arith.constant 0 : i32
    %c0_i32_0 = arith.constant 0 : i32
    %c0_i32_1 = arith.constant 0 : i32
    return %c0_i32, %c0_i32_0 : i32, i32
  }
  func.func @transform_9(%arg0: i32) -> (i32, i32) {
    %c0_i32 = arith.constant 0 : i32
    %c0_i32_0 = arith.constant 0 : i32
    return %arg0, %c0_i32 : i32, i32
  }
}

</mosaic_0001>

<llo_original>
// kernel: dqn_forward.1
$region0: #{dqn_forward.1}
  #allocation0 [shape = 'u32[]', space=smem, size = 0x4, offset = 0x4, fixed_abs, tag = 'smem constant byte address 0x4 - core index']
  #allocation1 [shape = 'u32[72,128]{1,0:T(1,128)}', space=vmem, size = 0x9000, scoped, tag = 'internal scratch']
  %s0 = inlined_call_operand.vmem [shape: f32[24,32,4], index: 0, kind: input, shape index: {}]
  %s1 = inlined_call_operand.vmem [shape: f32[3,4,64], index: 1, kind: input, shape index: {}]
  %s2 = inlined_call_operand.vmem [shape: f32[1,64], index: 2, kind: input, shape index: {}]
  %s3 = inlined_call_operand.vmem [shape: f32[3,64,64], index: 3, kind: input, shape index: {}]
  %s4 = inlined_call_operand.vmem [shape: f32[1,64], index: 4, kind: input, shape index: {}]
  %s5 = inlined_call_operand.hbm [shape: f32[24,64,128], index: 5, kind: input, shape index: {}]
  %s6 = inlined_call_operand.vmem [shape: f32[1,128], index: 6, kind: input, shape index: {}]
  %s7 = inlined_call_operand.vmem [shape: f32[128,12], index: 7, kind: input, shape index: {}]
  %s8 = inlined_call_operand.vmem [shape: f32[1,12], index: 8, kind: input, shape index: {}]
  %s9 = inlined_call_operand.vmem [shape: f32[32,12], index: 9, kind: output, shape index: {}]
  %s10 = sld [smem:[#allocation0]]
  $region50: #{dqn_forward.1} parent=0
    _
  %s12 = ssub.s32 1, %s10
  %s13 = scalar_select 0, %s12, %s10
  $region1: #{dqn_forward.1} parent=0
    #allocation2 [shape = 'u8[786432]{0}', space=vmem, size = 0xc0000, scoped, tag = 'input window, operand 5, single buffered']
    #allocation3 [shape = 's32[1]{0}', space=sflag, size = 0x4, scoped, tag = 'scoped memory for dqn_forward.1']
    %14 = vsyncpa [#allocation3], 0
    // Predicated region
    $region2: #{dqn_forward.1} parent=1 // pred_check
      _
    $region3: #{dqn_forward.1} parent=1 // pred_check_branch
      %16 = sbr.rel (0) target = $region5
    $region4: #{dqn_forward.1} parent=1 // pred_region
      _
    $region5: #{dqn_forward.1} parent=1 // pred_fallthru
      _
    // Predicated region
    $region6: #{dqn_forward.1} parent=1 // pred_check
      _
    $region7: #{dqn_forward.1} parent=1 // pred_check_branch
      %18 = sbr.rel (0) target = $region9
    $region8: #{dqn_forward.1} parent=1 // pred_region
      _
    $region9: #{dqn_forward.1} parent=1 // pred_fallthru
      _
    // Predicated region
    $region10: #{dqn_forward.1} parent=1 // pred_check
      _
    $region11: #{dqn_forward.1} parent=1 // pred_check_branch
      %20 = sbr.rel (0) target = $region13
    $region12: #{dqn_forward.1} parent=1 // pred_region
      _
    $region13: #{dqn_forward.1} parent=1 // pred_fallthru
      _
    // Predicated region
    $region14: #{dqn_forward.1} parent=1 // pred_check
      _
    $region15: #{dqn_forward.1} parent=1 // pred_check_branch
      %22 = sbr.rel (0) target = $region17
    $region16: #{dqn_forward.1} parent=1 // pred_region
      _
    $region17: #{dqn_forward.1} parent=1 // pred_fallthru
      _
    // Predicated region
    $region18: #{dqn_forward.1} parent=1 // pred_check
      _
    $region19: #{dqn_forward.1} parent=1 // pred_check_branch
      %24 = sbr.rel (0) target = $region21
    $region20: #{dqn_forward.1} parent=1 // pred_region
      _
    $region21: #{dqn_forward.1} parent=1 // pred_fallthru
      _
    // Predicated region
    $region22: #{dqn_forward.1} parent=1 // pred_check
      _
    $region23: #{dqn_forward.1} parent=1 // pred_check_branch
      %26 = sbr.rel (0) target = $region25
    $region24: #{dqn_forward.1} parent=1 // pred_region
      %28 = vsyncadd [#allocation3], 0
      %s29 = sshll.u32 %s5, 4
      %s30 = int_to_ptr.hbm [resolvable:$true] %s29
      %s31 = sshll.u32 [#allocation2], 4
      %s32 = int_to_ptr.vmem [resolvable:$true] %s31
      %37 = dma.hbm_to_vmem [thread:$0]  %s30, 24576, %s32, [#allocation3], 128, 128, 8
    $region25: #{dqn_forward.1} parent=1 // pred_fallthru
      _
    // Predicated region
    $region26: #{dqn_forward.1} parent=1 // pred_check
      _
    $region27: #{dqn_forward.1} parent=1 // pred_check_branch
      %39 = sbr.rel (0) target = $region29
    $region28: #{dqn_forward.1} parent=1 // pred_region
      _
    $region29: #{dqn_forward.1} parent=1 // pred_fallthru
      _
    // Predicated region
    $region30: #{dqn_forward.1} parent=1 // pred_check
      _
    $region31: #{dqn_forward.1} parent=1 // pred_check_branch
      %41 = sbr.rel (0) target = $region33
    $region32: #{dqn_forward.1} parent=1 // pred_region
      _
    $region33: #{dqn_forward.1} parent=1 // pred_fallthru
      _
    // Predicated region
    $region34: #{dqn_forward.1} parent=1 // pred_check
      _
    $region35: #{dqn_forward.1} parent=1 // pred_check_branch
      %43 = sbr.rel (0) target = $region37
    $region36: #{dqn_forward.1} parent=1 // pred_region
      _
    $region37: #{dqn_forward.1} parent=1 // pred_fallthru
      _
    // Predicated region
    $region38: #{dqn_forward.1} parent=1 // pred_check
      _
    $region39: #{dqn_forward.1} parent=1 // pred_check_branch
      %45 = sbr.rel (0) target = $region41
    $region40: #{dqn_forward.1} parent=1 // pred_region
      %47 = dma.done [#allocation3], 24576
    $region41: #{dqn_forward.1} parent=1 // pred_fallthru
      _
    %v48 = vld [vmem:[%s0] sm:$0xff]
    %v49 = vld [vmem:[%s0 + $0x8] sm:$0xff]
    %v50 = vld [vmem:[%s0 + $0x10] sm:$0xff]
    %v51 = vld [vmem:[%s0 + $0x18] sm:$0xff]
    %v52 = vld [vmem:[%s0 + $0x20] sm:$0xff]
    %v53 = vld [vmem:[%s0 + $0x28] sm:$0xff]
    %v54 = vld [vmem:[%s0 + $0x30] sm:$0xff]
    %v55 = vld [vmem:[%s0 + $0x38] sm:$0xff]
    %v56 = vld [vmem:[%s0 + $0x40] sm:$0xff]
    %v57 = vld [vmem:[%s0 + $0x48] sm:$0xff]
    %v58 = vld [vmem:[%s0 + $0x50] sm:$0xff]
    %v59 = vld [vmem:[%s0 + $0x58] sm:$0xff]
    %v60 = vld [vmem:[%s0 + $0x60] sm:$0xff]
    %v61 = vld [vmem:[%s0 + $0x68] sm:$0xff]
    %v62 = vld [vmem:[%s0 + $0x70] sm:$0xff]
    %v63 = vld [vmem:[%s0 + $0x78] sm:$0xff]
    %v64 = vld [vmem:[%s0 + $0x80] sm:$0xff]
    %v65 = vld [vmem:[%s0 + $0x88] sm:$0xff]
    %v66 = vld [vmem:[%s0 + $0x90] sm:$0xff]
    %v67 = vld [vmem:[%s0 + $0x98] sm:$0xff]
    %v68 = vld [vmem:[%s0 + $0xa0] sm:$0xff]
    %v69 = vld [vmem:[%s0 + $0xa8] sm:$0xff]
    %v70 = vld [vmem:[%s0 + $0xb0] sm:$0xff]
    %v71 = vld [vmem:[%s0 + $0xb8] sm:$0xff]
    %v72 = vld [vmem:[%s0 + $0xc0] sm:$0xff]
    %v73 = vld [vmem:[%s0 + $0xc8] sm:$0xff]
    %v74 = vld [vmem:[%s0 + $0xd0] sm:$0xff]
    %v75 = vld [vmem:[%s0 + $0xd8] sm:$0xff]
    %v76 = vld [vmem:[%s0 + $0xe0] sm:$0xff]
    %v77 = vld [vmem:[%s0 + $0xe8] sm:$0xff]
    %v78 = vld [vmem:[%s0 + $0xf0] sm:$0xff]
    %v79 = vld [vmem:[%s0 + $0xf8] sm:$0xff]
    %v80 = vld [vmem:[%s0 + $0x100] sm:$0xff]
    %v81 = vld [vmem:[%s0 + $0x108] sm:$0xff]
    %v82 = vld [vmem:[%s0 + $0x110] sm:$0xff]
    %v83 = vld [vmem:[%s0 + $0x118] sm:$0xff]
    %v84 = vld [vmem:[%s0 + $0x120] sm:$0xff]
    %v85 = vld [vmem:[%s0 + $0x128] sm:$0xff]
    %v86 = vld [vmem:[%s0 + $0x130] sm:$0xff]
    %v87 = vld [vmem:[%s0 + $0x138] sm:$0xff]
    %v88 = vld [vmem:[%s0 + $0x140] sm:$0xff]
    %v89 = vld [vmem:[%s0 + $0x148] sm:$0xff]
    %v90 = vld [vmem:[%s0 + $0x150] sm:$0xff]
    %v91 = vld [vmem:[%s0 + $0x158] sm:$0xff]
    %v92 = vld [vmem:[%s0 + $0x160] sm:$0xff]
    %v93 = vld [vmem:[%s0 + $0x168] sm:$0xff]
    %v94 = vld [vmem:[%s0 + $0x170] sm:$0xff]
    %v95 = vld [vmem:[%s0 + $0x178] sm:$0xff]
    %v96 = vld [vmem:[%s0 + $0x180] sm:$0xff]
    %v97 = vld [vmem:[%s0 + $0x188] sm:$0xff]
    %v98 = vld [vmem:[%s0 + $0x190] sm:$0xff]
    %v99 = vld [vmem:[%s0 + $0x198] sm:$0xff]
    %v100 = vld [vmem:[%s0 + $0x1a0] sm:$0xff]
    %v101 = vld [vmem:[%s0 + $0x1a8] sm:$0xff]
    %v102 = vld [vmem:[%s0 + $0x1b0] sm:$0xff]
    %v103 = vld [vmem:[%s0 + $0x1b8] sm:$0xff]
    %v104 = vld [vmem:[%s0 + $0x1c0] sm:$0xff]
    %v105 = vld [vmem:[%s0 + $0x1c8] sm:$0xff]
    %v106 = vld [vmem:[%s0 + $0x1d0] sm:$0xff]
    %v107 = vld [vmem:[%s0 + $0x1d8] sm:$0xff]
    %v108 = vld [vmem:[%s0 + $0x1e0] sm:$0xff]
    %v109 = vld [vmem:[%s0 + $0x1e8] sm:$0xff]
    %v110 = vld [vmem:[%s0 + $0x1f0] sm:$0xff]
    %v111 = vld [vmem:[%s0 + $0x1f8] sm:$0xff]
    %v112 = vld [vmem:[%s0 + $0x200] sm:$0xff]
    %v113 = vld [vmem:[%s0 + $0x208] sm:$0xff]
    %v114 = vld [vmem:[%s0 + $0x210] sm:$0xff]
    %v115 = vld [vmem:[%s0 + $0x218] sm:$0xff]
    %v116 = vld [vmem:[%s0 + $0x220] sm:$0xff]
    %v117 = vld [vmem:[%s0 + $0x228] sm:$0xff]
    %v118 = vld [vmem:[%s0 + $0x230] sm:$0xff]
    %v119 = vld [vmem:[%s0 + $0x238] sm:$0xff]
    %v120 = vld [vmem:[%s0 + $0x240] sm:$0xff]
    %v121 = vld [vmem:[%s0 + $0x248] sm:$0xff]
    %v122 = vld [vmem:[%s0 + $0x250] sm:$0xff]
    %v123 = vld [vmem:[%s0 + $0x258] sm:$0xff]
    %v124 = vld [vmem:[%s0 + $0x260] sm:$0xff]
    %v125 = vld [vmem:[%s0 + $0x268] sm:$0xff]
    %v126 = vld [vmem:[%s0 + $0x270] sm:$0xff]
    %v127 = vld [vmem:[%s0 + $0x278] sm:$0xff]
    %v128 = vld [vmem:[%s0 + $0x280] sm:$0xff]
    %v129 = vld [vmem:[%s0 + $0x288] sm:$0xff]
    %v130 = vld [vmem:[%s0 + $0x290] sm:$0xff]
    %v131 = vld [vmem:[%s0 + $0x298] sm:$0xff]
    %v132 = vld [vmem:[%s0 + $0x2a0] sm:$0xff]
    %v133 = vld [vmem:[%s0 + $0x2a8] sm:$0xff]
    %v134 = vld [vmem:[%s0 + $0x2b0] sm:$0xff]
    %v135 = vld [vmem:[%s0 + $0x2b8] sm:$0xff]
    %v136 = vld [vmem:[%s0 + $0x2c0] sm:$0xff]
    %v137 = vld [vmem:[%s0 + $0x2c8] sm:$0xff]
    %v138 = vld [vmem:[%s0 + $0x2d0] sm:$0xff]
    %v139 = vld [vmem:[%s0 + $0x2d8] sm:$0xff]
    %v140 = vld [vmem:[%s0 + $0x2e0] sm:$0xff]
    %v141 = vld [vmem:[%s0 + $0x2e8] sm:$0xff]
    %v142 = vld [vmem:[%s0 + $0x2f0] sm:$0xff]
    %v143 = vld [vmem:[%s0 + $0x2f8] sm:$0xff]
    %v144 = vld [vmem:[%s1] sm:$0xf]
    %s145 = scalar_lea.vmem %s1, 4
    %v146 = vld [vmem:[%s145] sm:$0xf]
    %vm147 = vcmask 31744
    %v149 = vsel %vm147, %v48, 0
    %v152 = vsel %vm147, %v49, 0
    %v155 = vsel %vm147, %v50, 0
    %v158 = vsel %vm147, %v51, 0
    %v161 = vsel %vm147, %v52, 0
    %v164 = vsel %vm147, %v53, 0
    %v167 = vsel %vm147, %v54, 0
    %v170 = vsel %vm147, %v55, 0
    %v173 = vsel %vm147, %v56, 0
    %v176 = vsel %vm147, %v57, 0
    %v179 = vsel %vm147, %v58, 0
    %v182 = vsel %vm147, %v59, 0
    %v185 = vsel %vm147, %v60, 0
    %v188 = vsel %vm147, %v61, 0
    %v191 = vsel %vm147, %v62, 0
    %v194 = vsel %vm147, %v63, 0
    %v197 = vsel %vm147, %v64, 0
    %v200 = vsel %vm147, %v65, 0
    %v203 = vsel %vm147, %v66, 0
    %v206 = vsel %vm147, %v67, 0
    %v209 = vsel %vm147, %v68, 0
    %v212 = vsel %vm147, %v69, 0
    %v215 = vsel %vm147, %v70, 0
    %v218 = vsel %vm147, %v71, 0
    %v221 = vsel %vm147, %v72, 0
    %v224 = vsel %vm147, %v73, 0
    %v227 = vsel %vm147, %v74, 0
    %v230 = vsel %vm147, %v75, 0
    %v233 = vsel %vm147, %v76, 0
    %v236 = vsel %vm147, %v77, 0
    %v239 = vsel %vm147, %v78, 0
    %v242 = vsel %vm147, %v79, 0
    %v245 = vsel %vm147, %v80, 0
    %v248 = vsel %vm147, %v81, 0
    %v251 = vsel %vm147, %v82, 0
    %v254 = vsel %vm147, %v83, 0
    %v257 = vsel %vm147, %v84, 0
    %v260 = vsel %vm147, %v85, 0
    %v263 = vsel %vm147, %v86, 0
    %v266 = vsel %vm147, %v87, 0
    %v269 = vsel %vm147, %v88, 0
    %v272 = vsel %vm147, %v89, 0
    %v275 = vsel %vm147, %v90, 0
    %v278 = vsel %vm147, %v91, 0
    %v281 = vsel %vm147, %v92, 0
    %v284 = vsel %vm147, %v93, 0
    %v287 = vsel %vm147, %v94, 0
    %v290 = vsel %vm147, %v95, 0
    %v293 = vsel %vm147, %v96, 0
    %v296 = vsel %vm147, %v97, 0
    %v299 = vsel %vm147, %v98, 0
    %v302 = vsel %vm147, %v99, 0
    %v305 = vsel %vm147, %v100, 0
    %v308 = vsel %vm147, %v101, 0
    %v311 = vsel %vm147, %v102, 0
    %v314 = vsel %vm147, %v103, 0
    %v317 = vsel %vm147, %v104, 0
    %v320 = vsel %vm147, %v105, 0
    %v323 = vsel %vm147, %v106, 0
    %v326 = vsel %vm147, %v107, 0
    %v329 = vsel %vm147, %v108, 0
    %v332 = vsel %vm147, %v109, 0
    %v335 = vsel %vm147, %v110, 0
    %v338 = vsel %vm147, %v111, 0
    %v341 = vsel %vm147, %v112, 0
    %v344 = vsel %vm147, %v113, 0
    %v347 = vsel %vm147, %v114, 0
    %v350 = vsel %vm147, %v115, 0
    %v353 = vsel %vm147, %v116, 0
    %v356 = vsel %vm147, %v117, 0
    %v359 = vsel %vm147, %v118, 0
    %v362 = vsel %vm147, %v119, 0
    %v365 = vsel %vm147, %v120, 0
    %v368 = vsel %vm147, %v121, 0
    %v371 = vsel %vm147, %v122, 0
    %v374 = vsel %vm147, %v123, 0
    %v377 = vsel %vm147, %v124, 0
    %v380 = vsel %vm147, %v125, 0
    %v383 = vsel %vm147, %v126, 0
    %v386 = vsel %vm147, %v127, 0
    %v389 = vsel %vm147, %v128, 0
    %v392 = vsel %vm147, %v129, 0
    %v395 = vsel %vm147, %v130, 0
    %v398 = vsel %vm147, %v131, 0
    %v401 = vsel %vm147, %v132, 0
    %v404 = vsel %vm147, %v133, 0
    %v407 = vsel %vm147, %v134, 0
    %v410 = vsel %vm147, %v135, 0
    %v413 = vsel %vm147, %v136, 0
    %v416 = vsel %vm147, %v137, 0
    %v419 = vsel %vm147, %v138, 0
    %v422 = vsel %vm147, %v139, 0
    %v425 = vsel %vm147, %v140, 0
    %v428 = vsel %vm147, %v141, 0
    %v431 = vsel %vm147, %v142, 0
    %v434 = vsel %vm147, %v143, 0
    %vm436 = vcmask 1043456
    %v438 = vsel %vm436, %v146, 0
    %440 = vmatpush.msra.mxu0 0.0
    %441 = vmatpush.msra.mxu0 0.0
    %442 = vmatpush.msra.mxu0 0.0
    %443 = vmatpush.msra.mxu0 0.0
    %444 = vmatpush.msra.mxu0 0.0
    %445 = vmatpush.msra.mxu0 0.0
    %446 = vmatpush.msra.mxu0 0.0
    %447 = vmatpush.msra.mxu0 0.0
    %448 = vmatpush.msra.mxu0 0.0
    %449 = vmatpush.msra.mxu0 0.0
    %450 = vmatpush.msra.mxu0 0.0
    %451 = vmatpush.msra.mxu0 0.0
    %452 = vmatpush.msra.mxu0 0.0
    %453 = vmatpush.msra.mxu0 0.0
    %454 = vmatpush.msra.mxu0 0.0
    %455 = vmatpush.msra.mxu0 %v438
    %456 = vmatmul.f32.gmra.mxu0 %v149
    %v457 = vpop.f32.mrf.mxu0
    %v458 = vadd.f32 0.0, %v457
    %459 = vmatmul.f32.gmra.mxu0 %v152
    %v460 = vpop.f32.mrf.mxu0
    %v461 = vadd.f32 0.0, %v460
    %462 = vmatmul.f32.gmra.mxu0 %v155
    %v463 = vpop.f32.mrf.mxu0
    %v464 = vadd.f32 0.0, %v463
    %465 = vmatmul.f32.gmra.mxu0 %v158
    %v466 = vpop.f32.mrf.mxu0
    %v467 = vadd.f32 0.0, %v466
    %468 = vmatmul.f32.gmra.mxu0 %v161
    %v469 = vpop.f32.mrf.mxu0
    %v470 = vadd.f32 0.0, %v469
    %471 = vmatmul.f32.gmra.mxu0 %v164
    %v472 = vpop.f32.mrf.mxu0
    %v473 = vadd.f32 0.0, %v472
    %474 = vmatmul.f32.gmra.mxu0 %v167
    %v475 = vpop.f32.mrf.mxu0
    %v476 = vadd.f32 0.0, %v475
    %477 = vmatmul.f32.gmra.mxu0 %v170
    %v478 = vpop.f32.mrf.mxu0
    %v479 = vadd.f32 0.0, %v478
    %480 = vmatmul.f32.gmra.mxu0 %v173
    %v481 = vpop.f32.mrf.mxu0
    %v482 = vadd.f32 0.0, %v481
    %483 = vmatmul.f32.gmra.mxu0 %v176
    %v484 = vpop.f32.mrf.mxu0
    %v485 = vadd.f32 0.0, %v484
    %486 = vmatmul.f32.gmra.mxu0 %v179
    %v487 = vpop.f32.mrf.mxu0
    %v488 = vadd.f32 0.0, %v487
    %489 = vmatmul.f32.gmra.mxu0 %v182
    %v490 = vpop.f32.mrf.mxu0
    %v491 = vadd.f32 0.0, %v490
    %492 = vmatmul.f32.gmra.mxu0 %v185
    %v493 = vpop.f32.mrf.mxu0
    %v494 = vadd.f32 0.0, %v493
    %495 = vmatmul.f32.gmra.mxu0 %v188
    %v496 = vpop.f32.mrf.mxu0
    %v497 = vadd.f32 0.0, %v496
    %498 = vmatmul.f32.gmra.mxu0 %v191
    %v499 = vpop.f32.mrf.mxu0
    %v500 = vadd.f32 0.0, %v499
    %501 = vmatmul.f32.gmra.mxu0 %v194
    %v502 = vpop.f32.mrf.mxu0
    %v503 = vadd.f32 0.0, %v502
    %504 = vmatmul.f32.gmra.mxu0 %v197
    %v505 = vpop.f32.mrf.mxu0
    %v506 = vadd.f32 0.0, %v505
    %507 = vmatmul.f32.gmra.mxu0 %v200
    %v508 = vpop.f32.mrf.mxu0
    %v509 = vadd.f32 0.0, %v508
    %510 = vmatmul.f32.gmra.mxu0 %v203
    %v511 = vpop.f32.mrf.mxu0
    %v512 = vadd.f32 0.0, %v511
    %513 = vmatmul.f32.gmra.mxu0 %v206
    %v514 = vpop.f32.mrf.mxu0
    %v515 = vadd.f32 0.0, %v514
    %516 = vmatmul.f32.gmra.mxu0 %v209
    %v517 = vpop.f32.mrf.mxu0
    %v518 = vadd.f32 0.0, %v517
    %519 = vmatmul.f32.gmra.mxu0 %v212
    %v520 = vpop.f32.mrf.mxu0
    %v521 = vadd.f32 0.0, %v520
    %522 = vmatmul.f32.gmra.mxu0 %v215
    %v523 = vpop.f32.mrf.mxu0
    %v524 = vadd.f32 0.0, %v523
    %525 = vmatmul.f32.gmra.mxu0 %v218
    %v526 = vpop.f32.mrf.mxu0
    %v527 = vadd.f32 0.0, %v526
    %528 = vmatmul.f32.gmra.mxu0 %v221
    %v529 = vpop.f32.mrf.mxu0
    %v530 = vadd.f32 0.0, %v529
    %531 = vmatmul.f32.gmra.mxu0 %v224
    %v532 = vpop.f32.mrf.mxu0
    %v533 = vadd.f32 0.0, %v532
    %534 = vmatmul.f32.gmra.mxu0 %v227
    %v535 = vpop.f32.mrf.mxu0
    %v536 = vadd.f32 0.0, %v535
    %537 = vmatmul.f32.gmra.mxu0 %v230
    %v538 = vpop.f32.mrf.mxu0
    %v539 = vadd.f32 0.0, %v538
    %540 = vmatmul.f32.gmra.mxu0 %v233
    %v541 = vpop.f32.mrf.mxu0
    %v542 = vadd.f32 0.0, %v541
    %543 = vmatmul.f32.gmra.mxu0 %v236
    %v544 = vpop.f32.mrf.mxu0
    %v545 = vadd.f32 0.0, %v544
    %546 = vmatmul.f32.gmra.mxu0 %v239
    %v547 = vpop.f32.mrf.mxu0
    %v548 = vadd.f32 0.0, %v547
    %549 = vmatmul.f32.gmra.mxu0 %v242
    %v550 = vpop.f32.mrf.mxu0
    %v551 = vadd.f32 0.0, %v550
    %552 = vmatmul.f32.gmra.mxu0 %v245
    %v553 = vpop.f32.mrf.mxu0
    %v554 = vadd.f32 0.0, %v553
    %555 = vmatmul.f32.gmra.mxu0 %v248
    %v556 = vpop.f32.mrf.mxu0
    %v557 = vadd.f32 0.0, %v556
    %558 = vmatmul.f32.gmra.mxu0 %v251
    %v559 = vpop.f32.mrf.mxu0
    %v560 = vadd.f32 0.0, %v559
    %561 = vmatmul.f32.gmra.mxu0 %v254
    %v562 = vpop.f32.mrf.mxu0
    %v563 = vadd.f32 0.0, %v562
    %564 = vmatmul.f32.gmra.mxu0 %v257
    %v565 = vpop.f32.mrf.mxu0
    %v566 = vadd.f32 0.0, %v565
    %567 = vmatmul.f32.gmra.mxu0 %v260
    %v568 = vpop.f32.mrf.mxu0
    %v569 = vadd.f32 0.0, %v568
    %570 = vmatmul.f32.gmra.mxu0 %v263
    %v571 = vpop.f32.mrf.mxu0
    %v572 = vadd.f32 0.0, %v571
    %573 = vmatmul.f32.gmra.mxu0 %v266
    %v574 = vpop.f32.mrf.mxu0
    %v575 = vadd.f32 0.0, %v574
    %576 = vmatmul.f32.gmra.mxu0 %v269
    %v577 = vpop.f32.mrf.mxu0
    %v578 = vadd.f32 0.0, %v577
    %579 = vmatmul.f32.gmra.mxu0 %v272
    %v580 = vpop.f32.mrf.mxu0
    %v581 = vadd.f32 0.0, %v580
    %582 = vmatmul.f32.gmra.mxu0 %v275
    %v583 = vpop.f32.mrf.mxu0
    %v584 = vadd.f32 0.0, %v583
    %585 = vmatmul.f32.gmra.mxu0 %v278
    %v586 = vpop.f32.mrf.mxu0
    %v587 = vadd.f32 0.0, %v586
    %588 = vmatmul.f32.gmra.mxu0 %v281
    %v589 = vpop.f32.mrf.mxu0
    %v590 = vadd.f32 0.0, %v589
    %591 = vmatmul.f32.gmra.mxu0 %v284
    %v592 = vpop.f32.mrf.mxu0
    %v593 = vadd.f32 0.0, %v592
    %594 = vmatmul.f32.gmra.mxu0 %v287
    %v595 = vpop.f32.mrf.mxu0
    %v596 = vadd.f32 0.0, %v595
    %597 = vmatmul.f32.gmra.mxu0 %v290
    %v598 = vpop.f32.mrf.mxu0
    %v599 = vadd.f32 0.0, %v598
    %600 = vmatmul.f32.gmra.mxu0 %v293
    %v601 = vpop.f32.mrf.mxu0
    %v602 = vadd.f32 0.0, %v601
    %603 = vmatmul.f32.gmra.mxu0 %v296
    %v604 = vpop.f32.mrf.mxu0
    %v605 = vadd.f32 0.0, %v604
    %606 = vmatmul.f32.gmra.mxu0 %v299
    %v607 = vpop.f32.mrf.mxu0
    %v608 = vadd.f32 0.0, %v607
    %609 = vmatmul.f32.gmra.mxu0 %v302
    %v610 = vpop.f32.mrf.mxu0
    %v611 = vadd.f32 0.0, %v610
    %612 = vmatmul.f32.gmra.mxu0 %v305
    %v613 = vpop.f32.mrf.mxu0
    %v614 = vadd.f32 0.0, %v613
    %615 = vmatmul.f32.gmra.mxu0 %v308
    %v616 = vpop.f32.mrf.mxu0
    %v617 = vadd.f32 0.0, %v616
    %618 = vmatmul.f32.gmra.mxu0 %v311
    %v619 = vpop.f32.mrf.mxu0
    %v620 = vadd.f32 0.0, %v619
    %621 = vmatmul.f32.gmra.mxu0 %v314
    %v622 = vpop.f32.mrf.mxu0
    %v623 = vadd.f32 0.0, %v622
    %624 = vmatmul.f32.gmra.mxu0 %v317
    %v625 = vpop.f32.mrf.mxu0
    %v626 = vadd.f32 0.0, %v625
    %627 = vmatmul.f32.gmra.mxu0 %v320
    %v628 = vpop.f32.mrf.mxu0
    %v629 = vadd.f32 0.0, %v628
    %630 = vmatmul.f32.gmra.mxu0 %v323
    %v631 = vpop.f32.mrf.mxu0
    %v632 = vadd.f32 0.0, %v631
    %633 = vmatmul.f32.gmra.mxu0 %v326
    %v634 = vpop.f32.mrf.mxu0
    %v635 = vadd.f32 0.0, %v634
    %636 = vmatmul.f32.gmra.mxu0 %v329
    %v637 = vpop.f32.mrf.mxu0
    %v638 = vadd.f32 0.0, %v637
    %639 = vmatmul.f32.gmra.mxu0 %v332
    %v640 = vpop.f32.mrf.mxu0
    %v641 = vadd.f32 0.0, %v640
    %642 = vmatmul.f32.gmra.mxu0 %v335
    %v643 = vpop.f32.mrf.mxu0
    %v644 = vadd.f32 0.0, %v643
    %645 = vmatmul.f32.gmra.mxu0 %v338
    %v646 = vpop.f32.mrf.mxu0
    %v647 = vadd.f32 0.0, %v646
    %648 = vmatmul.f32.gmra.mxu0 %v341
    %v649 = vpop.f32.mrf.mxu0
    %v650 = vadd.f32 0.0, %v649
    %651 = vmatmul.f32.gmra.mxu0 %v344
    %v652 = vpop.f32.mrf.mxu0
    %v653 = vadd.f32 0.0, %v652
    %654 = vmatmul.f32.gmra.mxu0 %v347
    %v655 = vpop.f32.mrf.mxu0
    %v656 = vadd.f32 0.0, %v655
    %657 = vmatmul.f32.gmra.mxu0 %v350
    %v658 = vpop.f32.mrf.mxu0
    %v659 = vadd.f32 0.0, %v658
    %660 = vmatmul.f32.gmra.mxu0 %v353
    %v661 = vpop.f32.mrf.mxu0
    %v662 = vadd.f32 0.0, %v661
    %663 = vmatmul.f32.gmra.mxu0 %v356
    %v664 = vpop.f32.mrf.mxu0
    %v665 = vadd.f32 0.0, %v664
    %666 = vmatmul.f32.gmra.mxu0 %v359
    %v667 = vpop.f32.mrf.mxu0
    %v668 = vadd.f32 0.0, %v667
    %669 = vmatmul.f32.gmra.mxu0 %v362
    %v670 = vpop.f32.mrf.mxu0
    %v671 = vadd.f32 0.0, %v670
    %672 = vmatmul.f32.gmra.mxu0 %v365
    %v673 = vpop.f32.mrf.mxu0
    %v674 = vadd.f32 0.0, %v673
    %675 = vmatmul.f32.gmra.mxu0 %v368
    %v676 = vpop.f32.mrf.mxu0
    %v677 = vadd.f32 0.0, %v676
    %678 = vmatmul.f32.gmra.mxu0 %v371
    %v679 = vpop.f32.mrf.mxu0
    %v680 = vadd.f32 0.0, %v679
    %681 = vmatmul.f32.gmra.mxu0 %v374
    %v682 = vpop.f32.mrf.mxu0
    %v683 = vadd.f32 0.0, %v682
    %684 = vmatmul.f32.gmra.mxu0 %v377
    %v685 = vpop.f32.mrf.mxu0
    %v686 = vadd.f32 0.0, %v685
    %687 = vmatmul.f32.gmra.mxu0 %v380
    %v688 = vpop.f32.mrf.mxu0
    %v689 = vadd.f32 0.0, %v688
    %690 = vmatmul.f32.gmra.mxu0 %v383
    %v691 = vpop.f32.mrf.mxu0
    %v692 = vadd.f32 0.0, %v691
    %693 = vmatmul.f32.gmra.mxu0 %v386
    %v694 = vpop.f32.mrf.mxu0
    %v695 = vadd.f32 0.0, %v694
    %696 = vmatmul.f32.gmra.mxu0 %v389
    %v697 = vpop.f32.mrf.mxu0
    %v698 = vadd.f32 0.0, %v697
    %699 = vmatmul.f32.gmra.mxu0 %v392
    %v700 = vpop.f32.mrf.mxu0
    %v701 = vadd.f32 0.0, %v700
    %702 = vmatmul.f32.gmra.mxu0 %v395
    %v703 = vpop.f32.mrf.mxu0
    %v704 = vadd.f32 0.0, %v703
    %705 = vmatmul.f32.gmra.mxu0 %v398
    %v706 = vpop.f32.mrf.mxu0
    %v707 = vadd.f32 0.0, %v706
    %708 = vmatmul.f32.gmra.mxu0 %v401
    %v709 = vpop.f32.mrf.mxu0
    %v710 = vadd.f32 0.0, %v709
    %711 = vmatmul.f32.gmra.mxu0 %v404
    %v712 = vpop.f32.mrf.mxu0
    %v713 = vadd.f32 0.0, %v712
    %714 = vmatmul.f32.gmra.mxu0 %v407
    %v715 = vpop.f32.mrf.mxu0
    %v716 = vadd.f32 0.0, %v715
    %717 = vmatmul.f32.gmra.mxu0 %v410
    %v718 = vpop.f32.mrf.mxu0
    %v719 = vadd.f32 0.0, %v718
    %720 = vmatmul.f32.gmra.mxu0 %v413
    %v721 = vpop.f32.mrf.mxu0
    %v722 = vadd.f32 0.0, %v721
    %723 = vmatmul.f32.gmra.mxu0 %v416
    %v724 = vpop.f32.mrf.mxu0
    %v725 = vadd.f32 0.0, %v724
    %726 = vmatmul.f32.gmra.mxu0 %v419
    %v727 = vpop.f32.mrf.mxu0
    %v728 = vadd.f32 0.0, %v727
    %729 = vmatmul.f32.gmra.mxu0 %v422
    %v730 = vpop.f32.mrf.mxu0
    %v731 = vadd.f32 0.0, %v730
    %732 = vmatmul.f32.gmra.mxu0 %v425
    %v733 = vpop.f32.mrf.mxu0
    %v734 = vadd.f32 0.0, %v733
    %735 = vmatmul.f32.gmra.mxu0 %v428
    %v736 = vpop.f32.mrf.mxu0
    %v737 = vadd.f32 0.0, %v736
    %738 = vmatmul.f32.gmra.mxu0 %v431
    %v739 = vpop.f32.mrf.mxu0
    %v740 = vadd.f32 0.0, %v739
    %741 = vmatmul.f32.gmra.mxu0 %v434
    %v742 = vpop.f32.mrf.mxu0
    %v743 = vadd.f32 0.0, %v742
    %744 = vdwg.mxu0
    %v746 = vsel %vm147, 0.0, 0
    %v749 = vsel %vm436, %v144, 0
    %751 = vmatpush.msra.mxu0 0.0
    %752 = vmatpush.msra.mxu0 0.0
    %753 = vmatpush.msra.mxu0 0.0
    %754 = vmatpush.msra.mxu0 0.0
    %755 = vmatpush.msra.mxu0 0.0
    %756 = vmatpush.msra.mxu0 0.0
    %757 = vmatpush.msra.mxu0 0.0
    %758 = vmatpush.msra.mxu0 0.0
    %759 = vmatpush.msra.mxu0 0.0
    %760 = vmatpush.msra.mxu0 0.0
    %761 = vmatpush.msra.mxu0 0.0
    %762 = vmatpush.msra.mxu0 0.0
    %763 = vmatpush.msra.mxu0 0.0
    %764 = vmatpush.msra.mxu0 0.0
    %765 = vmatpush.msra.mxu0 0.0
    %766 = vmatpush.msra.mxu0 %v749
    %767 = vmatmul.f32.gmra.mxu0 %v746
    %v768 = vpop.f32.mrf.mxu0
    %v769 = vadd.f32 %v458, %v768
    %770 = vmatmul.f32.gmra.mxu0 %v746
    %v771 = vpop.f32.mrf.mxu0
    %v772 = vadd.f32 %v461, %v771
    %773 = vmatmul.f32.gmra.mxu0 %v746
    %v774 = vpop.f32.mrf.mxu0
    %v775 = vadd.f32 %v464, %v774
    %776 = vmatmul.f32.gmra.mxu0 %v746
    %v777 = vpop.f32.mrf.mxu0
    %v778 = vadd.f32 %v467, %v777
    %779 = vmatmul.f32.gmra.mxu0 %v149
    %v780 = vpop.f32.mrf.mxu0
    %v781 = vadd.f32 %v470, %v780
    %782 = vmatmul.f32.gmra.mxu0 %v152
    %v783 = vpop.f32.mrf.mxu0
    %v784 = vadd.f32 %v473, %v783
    %785 = vmatmul.f32.gmra.mxu0 %v155
    %v786 = vpop.f32.mrf.mxu0
    %v787 = vadd.f32 %v476, %v786
    %788 = vmatmul.f32.gmra.mxu0 %v158
    %v789 = vpop.f32.mrf.mxu0
    %v790 = vadd.f32 %v479, %v789
    %791 = vmatmul.f32.gmra.mxu0 %v161
    %v792 = vpop.f32.mrf.mxu0
    %v793 = vadd.f32 %v482, %v792
    %794 = vmatmul.f32.gmra.mxu0 %v164
    %v795 = vpop.f32.mrf.mxu0
    %v796 = vadd.f32 %v485, %v795
    %797 = vmatmul.f32.gmra.mxu0 %v167
    %v798 = vpop.f32.mrf.mxu0
    %v799 = vadd.f32 %v488, %v798
    %800 = vmatmul.f32.gmra.mxu0 %v170
    %v801 = vpop.f32.mrf.mxu0
    %v802 = vadd.f32 %v491, %v801
    %803 = vmatmul.f32.gmra.mxu0 %v173
    %v804 = vpop.f32.mrf.mxu0
    %v805 = vadd.f32 %v494, %v804
    %806 = vmatmul.f32.gmra.mxu0 %v176
    %v807 = vpop.f32.mrf.mxu0
    %v808 = vadd.f32 %v497, %v807
    %809 = vmatmul.f32.gmra.mxu0 %v179
    %v810 = vpop.f32.mrf.mxu0
    %v811 = vadd.f32 %v500, %v810
    %812 = vmatmul.f32.gmra.mxu0 %v182
    %v813 = vpop.f32.mrf.mxu0
    %v814 = vadd.f32 %v503, %v813
    %815 = vmatmul.f32.gmra.mxu0 %v185
    %v816 = vpop.f32.mrf.mxu0
    %v817 = vadd.f32 %v506, %v816
    %818 = vmatmul.f32.gmra.mxu0 %v188
    %v819 = vpop.f32.mrf.mxu0
    %v820 = vadd.f32 %v509, %v819
    %821 = vmatmul.f32.gmra.mxu0 %v191
    %v822 = vpop.f32.mrf.mxu0
    %v823 = vadd.f32 %v512, %v822
    %824 = vmatmul.f32.gmra.mxu0 %v194
    %v825 = vpop.f32.mrf.mxu0
    %v826 = vadd.f32 %v515, %v825
    %827 = vmatmul.f32.gmra.mxu0 %v197
    %v828 = vpop.f32.mrf.mxu0
    %v829 = vadd.f32 %v518, %v828
    %830 = vmatmul.f32.gmra.mxu0 %v200
    %v831 = vpop.f32.mrf.mxu0
    %v832 = vadd.f32 %v521, %v831
    %833 = vmatmul.f32.gmra.mxu0 %v203
    %v834 = vpop.f32.mrf.mxu0
    %v835 = vadd.f32 %v524, %v834
    %836 = vmatmul.f32.gmra.mxu0 %v206
    %v837 = vpop.f32.mrf.mxu0
    %v838 = vadd.f32 %v527, %v837
    %839 = vmatmul.f32.gmra.mxu0 %v209
    %v840 = vpop.f32.mrf.mxu0
    %v841 = vadd.f32 %v530, %v840
    %842 = vmatmul.f32.gmra.mxu0 %v212
    %v843 = vpop.f32.mrf.mxu0
    %v844 = vadd.f32 %v533, %v843
    %845 = vmatmul.f32.gmra.mxu0 %v215
    %v846 = vpop.f32.mrf.mxu0
    %v847 = vadd.f32 %v536, %v846
    %848 = vmatmul.f32.gmra.mxu0 %v218
    %v849 = vpop.f32.mrf.mxu0
    %v850 = vadd.f32 %v539, %v849
    %851 = vmatmul.f32.gmra.mxu0 %v221
    %v852 = vpop.f32.mrf.mxu0
    %v853 = vadd.f32 %v542, %v852
    %854 = vmatmul.f32.gmra.mxu0 %v224
    %v855 = vpop.f32.mrf.mxu0
    %v856 = vadd.f32 %v545, %v855
    %857 = vmatmul.f32.gmra.mxu0 %v227
    %v858 = vpop.f32.mrf.mxu0
    %v859 = vadd.f32 %v548, %v858
    %860 = vmatmul.f32.gmra.mxu0 %v230
    %v861 = vpop.f32.mrf.mxu0
    %v862 = vadd.f32 %v551, %v861
    %863 = vmatmul.f32.gmra.mxu0 %v233
    %v864 = vpop.f32.mrf.mxu0
    %v865 = vadd.f32 %v554, %v864
    %866 = vmatmul.f32.gmra.mxu0 %v236
    %v867 = vpop.f32.mrf.mxu0
    %v868 = vadd.f32 %v557, %v867
    %869 = vmatmul.f32.gmra.mxu0 %v239
    %v870 = vpop.f32.mrf.mxu0
    %v871 = vadd.f32 %v560, %v870
    %872 = vmatmul.f32.gmra.mxu0 %v242
    %v873 = vpop.f32.mrf.mxu0
    %v874 = vadd.f32 %v563, %v873
    %875 = vmatmul.f32.gmra.mxu0 %v245
    %v876 = vpop.f32.mrf.mxu0
    %v877 = vadd.f32 %v566, %v876
    %878 = vmatmul.f32.gmra.mxu0 %v248
    %v879 = vpop.f32.mrf.mxu0
    %v880 = vadd.f32 %v569, %v879
    %881 = vmatmul.f32.gmra.mxu0 %v251
    %v882 = vpop.f32.mrf.mxu0
    %v883 = vadd.f32 %v572, %v882
    %884 = vmatmul.f32.gmra.mxu0 %v254
    %v885 = vpop.f32.mrf.mxu0
    %v886 = vadd.f32 %v575, %v885
    %887 = vmatmul.f32.gmra.mxu0 %v257
    %v888 = vpop.f32.mrf.mxu0
    %v889 = vadd.f32 %v578, %v888
    %890 = vmatmul.f32.gmra.mxu0 %v260
    %v891 = vpop.f32.mrf.mxu0
    %v892 = vadd.f32 %v581, %v891
    %893 = vmatmul.f32.gmra.mxu0 %v263
    %v894 = vpop.f32.mrf.mxu0
    %v895 = vadd.f32 %v584, %v894
    %896 = vmatmul.f32.gmra.mxu0 %v266
    %v897 = vpop.f32.mrf.mxu0
    %v898 = vadd.f32 %v587, %v897
    %899 = vmatmul.f32.gmra.mxu0 %v269
    %v900 = vpop.f32.mrf.mxu0
    %v901 = vadd.f32 %v590, %v900
    %902 = vmatmul.f32.gmra.mxu0 %v272
    %v903 = vpop.f32.mrf.mxu0
    %v904 = vadd.f32 %v593, %v903
    %905 = vmatmul.f32.gmra.mxu0 %v275
    %v906 = vpop.f32.mrf.mxu0
    %v907 = vadd.f32 %v596, %v906
    %908 = vmatmul.f32.gmra.mxu0 %v278
    %v909 = vpop.f32.mrf.mxu0
    %v910 = vadd.f32 %v599, %v909
    %911 = vmatmul.f32.gmra.mxu0 %v281
    %v912 = vpop.f32.mrf.mxu0
    %v913 = vadd.f32 %v602, %v912
    %914 = vmatmul.f32.gmra.mxu0 %v284
    %v915 = vpop.f32.mrf.mxu0
    %v916 = vadd.f32 %v605, %v915
    %917 = vmatmul.f32.gmra.mxu0 %v287
    %v918 = vpop.f32.mrf.mxu0
    %v919 = vadd.f32 %v608, %v918
    %920 = vmatmul.f32.gmra.mxu0 %v290
    %v921 = vpop.f32.mrf.mxu0
    %v922 = vadd.f32 %v611, %v921
    %923 = vmatmul.f32.gmra.mxu0 %v293
    %v924 = vpop.f32.mrf.mxu0
    %v925 = vadd.f32 %v614, %v924
    %926 = vmatmul.f32.gmra.mxu0 %v296
    %v927 = vpop.f32.mrf.mxu0
    %v928 = vadd.f32 %v617, %v927
    %929 = vmatmul.f32.gmra.mxu0 %v299
    %v930 = vpop.f32.mrf.mxu0
    %v931 = vadd.f32 %v620, %v930
    %932 = vmatmul.f32.gmra.mxu0 %v302
    %v933 = vpop.f32.mrf.mxu0
    %v934 = vadd.f32 %v623, %v933
    %935 = vmatmul.f32.gmra.mxu0 %v305
    %v936 = vpop.f32.mrf.mxu0
    %v937 = vadd.f32 %v626, %v936
    %938 = vmatmul.f32.gmra.mxu0 %v308
    %v939 = vpop.f32.mrf.mxu0
    %v940 = vadd.f32 %v629, %v939
    %941 = vmatmul.f32.gmra.mxu0 %v311
    %v942 = vpop.f32.mrf.mxu0
    %v943 = vadd.f32 %v632, %v942
    %944 = vmatmul.f32.gmra.mxu0 %v314
    %v945 = vpop.f32.mrf.mxu0
    %v946 = vadd.f32 %v635, %v945
    %947 = vmatmul.f32.gmra.mxu0 %v317
    %v948 = vpop.f32.mrf.mxu0
    %v949 = vadd.f32 %v638, %v948
    %950 = vmatmul.f32.gmra.mxu0 %v320
    %v951 = vpop.f32.mrf.mxu0
    %v952 = vadd.f32 %v641, %v951
    %953 = vmatmul.f32.gmra.mxu0 %v323
    %v954 = vpop.f32.mrf.mxu0
    %v955 = vadd.f32 %v644, %v954
    %956 = vmatmul.f32.gmra.mxu0 %v326
    %v957 = vpop.f32.mrf.mxu0
    %v958 = vadd.f32 %v647, %v957
    %959 = vmatmul.f32.gmra.mxu0 %v329
    %v960 = vpop.f32.mrf.mxu0
    %v961 = vadd.f32 %v650, %v960
    %962 = vmatmul.f32.gmra.mxu0 %v332
    %v963 = vpop.f32.mrf.mxu0
    %v964 = vadd.f32 %v653, %v963
    %965 = vmatmul.f32.gmra.mxu0 %v335
    %v966 = vpop.f32.mrf.mxu0
    %v967 = vadd.f32 %v656, %v966
    %968 = vmatmul.f32.gmra.mxu0 %v338
    %v969 = vpop.f32.mrf.mxu0
    %v970 = vadd.f32 %v659, %v969
    %971 = vmatmul.f32.gmra.mxu0 %v341
    %v972 = vpop.f32.mrf.mxu0
    %v973 = vadd.f32 %v662, %v972
    %974 = vmatmul.f32.gmra.mxu0 %v344
    %v975 = vpop.f32.mrf.mxu0
    %v976 = vadd.f32 %v665, %v975
    %977 = vmatmul.f32.gmra.mxu0 %v347
    %v978 = vpop.f32.mrf.mxu0
    %v979 = vadd.f32 %v668, %v978
    %980 = vmatmul.f32.gmra.mxu0 %v350
    %v981 = vpop.f32.mrf.mxu0
    %v982 = vadd.f32 %v671, %v981
    %983 = vmatmul.f32.gmra.mxu0 %v353
    %v984 = vpop.f32.mrf.mxu0
    %v985 = vadd.f32 %v674, %v984
    %986 = vmatmul.f32.gmra.mxu0 %v356
    %v987 = vpop.f32.mrf.mxu0
    %v988 = vadd.f32 %v677, %v987
    %989 = vmatmul.f32.gmra.mxu0 %v359
    %v990 = vpop.f32.mrf.mxu0
    %v991 = vadd.f32 %v680, %v990
    %992 = vmatmul.f32.gmra.mxu0 %v362
    %v993 = vpop.f32.mrf.mxu0
    %v994 = vadd.f32 %v683, %v993
    %995 = vmatmul.f32.gmra.mxu0 %v365
    %v996 = vpop.f32.mrf.mxu0
    %v997 = vadd.f32 %v686, %v996
    %998 = vmatmul.f32.gmra.mxu0 %v368
    %v999 = vpop.f32.mrf.mxu0
    %v1000 = vadd.f32 %v689, %v999
    %1001 = vmatmul.f32.gmra.mxu0 %v371
    %v1002 = vpop.f32.mrf.mxu0
    %v1003 = vadd.f32 %v692, %v1002
    %1004 = vmatmul.f32.gmra.mxu0 %v374
    %v1005 = vpop.f32.mrf.mxu0
    %v1006 = vadd.f32 %v695, %v1005
    %1007 = vmatmul.f32.gmra.mxu0 %v377
    %v1008 = vpop.f32.mrf.mxu0
    %v1009 = vadd.f32 %v698, %v1008
    %1010 = vmatmul.f32.gmra.mxu0 %v380
    %v1011 = vpop.f32.mrf.mxu0
    %v1012 = vadd.f32 %v701, %v1011
    %1013 = vmatmul.f32.gmra.mxu0 %v383
    %v1014 = vpop.f32.mrf.mxu0
    %v1015 = vadd.f32 %v704, %v1014
    %1016 = vmatmul.f32.gmra.mxu0 %v386
    %v1017 = vpop.f32.mrf.mxu0
    %v1018 = vadd.f32 %v707, %v1017
    %1019 = vmatmul.f32.gmra.mxu0 %v389
    %v1020 = vpop.f32.mrf.mxu0
    %v1021 = vadd.f32 %v710, %v1020
    %1022 = vmatmul.f32.gmra.mxu0 %v392
    %v1023 = vpop.f32.mrf.mxu0
    %v1024 = vadd.f32 %v713, %v1023
    %1025 = vmatmul.f32.gmra.mxu0 %v395
    %v1026 = vpop.f32.mrf.mxu0
    %v1027 = vadd.f32 %v716, %v1026
    %1028 = vmatmul.f32.gmra.mxu0 %v398
    %v1029 = vpop.f32.mrf.mxu0
    %v1030 = vadd.f32 %v719, %v1029
    %1031 = vmatmul.f32.gmra.mxu0 %v401
    %v1032 = vpop.f32.mrf.mxu0
    %v1033 = vadd.f32 %v722, %v1032
    %1034 = vmatmul.f32.gmra.mxu0 %v404
    %v1035 = vpop.f32.mrf.mxu0
    %v1036 = vadd.f32 %v725, %v1035
    %1037 = vmatmul.f32.gmra.mxu0 %v407
    %v1038 = vpop.f32.mrf.mxu0
    %v1039 = vadd.f32 %v728, %v1038
    %1040 = vmatmul.f32.gmra.mxu0 %v410
    %v1041 = vpop.f32.mrf.mxu0
    %v1042 = vadd.f32 %v731, %v1041
    %1043 = vmatmul.f32.gmra.mxu0 %v413
    %v1044 = vpop.f32.mrf.mxu0
    %v1045 = vadd.f32 %v734, %v1044
    %1046 = vmatmul.f32.gmra.mxu0 %v416
    %v1047 = vpop.f32.mrf.mxu0
    %v1048 = vadd.f32 %v737, %v1047
    %1049 = vmatmul.f32.gmra.mxu0 %v419
    %v1050 = vpop.f32.mrf.mxu0
    %v1051 = vadd.f32 %v740, %v1050
    %1052 = vmatmul.f32.gmra.mxu0 %v422
    %v1053 = vpop.f32.mrf.mxu0
    %v1054 = vadd.f32 %v743, %v1053
    %1055 = vdwg.mxu0
    %s1056 = scalar_lea.vmem %s1, 8
    %v1057 = vld [vmem:[%s1056] sm:$0xf]
    %v1059 = vsel %vm436, %v1057, 0
    %1061 = vmatpush.msra.mxu0 0.0
    %1062 = vmatpush.msra.mxu0 0.0
    %1063 = vmatpush.msra.mxu0 0.0
    %1064 = vmatpush.msra.mxu0 0.0
    %1065 = vmatpush.msra.mxu0 0.0
    %1066 = vmatpush.msra.mxu0 0.0
    %1067 = vmatpush.msra.mxu0 0.0
    %1068 = vmatpush.msra.mxu0 0.0
    %1069 = vmatpush.msra.mxu0 0.0
    %1070 = vmatpush.msra.mxu0 0.0
    %1071 = vmatpush.msra.mxu0 0.0
    %1072 = vmatpush.msra.mxu0 0.0
    %1073 = vmatpush.msra.mxu0 0.0
    %1074 = vmatpush.msra.mxu0 0.0
    %1075 = vmatpush.msra.mxu0 0.0
    %1076 = vmatpush.msra.mxu0 %v1059
    %1077 = vmatmul.f32.gmra.mxu0 %v161
    %v1078 = vpop.f32.mrf.mxu0
    %v1079 = vadd.f32 0.0, %v1078
    %1080 = vmatmul.f32.gmra.mxu0 %v164
    %v1081 = vpop.f32.mrf.mxu0
    %v1082 = vadd.f32 0.0, %v1081
    %1083 = vmatmul.f32.gmra.mxu0 %v167
    %v1084 = vpop.f32.mrf.mxu0
    %v1085 = vadd.f32 0.0, %v1084
    %1086 = vmatmul.f32.gmra.mxu0 %v170
    %v1087 = vpop.f32.mrf.mxu0
    %v1088 = vadd.f32 0.0, %v1087
    %1089 = vmatmul.f32.gmra.mxu0 %v173
    %v1090 = vpop.f32.mrf.mxu0
    %v1091 = vadd.f32 0.0, %v1090
    %1092 = vmatmul.f32.gmra.mxu0 %v176
    %v1093 = vpop.f32.mrf.mxu0
    %v1094 = vadd.f32 0.0, %v1093
    %1095 = vmatmul.f32.gmra.mxu0 %v179
    %v1096 = vpop.f32.mrf.mxu0
    %v1097 = vadd.f32 0.0, %v1096
    %1098 = vmatmul.f32.gmra.mxu0 %v182
    %v1099 = vpop.f32.mrf.mxu0
    %v1100 = vadd.f32 0.0, %v1099
    %1101 = vmatmul.f32.gmra.mxu0 %v185
    %v1102 = vpop.f32.mrf.mxu0
    %v1103 = vadd.f32 0.0, %v1102
    %1104 = vmatmul.f32.gmra.mxu0 %v188
    %v1105 = vpop.f32.mrf.mxu0
    %v1106 = vadd.f32 0.0, %v1105
    %1107 = vmatmul.f32.gmra.mxu0 %v191
    %v1108 = vpop.f32.mrf.mxu0
    %v1109 = vadd.f32 0.0, %v1108
    %1110 = vmatmul.f32.gmra.mxu0 %v194
    %v1111 = vpop.f32.mrf.mxu0
    %v1112 = vadd.f32 0.0, %v1111
    %1113 = vmatmul.f32.gmra.mxu0 %v197
    %v1114 = vpop.f32.mrf.mxu0
    %v1115 = vadd.f32 0.0, %v1114
    %1116 = vmatmul.f32.gmra.mxu0 %v200
    %v1117 = vpop.f32.mrf.mxu0
    %v1118 = vadd.f32 0.0, %v1117
    %1119 = vmatmul.f32.gmra.mxu0 %v203
    %v1120 = vpop.f32.mrf.mxu0
    %v1121 = vadd.f32 0.0, %v1120
    %1122 = vmatmul.f32.gmra.mxu0 %v206
    %v1123 = vpop.f32.mrf.mxu0
    %v1124 = vadd.f32 0.0, %v1123
    %1125 = vmatmul.f32.gmra.mxu0 %v209
    %v1126 = vpop.f32.mrf.mxu0
    %v1127 = vadd.f32 0.0, %v1126
    %1128 = vmatmul.f32.gmra.mxu0 %v212
    %v1129 = vpop.f32.mrf.mxu0
    %v1130 = vadd.f32 0.0, %v1129
    %1131 = vmatmul.f32.gmra.mxu0 %v215
    %v1132 = vpop.f32.mrf.mxu0
    %v1133 = vadd.f32 0.0, %v1132
    %1134 = vmatmul.f32.gmra.mxu0 %v218
    %v1135 = vpop.f32.mrf.mxu0
    %v1136 = vadd.f32 0.0, %v1135
    %1137 = vmatmul.f32.gmra.mxu0 %v221
    %v1138 = vpop.f32.mrf.mxu0
    %v1139 = vadd.f32 0.0, %v1138
    %1140 = vmatmul.f32.gmra.mxu0 %v224
    %v1141 = vpop.f32.mrf.mxu0
    %v1142 = vadd.f32 0.0, %v1141
    %1143 = vmatmul.f32.gmra.mxu0 %v227
    %v1144 = vpop.f32.mrf.mxu0
    %v1145 = vadd.f32 0.0, %v1144
    %1146 = vmatmul.f32.gmra.mxu0 %v230
    %v1147 = vpop.f32.mrf.mxu0
    %v1148 = vadd.f32 0.0, %v1147
    %1149 = vmatmul.f32.gmra.mxu0 %v233
    %v1150 = vpop.f32.mrf.mxu0
    %v1151 = vadd.f32 0.0, %v1150
    %1152 = vmatmul.f32.gmra.mxu0 %v236
    %v1153 = vpop.f32.mrf.mxu0
    %v1154 = vadd.f32 0.0, %v1153
    %1155 = vmatmul.f32.gmra.mxu0 %v239
    %v1156 = vpop.f32.mrf.mxu0
    %v1157 = vadd.f32 0.0, %v1156
    %1158 = vmatmul.f32.gmra.mxu0 %v242
    %v1159 = vpop.f32.mrf.mxu0
    %v1160 = vadd.f32 0.0, %v1159
    %1161 = vmatmul.f32.gmra.mxu0 %v245
    %v1162 = vpop.f32.mrf.mxu0
    %v1163 = vadd.f32 0.0, %v1162
    %1164 = vmatmul.f32.gmra.mxu0 %v248
    %v1165 = vpop.f32.mrf.mxu0
    %v1166 = vadd.f32 0.0, %v1165
    %1167 = vmatmul.f32.gmra.mxu0 %v251
    %v1168 = vpop.f32.mrf.mxu0
    %v1169 = vadd.f32 0.0, %v1168
    %1170 = vmatmul.f32.gmra.mxu0 %v254
    %v1171 = vpop.f32.mrf.mxu0
    %v1172 = vadd.f32 0.0, %v1171
    %1173 = vmatmul.f32.gmra.mxu0 %v257
    %v1174 = vpop.f32.mrf.mxu0
    %v1175 = vadd.f32 0.0, %v1174
    %1176 = vmatmul.f32.gmra.mxu0 %v260
    %v1177 = vpop.f32.mrf.mxu0
    %v1178 = vadd.f32 0.0, %v1177
    %1179 = vmatmul.f32.gmra.mxu0 %v263
    %v1180 = vpop.f32.mrf.mxu0
    %v1181 = vadd.f32 0.0, %v1180
    %1182 = vmatmul.f32.gmra.mxu0 %v266
    %v1183 = vpop.f32.mrf.mxu0
    %v1184 = vadd.f32 0.0, %v1183
    %1185 = vmatmul.f32.gmra.mxu0 %v269
    %v1186 = vpop.f32.mrf.mxu0
    %v1187 = vadd.f32 0.0, %v1186
    %1188 = vmatmul.f32.gmra.mxu0 %v272
    %v1189 = vpop.f32.mrf.mxu0
    %v1190 = vadd.f32 0.0, %v1189
    %1191 = vmatmul.f32.gmra.mxu0 %v275
    %v1192 = vpop.f32.mrf.mxu0
    %v1193 = vadd.f32 0.0, %v1192
    %1194 = vmatmul.f32.gmra.mxu0 %v278
    %v1195 = vpop.f32.mrf.mxu0
    %v1196 = vadd.f32 0.0, %v1195
    %1197 = vmatmul.f32.gmra.mxu0 %v281
    %v1198 = vpop.f32.mrf.mxu0
    %v1199 = vadd.f32 0.0, %v1198
    %1200 = vmatmul.f32.gmra.mxu0 %v284
    %v1201 = vpop.f32.mrf.mxu0
    %v1202 = vadd.f32 0.0, %v1201
    %1203 = vmatmul.f32.gmra.mxu0 %v287
    %v1204 = vpop.f32.mrf.mxu0
    %v1205 = vadd.f32 0.0, %v1204
    %1206 = vmatmul.f32.gmra.mxu0 %v290
    %v1207 = vpop.f32.mrf.mxu0
    %v1208 = vadd.f32 0.0, %v1207
    %1209 = vmatmul.f32.gmra.mxu0 %v293
    %v1210 = vpop.f32.mrf.mxu0
    %v1211 = vadd.f32 0.0, %v1210
    %1212 = vmatmul.f32.gmra.mxu0 %v296
    %v1213 = vpop.f32.mrf.mxu0
    %v1214 = vadd.f32 0.0, %v1213
    %1215 = vmatmul.f32.gmra.mxu0 %v299
    %v1216 = vpop.f32.mrf.mxu0
    %v1217 = vadd.f32 0.0, %v1216
    %1218 = vmatmul.f32.gmra.mxu0 %v302
    %v1219 = vpop.f32.mrf.mxu0
    %v1220 = vadd.f32 0.0, %v1219
    %1221 = vmatmul.f32.gmra.mxu0 %v305
    %v1222 = vpop.f32.mrf.mxu0
    %v1223 = vadd.f32 0.0, %v1222
    %1224 = vmatmul.f32.gmra.mxu0 %v308
    %v1225 = vpop.f32.mrf.mxu0
    %v1226 = vadd.f32 0.0, %v1225
    %1227 = vmatmul.f32.gmra.mxu0 %v311
    %v1228 = vpop.f32.mrf.mxu0
    %v1229 = vadd.f32 0.0, %v1228
    %1230 = vmatmul.f32.gmra.mxu0 %v314
    %v1231 = vpop.f32.mrf.mxu0
    %v1232 = vadd.f32 0.0, %v1231
    %1233 = vmatmul.f32.gmra.mxu0 %v317
    %v1234 = vpop.f32.mrf.mxu0
    %v1235 = vadd.f32 0.0, %v1234
    %1236 = vmatmul.f32.gmra.mxu0 %v320
    %v1237 = vpop.f32.mrf.mxu0
    %v1238 = vadd.f32 0.0, %v1237
    %1239 = vmatmul.f32.gmra.mxu0 %v323
    %v1240 = vpop.f32.mrf.mxu0
    %v1241 = vadd.f32 0.0, %v1240
    %1242 = vmatmul.f32.gmra.mxu0 %v326
    %v1243 = vpop.f32.mrf.mxu0
    %v1244 = vadd.f32 0.0, %v1243
    %1245 = vmatmul.f32.gmra.mxu0 %v329
    %v1246 = vpop.f32.mrf.mxu0
    %v1247 = vadd.f32 0.0, %v1246
    %1248 = vmatmul.f32.gmra.mxu0 %v332
    %v1249 = vpop.f32.mrf.mxu0
    %v1250 = vadd.f32 0.0, %v1249
    %1251 = vmatmul.f32.gmra.mxu0 %v335
    %v1252 = vpop.f32.mrf.mxu0
    %v1253 = vadd.f32 0.0, %v1252
    %1254 = vmatmul.f32.gmra.mxu0 %v338
    %v1255 = vpop.f32.mrf.mxu0
    %v1256 = vadd.f32 0.0, %v1255
    %1257 = vmatmul.f32.gmra.mxu0 %v341
    %v1258 = vpop.f32.mrf.mxu0
    %v1259 = vadd.f32 0.0, %v1258
    %1260 = vmatmul.f32.gmra.mxu0 %v344
    %v1261 = vpop.f32.mrf.mxu0
    %v1262 = vadd.f32 0.0, %v1261
    %1263 = vmatmul.f32.gmra.mxu0 %v347
    %v1264 = vpop.f32.mrf.mxu0
    %v1265 = vadd.f32 0.0, %v1264
    %1266 = vmatmul.f32.gmra.mxu0 %v350
    %v1267 = vpop.f32.mrf.mxu0
    %v1268 = vadd.f32 0.0, %v1267
    %1269 = vmatmul.f32.gmra.mxu0 %v353
    %v1270 = vpop.f32.mrf.mxu0
    %v1271 = vadd.f32 0.0, %v1270
    %1272 = vmatmul.f32.gmra.mxu0 %v356
    %v1273 = vpop.f32.mrf.mxu0
    %v1274 = vadd.f32 0.0, %v1273
    %1275 = vmatmul.f32.gmra.mxu0 %v359
    %v1276 = vpop.f32.mrf.mxu0
    %v1277 = vadd.f32 0.0, %v1276
    %1278 = vmatmul.f32.gmra.mxu0 %v362
    %v1279 = vpop.f32.mrf.mxu0
    %v1280 = vadd.f32 0.0, %v1279
    %1281 = vmatmul.f32.gmra.mxu0 %v365
    %v1282 = vpop.f32.mrf.mxu0
    %v1283 = vadd.f32 0.0, %v1282
    %1284 = vmatmul.f32.gmra.mxu0 %v368
    %v1285 = vpop.f32.mrf.mxu0
    %v1286 = vadd.f32 0.0, %v1285
    %1287 = vmatmul.f32.gmra.mxu0 %v371
    %v1288 = vpop.f32.mrf.mxu0
    %v1289 = vadd.f32 0.0, %v1288
    %1290 = vmatmul.f32.gmra.mxu0 %v374
    %v1291 = vpop.f32.mrf.mxu0
    %v1292 = vadd.f32 0.0, %v1291
    %1293 = vmatmul.f32.gmra.mxu0 %v377
    %v1294 = vpop.f32.mrf.mxu0
    %v1295 = vadd.f32 0.0, %v1294
    %1296 = vmatmul.f32.gmra.mxu0 %v380
    %v1297 = vpop.f32.mrf.mxu0
    %v1298 = vadd.f32 0.0, %v1297
    %1299 = vmatmul.f32.gmra.mxu0 %v383
    %v1300 = vpop.f32.mrf.mxu0
    %v1301 = vadd.f32 0.0, %v1300
    %1302 = vmatmul.f32.gmra.mxu0 %v386
    %v1303 = vpop.f32.mrf.mxu0
    %v1304 = vadd.f32 0.0, %v1303
    %1305 = vmatmul.f32.gmra.mxu0 %v389
    %v1306 = vpop.f32.mrf.mxu0
    %v1307 = vadd.f32 0.0, %v1306
    %1308 = vmatmul.f32.gmra.mxu0 %v392
    %v1309 = vpop.f32.mrf.mxu0
    %v1310 = vadd.f32 0.0, %v1309
    %1311 = vmatmul.f32.gmra.mxu0 %v395
    %v1312 = vpop.f32.mrf.mxu0
    %v1313 = vadd.f32 0.0, %v1312
    %1314 = vmatmul.f32.gmra.mxu0 %v398
    %v1315 = vpop.f32.mrf.mxu0
    %v1316 = vadd.f32 0.0, %v1315
    %1317 = vmatmul.f32.gmra.mxu0 %v401
    %v1318 = vpop.f32.mrf.mxu0
    %v1319 = vadd.f32 0.0, %v1318
    %1320 = vmatmul.f32.gmra.mxu0 %v404
    %v1321 = vpop.f32.mrf.mxu0
    %v1322 = vadd.f32 0.0, %v1321
    %1323 = vmatmul.f32.gmra.mxu0 %v407
    %v1324 = vpop.f32.mrf.mxu0
    %v1325 = vadd.f32 0.0, %v1324
    %1326 = vmatmul.f32.gmra.mxu0 %v410
    %v1327 = vpop.f32.mrf.mxu0
    %v1328 = vadd.f32 0.0, %v1327
    %1329 = vmatmul.f32.gmra.mxu0 %v413
    %v1330 = vpop.f32.mrf.mxu0
    %v1331 = vadd.f32 0.0, %v1330
    %1332 = vmatmul.f32.gmra.mxu0 %v416
    %v1333 = vpop.f32.mrf.mxu0
    %v1334 = vadd.f32 0.0, %v1333
    %1335 = vmatmul.f32.gmra.mxu0 %v419
    %v1336 = vpop.f32.mrf.mxu0
    %v1337 = vadd.f32 0.0, %v1336
    %1338 = vmatmul.f32.gmra.mxu0 %v422
    %v1339 = vpop.f32.mrf.mxu0
    %v1340 = vadd.f32 0.0, %v1339
    %1341 = vmatmul.f32.gmra.mxu0 %v425
    %v1342 = vpop.f32.mrf.mxu0
    %v1343 = vadd.f32 0.0, %v1342
    %1344 = vmatmul.f32.gmra.mxu0 %v428
    %v1345 = vpop.f32.mrf.mxu0
    %v1346 = vadd.f32 0.0, %v1345
    %1347 = vmatmul.f32.gmra.mxu0 %v431
    %v1348 = vpop.f32.mrf.mxu0
    %v1349 = vadd.f32 0.0, %v1348
    %1350 = vmatmul.f32.gmra.mxu0 %v434
    %v1351 = vpop.f32.mrf.mxu0
    %v1352 = vadd.f32 0.0, %v1351
    %1353 = vmatmul.f32.gmra.mxu0 %v746
    %v1354 = vpop.f32.mrf.mxu0
    %v1355 = vadd.f32 0.0, %v1354
    %1356 = vmatmul.f32.gmra.mxu0 %v746
    %v1357 = vpop.f32.mrf.mxu0
    %v1358 = vadd.f32 0.0, %v1357
    %1359 = vmatmul.f32.gmra.mxu0 %v746
    %v1360 = vpop.f32.mrf.mxu0
    %v1361 = vadd.f32 0.0, %v1360
    %1362 = vmatmul.f32.gmra.mxu0 %v746
    %v1363 = vpop.f32.mrf.mxu0
    %v1364 = vadd.f32 0.0, %v1363
    %1365 = vdwg.mxu0
    %v1366 = vadd.f32 %v769, %v1079
    %v1367 = vadd.f32 %v772, %v1082
    %v1368 = vadd.f32 %v775, %v1085
    %v1369 = vadd.f32 %v778, %v1088
    %v1370 = vadd.f32 %v781, %v1091
    %v1371 = vadd.f32 %v784, %v1094
    %v1372 = vadd.f32 %v787, %v1097
    %v1373 = vadd.f32 %v790, %v1100
    %v1374 = vadd.f32 %v793, %v1103
    %v1375 = vadd.f32 %v796, %v1106
    %v1376 = vadd.f32 %v799, %v1109
    %v1377 = vadd.f32 %v802, %v1112
    %v1378 = vadd.f32 %v805, %v1115
    %v1379 = vadd.f32 %v808, %v1118
    %v1380 = vadd.f32 %v811, %v1121
    %v1381 = vadd.f32 %v814, %v1124
    %v1382 = vadd.f32 %v817, %v1127
    %v1383 = vadd.f32 %v820, %v1130
    %v1384 = vadd.f32 %v823, %v1133
    %v1385 = vadd.f32 %v826, %v1136
    %v1386 = vadd.f32 %v829, %v1139
    %v1387 = vadd.f32 %v832, %v1142
    %v1388 = vadd.f32 %v835, %v1145
    %v1389 = vadd.f32 %v838, %v1148
    %v1390 = vadd.f32 %v841, %v1151
    %v1391 = vadd.f32 %v844, %v1154
    %v1392 = vadd.f32 %v847, %v1157
    %v1393 = vadd.f32 %v850, %v1160
    %v1394 = vadd.f32 %v853, %v1163
    %v1395 = vadd.f32 %v856, %v1166
    %v1396 = vadd.f32 %v859, %v1169
    %v1397 = vadd.f32 %v862, %v1172
    %v1398 = vadd.f32 %v865, %v1175
    %v1399 = vadd.f32 %v868, %v1178
    %v1400 = vadd.f32 %v871, %v1181
    %v1401 = vadd.f32 %v874, %v1184
    %v1402 = vadd.f32 %v877, %v1187
    %v1403 = vadd.f32 %v880, %v1190
    %v1404 = vadd.f32 %v883, %v1193
    %v1405 = vadd.f32 %v886, %v1196
    %v1406 = vadd.f32 %v889, %v1199
    %v1407 = vadd.f32 %v892, %v1202
    %v1408 = vadd.f32 %v895, %v1205
    %v1409 = vadd.f32 %v898, %v1208
    %v1410 = vadd.f32 %v901, %v1211
    %v1411 = vadd.f32 %v904, %v1214
    %v1412 = vadd.f32 %v907, %v1217
    %v1413 = vadd.f32 %v910, %v1220
    %v1414 = vadd.f32 %v913, %v1223
    %v1415 = vadd.f32 %v916, %v1226
    %v1416 = vadd.f32 %v919, %v1229
    %v1417 = vadd.f32 %v922, %v1232
    %v1418 = vadd.f32 %v925, %v1235
    %v1419 = vadd.f32 %v928, %v1238
    %v1420 = vadd.f32 %v931, %v1241
    %v1421 = vadd.f32 %v934, %v1244
    %v1422 = vadd.f32 %v937, %v1247
    %v1423 = vadd.f32 %v940, %v1250
    %v1424 = vadd.f32 %v943, %v1253
    %v1425 = vadd.f32 %v946, %v1256
    %v1426 = vadd.f32 %v949, %v1259
    %v1427 = vadd.f32 %v952, %v1262
    %v1428 = vadd.f32 %v955, %v1265
    %v1429 = vadd.f32 %v958, %v1268
    %v1430 = vadd.f32 %v961, %v1271
    %v1431 = vadd.f32 %v964, %v1274
    %v1432 = vadd.f32 %v967, %v1277
    %v1433 = vadd.f32 %v970, %v1280
    %v1434 = vadd.f32 %v973, %v1283
    %v1435 = vadd.f32 %v976, %v1286
    %v1436 = vadd.f32 %v979, %v1289
    %v1437 = vadd.f32 %v982, %v1292
    %v1438 = vadd.f32 %v985, %v1295
    %v1439 = vadd.f32 %v988, %v1298
    %v1440 = vadd.f32 %v991, %v1301
    %v1441 = vadd.f32 %v994, %v1304
    %v1442 = vadd.f32 %v997, %v1307
    %v1443 = vadd.f32 %v1000, %v1310
    %v1444 = vadd.f32 %v1003, %v1313
    %v1445 = vadd.f32 %v1006, %v1316
    %v1446 = vadd.f32 %v1009, %v1319
    %v1447 = vadd.f32 %v1012, %v1322
    %v1448 = vadd.f32 %v1015, %v1325
    %v1449 = vadd.f32 %v1018, %v1328
    %v1450 = vadd.f32 %v1021, %v1331
    %v1451 = vadd.f32 %v1024, %v1334
    %v1452 = vadd.f32 %v1027, %v1337
    %v1453 = vadd.f32 %v1030, %v1340
    %v1454 = vadd.f32 %v1033, %v1343
    %v1455 = vadd.f32 %v1036, %v1346
    %v1456 = vadd.f32 %v1039, %v1349
    %v1457 = vadd.f32 %v1042, %v1352
    %v1458 = vadd.f32 %v1045, %v1355
    %v1459 = vadd.f32 %v1048, %v1358
    %v1460 = vadd.f32 %v1051, %v1361
    %v1461 = vadd.f32 %v1054, %v1364
    %v1462 = vld [vmem:[%s2] sm:$0x1]
    %v1464 = vperm.slane %v1462, 0
    %v1466 = vadd.f32 %v1366, %v1464
    %v1467 = vadd.f32 %v1367, %v1464
    %v1468 = vadd.f32 %v1368, %v1464
    %v1469 = vadd.f32 %v1369, %v1464
    %v1470 = vadd.f32 %v1370, %v1464
    %v1471 = vadd.f32 %v1371, %v1464
    %v1472 = vadd.f32 %v1372, %v1464
    %v1473 = vadd.f32 %v1373, %v1464
    %v1474 = vadd.f32 %v1374, %v1464
    %v1475 = vadd.f32 %v1375, %v1464
    %v1476 = vadd.f32 %v1376, %v1464
    %v1477 = vadd.f32 %v1377, %v1464
    %v1478 = vadd.f32 %v1378, %v1464
    %v1479 = vadd.f32 %v1379, %v1464
    %v1480 = vadd.f32 %v1380, %v1464
    %v1481 = vadd.f32 %v1381, %v1464
    %v1482 = vadd.f32 %v1382, %v1464
    %v1483 = vadd.f32 %v1383, %v1464
    %v1484 = vadd.f32 %v1384, %v1464
    %v1485 = vadd.f32 %v1385, %v1464
    %v1486 = vadd.f32 %v1386, %v1464
    %v1487 = vadd.f32 %v1387, %v1464
    %v1488 = vadd.f32 %v1388, %v1464
    %v1489 = vadd.f32 %v1389, %v1464
    %v1490 = vadd.f32 %v1390, %v1464
    %v1491 = vadd.f32 %v1391, %v1464
    %v1492 = vadd.f32 %v1392, %v1464
    %v1493 = vadd.f32 %v1393, %v1464
    %v1494 = vadd.f32 %v1394, %v1464
    %v1495 = vadd.f32 %v1395, %v1464
    %v1496 = vadd.f32 %v1396, %v1464
    %v1497 = vadd.f32 %v1397, %v1464
    %v1498 = vadd.f32 %v1398, %v1464
    %v1499 = vadd.f32 %v1399, %v1464
    %v1500 = vadd.f32 %v1400, %v1464
    %v1501 = vadd.f32 %v1401, %v1464
    %v1502 = vadd.f32 %v1402, %v1464
    %v1503 = vadd.f32 %v1403, %v1464
    %v1504 = vadd.f32 %v1404, %v1464
    %v1505 = vadd.f32 %v1405, %v1464
    %v1506 = vadd.f32 %v1406, %v1464
    %v1507 = vadd.f32 %v1407, %v1464
    %v1508 = vadd.f32 %v1408, %v1464
    %v1509 = vadd.f32 %v1409, %v1464
    %v1510 = vadd.f32 %v1410, %v1464
    %v1511 = vadd.f32 %v1411, %v1464
    %v1512 = vadd.f32 %v1412, %v1464
    %v1513 = vadd.f32 %v1413, %v1464
    %v1514 = vadd.f32 %v1414, %v1464
    %v1515 = vadd.f32 %v1415, %v1464
    %v1516 = vadd.f32 %v1416, %v1464
    %v1517 = vadd.f32 %v1417, %v1464
    %v1518 = vadd.f32 %v1418, %v1464
    %v1519 = vadd.f32 %v1419, %v1464
    %v1520 = vadd.f32 %v1420, %v1464
    %v1521 = vadd.f32 %v1421, %v1464
    %v1522 = vadd.f32 %v1422, %v1464
    %v1523 = vadd.f32 %v1423, %v1464
    %v1524 = vadd.f32 %v1424, %v1464
    %v1525 = vadd.f32 %v1425, %v1464
    %v1526 = vadd.f32 %v1426, %v1464
    %v1527 = vadd.f32 %v1427, %v1464
    %v1528 = vadd.f32 %v1428, %v1464
    %v1529 = vadd.f32 %v1429, %v1464
    %v1530 = vadd.f32 %v1430, %v1464
    %v1531 = vadd.f32 %v1431, %v1464
    %v1532 = vadd.f32 %v1432, %v1464
    %v1533 = vadd.f32 %v1433, %v1464
    %v1534 = vadd.f32 %v1434, %v1464
    %v1535 = vadd.f32 %v1435, %v1464
    %v1536 = vadd.f32 %v1436, %v1464
    %v1537 = vadd.f32 %v1437, %v1464
    %v1538 = vadd.f32 %v1438, %v1464
    %v1539 = vadd.f32 %v1439, %v1464
    %v1540 = vadd.f32 %v1440, %v1464
    %v1541 = vadd.f32 %v1441, %v1464
    %v1542 = vadd.f32 %v1442, %v1464
    %v1543 = vadd.f32 %v1443, %v1464
    %v1544 = vadd.f32 %v1444, %v1464
    %v1545 = vadd.f32 %v1445, %v1464
    %v1546 = vadd.f32 %v1446, %v1464
    %v1547 = vadd.f32 %v1447, %v1464
    %v1548 = vadd.f32 %v1448, %v1464
    %v1549 = vadd.f32 %v1449, %v1464
    %v1550 = vadd.f32 %v1450, %v1464
    %v1551 = vadd.f32 %v1451, %v1464
    %v1552 = vadd.f32 %v1452, %v1464
    %v1553 = vadd.f32 %v1453, %v1464
    %v1554 = vadd.f32 %v1454, %v1464
    %v1555 = vadd.f32 %v1455, %v1464
    %v1556 = vadd.f32 %v1456, %v1464
    %v1557 = vadd.f32 %v1457, %v1464
    %v1558 = vadd.f32 %v1458, %v1464
    %v1559 = vadd.f32 %v1459, %v1464
    %v1560 = vadd.f32 %v1460, %v1464
    %v1561 = vadd.f32 %v1461, %v1464
    %v1562 = vmax.f32 %v1466, 0.0
    %v1563 = vmax.f32 %v1467, 0.0
    %v1564 = vmax.f32 %v1468, 0.0
    %v1565 = vmax.f32 %v1469, 0.0
    %v1566 = vmax.f32 %v1470, 0.0
    %v1567 = vmax.f32 %v1471, 0.0
    %v1568 = vmax.f32 %v1472, 0.0
    %v1569 = vmax.f32 %v1473, 0.0
    %v1570 = vmax.f32 %v1474, 0.0
    %v1571 = vmax.f32 %v1475, 0.0
    %v1572 = vmax.f32 %v1476, 0.0
    %v1573 = vmax.f32 %v1477, 0.0
    %v1574 = vmax.f32 %v1478, 0.0
    %v1575 = vmax.f32 %v1479, 0.0
    %v1576 = vmax.f32 %v1480, 0.0
    %v1577 = vmax.f32 %v1481, 0.0
    %v1578 = vmax.f32 %v1482, 0.0
    %v1579 = vmax.f32 %v1483, 0.0
    %v1580 = vmax.f32 %v1484, 0.0
    %v1581 = vmax.f32 %v1485, 0.0
    %v1582 = vmax.f32 %v1486, 0.0
    %v1583 = vmax.f32 %v1487, 0.0
    %v1584 = vmax.f32 %v1488, 0.0
    %v1585 = vmax.f32 %v1489, 0.0
    %v1586 = vmax.f32 %v1490, 0.0
    %v1587 = vmax.f32 %v1491, 0.0
    %v1588 = vmax.f32 %v1492, 0.0
    %v1589 = vmax.f32 %v1493, 0.0
    %v1590 = vmax.f32 %v1494, 0.0
    %v1591 = vmax.f32 %v1495, 0.0
    %v1592 = vmax.f32 %v1496, 0.0
    %v1593 = vmax.f32 %v1497, 0.0
    %v1594 = vmax.f32 %v1498, 0.0
    %v1595 = vmax.f32 %v1499, 0.0
    %v1596 = vmax.f32 %v1500, 0.0
    %v1597 = vmax.f32 %v1501, 0.0
    %v1598 = vmax.f32 %v1502, 0.0
    %v1599 = vmax.f32 %v1503, 0.0
    %v1600 = vmax.f32 %v1504, 0.0
    %v1601 = vmax.f32 %v1505, 0.0
    %v1602 = vmax.f32 %v1506, 0.0
    %v1603 = vmax.f32 %v1507, 0.0
    %v1604 = vmax.f32 %v1508, 0.0
    %v1605 = vmax.f32 %v1509, 0.0
    %v1606 = vmax.f32 %v1510, 0.0
    %v1607 = vmax.f32 %v1511, 0.0
    %v1608 = vmax.f32 %v1512, 0.0
    %v1609 = vmax.f32 %v1513, 0.0
    %v1610 = vmax.f32 %v1514, 0.0
    %v1611 = vmax.f32 %v1515, 0.0
    %v1612 = vmax.f32 %v1516, 0.0
    %v1613 = vmax.f32 %v1517, 0.0
    %v1614 = vmax.f32 %v1518, 0.0
    %v1615 = vmax.f32 %v1519, 0.0
    %v1616 = vmax.f32 %v1520, 0.0
    %v1617 = vmax.f32 %v1521, 0.0
    %v1618 = vmax.f32 %v1522, 0.0
    %v1619 = vmax.f32 %v1523, 0.0
    %v1620 = vmax.f32 %v1524, 0.0
    %v1621 = vmax.f32 %v1525, 0.0
    %v1622 = vmax.f32 %v1526, 0.0
    %v1623 = vmax.f32 %v1527, 0.0
    %v1624 = vmax.f32 %v1528, 0.0
    %v1625 = vmax.f32 %v1529, 0.0
    %v1626 = vmax.f32 %v1530, 0.0
    %v1627 = vmax.f32 %v1531, 0.0
    %v1628 = vmax.f32 %v1532, 0.0
    %v1629 = vmax.f32 %v1533, 0.0
    %v1630 = vmax.f32 %v1534, 0.0
    %v1631 = vmax.f32 %v1535, 0.0
    %v1632 = vmax.f32 %v1536, 0.0
    %v1633 = vmax.f32 %v1537, 0.0
    %v1634 = vmax.f32 %v1538, 0.0
    %v1635 = vmax.f32 %v1539, 0.0
    %v1636 = vmax.f32 %v1540, 0.0
    %v1637 = vmax.f32 %v1541, 0.0
    %v1638 = vmax.f32 %v1542, 0.0
    %v1639 = vmax.f32 %v1543, 0.0
    %v1640 = vmax.f32 %v1544, 0.0
    %v1641 = vmax.f32 %v1545, 0.0
    %v1642 = vmax.f32 %v1546, 0.0
    %v1643 = vmax.f32 %v1547, 0.0
    %v1644 = vmax.f32 %v1548, 0.0
    %v1645 = vmax.f32 %v1549, 0.0
    %v1646 = vmax.f32 %v1550, 0.0
    %v1647 = vmax.f32 %v1551, 0.0
    %v1648 = vmax.f32 %v1552, 0.0
    %v1649 = vmax.f32 %v1553, 0.0
    %v1650 = vmax.f32 %v1554, 0.0
    %v1651 = vmax.f32 %v1555, 0.0
    %v1652 = vmax.f32 %v1556, 0.0
    %v1653 = vmax.f32 %v1557, 0.0
    %v1654 = vmax.f32 %v1558, 0.0
    %v1655 = vmax.f32 %v1559, 0.0
    %v1656 = vmax.f32 %v1560, 0.0
    %v1657 = vmax.f32 %v1561, 0.0
    %v1658 = vld [vmem:[%s3] sm:$0xff]
    %v1659 = vld [vmem:[%s3 + $0x8] sm:$0xff]
    %v1660 = vld [vmem:[%s3 + $0x10] sm:$0xff]
    %v1661 = vld [vmem:[%s3 + $0x18] sm:$0xff]
    %v1662 = vld [vmem:[%s3 + $0x20] sm:$0xff]
    %v1663 = vld [vmem:[%s3 + $0x28] sm:$0xff]
    %v1664 = vld [vmem:[%s3 + $0x30] sm:$0xff]
    %v1665 = vld [vmem:[%s3 + $0x38] sm:$0xff]
    %s1666 = scalar_lea.vmem %s3, 64
    %v1667 = vld [vmem:[%s1666] sm:$0xff]
    %v1668 = vld [vmem:[%s1666 + $0x8] sm:$0xff]
    %v1669 = vld [vmem:[%s1666 + $0x10] sm:$0xff]
    %v1670 = vld [vmem:[%s1666 + $0x18] sm:$0xff]
    %v1671 = vld [vmem:[%s1666 + $0x20] sm:$0xff]
    %v1672 = vld [vmem:[%s1666 + $0x28] sm:$0xff]
    %v1673 = vld [vmem:[%s1666 + $0x30] sm:$0xff]
    %v1674 = vld [vmem:[%s1666 + $0x38] sm:$0xff]
    %vm1675 = vcmask 523264
    %v1677 = vsel %vm1675, %v1562, 0
    %v1680 = vsel %vm1675, %v1563, 0
    %v1683 = vsel %vm1675, %v1564, 0
    %v1686 = vsel %vm1675, %v1565, 0
    %v1689 = vsel %vm1675, %v1566, 0
    %v1692 = vsel %vm1675, %v1567, 0
    %v1695 = vsel %vm1675, %v1568, 0
    %v1698 = vsel %vm1675, %v1569, 0
    %v1701 = vsel %vm1675, %v1570, 0
    %v1704 = vsel %vm1675, %v1571, 0
    %v1707 = vsel %vm1675, %v1572, 0
    %v1710 = vsel %vm1675, %v1573, 0
    %v1713 = vsel %vm1675, %v1574, 0
    %v1716 = vsel %vm1675, %v1575, 0
    %v1719 = vsel %vm1675, %v1576, 0
    %v1722 = vsel %vm1675, %v1577, 0
    %v1725 = vsel %vm1675, %v1578, 0
    %v1728 = vsel %vm1675, %v1579, 0
    %v1731 = vsel %vm1675, %v1580, 0
    %v1734 = vsel %vm1675, %v1581, 0
    %v1737 = vsel %vm1675, %v1582, 0
    %v1740 = vsel %vm1675, %v1583, 0
    %v1743 = vsel %vm1675, %v1584, 0
    %v1746 = vsel %vm1675, %v1585, 0
    %v1749 = vsel %vm1675, %v1586, 0
    %v1752 = vsel %vm1675, %v1587, 0
    %v1755 = vsel %vm1675, %v1588, 0
    %v1758 = vsel %vm1675, %v1589, 0
    %v1761 = vsel %vm1675, %v1590, 0
    %v1764 = vsel %vm1675, %v1591, 0
    %v1767 = vsel %vm1675, %v1592, 0
    %v1770 = vsel %vm1675, %v1593, 0
    %v1773 = vsel %vm1675, %v1594, 0
    %v1776 = vsel %vm1675, %v1595, 0
    %v1779 = vsel %vm1675, %v1596, 0
    %v1782 = vsel %vm1675, %v1597, 0
    %v1785 = vsel %vm1675, %v1598, 0
    %v1788 = vsel %vm1675, %v1599, 0
    %v1791 = vsel %vm1675, %v1600, 0
    %v1794 = vsel %vm1675, %v1601, 0
    %v1797 = vsel %vm1675, %v1602, 0
    %v1800 = vsel %vm1675, %v1603, 0
    %v1803 = vsel %vm1675, %v1604, 0
    %v1806 = vsel %vm1675, %v1605, 0
    %v1809 = vsel %vm1675, %v1606, 0
    %v1812 = vsel %vm1675, %v1607, 0
    %v1815 = vsel %vm1675, %v1608, 0
    %v1818 = vsel %vm1675, %v1609, 0
    %v1821 = vsel %vm1675, %v1610, 0
    %v1824 = vsel %vm1675, %v1611, 0
    %v1827 = vsel %vm1675, %v1612, 0
    %v1830 = vsel %vm1675, %v1613, 0
    %v1833 = vsel %vm1675, %v1614, 0
    %v1836 = vsel %vm1675, %v1615, 0
    %v1839 = vsel %vm1675, %v1616, 0
    %v1842 = vsel %vm1675, %v1617, 0
    %v1845 = vsel %vm1675, %v1618, 0
    %v1848 = vsel %vm1675, %v1619, 0
    %v1851 = vsel %vm1675, %v1620, 0
    %v1854 = vsel %vm1675, %v1621, 0
    %v1857 = vsel %vm1675, %v1622, 0
    %v1860 = vsel %vm1675, %v1623, 0
    %v1863 = vsel %vm1675, %v1624, 0
    %v1866 = vsel %vm1675, %v1625, 0
    %v1869 = vsel %vm1675, %v1626, 0
    %v1872 = vsel %vm1675, %v1627, 0
    %v1875 = vsel %vm1675, %v1628, 0
    %v1878 = vsel %vm1675, %v1629, 0
    %v1881 = vsel %vm1675, %v1630, 0
    %v1884 = vsel %vm1675, %v1631, 0
    %v1887 = vsel %vm1675, %v1632, 0
    %v1890 = vsel %vm1675, %v1633, 0
    %v1893 = vsel %vm1675, %v1634, 0
    %v1896 = vsel %vm1675, %v1635, 0
    %v1899 = vsel %vm1675, %v1636, 0
    %v1902 = vsel %vm1675, %v1637, 0
    %v1905 = vsel %vm1675, %v1638, 0
    %v1908 = vsel %vm1675, %v1639, 0
    %v1911 = vsel %vm1675, %v1640, 0
    %v1914 = vsel %vm1675, %v1641, 0
    %v1917 = vsel %vm1675, %v1642, 0
    %v1920 = vsel %vm1675, %v1643, 0
    %v1923 = vsel %vm1675, %v1644, 0
    %v1926 = vsel %vm1675, %v1645, 0
    %v1929 = vsel %vm1675, %v1646, 0
    %v1932 = vsel %vm1675, %v1647, 0
    %v1935 = vsel %vm1675, %v1648, 0
    %v1938 = vsel %vm1675, %v1649, 0
    %v1941 = vsel %vm1675, %v1650, 0
    %v1944 = vsel %vm1675, %v1651, 0
    %v1947 = vsel %vm1675, %v1652, 0
    %v1950 = vsel %vm1675, %v1653, 0
    %v1953 = vsel %vm1675, %v1654, 0
    %v1956 = vsel %vm1675, %v1655, 0
    %v1959 = vsel %vm1675, %v1656, 0
    %v1962 = vsel %vm1675, %v1657, 0
    %1964 = vmatpush.msra.mxu0 0.0
    %1965 = vmatpush.msra.mxu0 0.0
    %1966 = vmatpush.msra.mxu0 0.0
    %1967 = vmatpush.msra.mxu0 0.0
    %1968 = vmatpush.msra.mxu0 0.0
    %1969 = vmatpush.msra.mxu0 0.0
    %1970 = vmatpush.msra.mxu0 0.0
    %1971 = vmatpush.msra.mxu0 0.0
    %1972 = vmatpush.msra.mxu0 %v1674
    %1973 = vmatpush.msra.mxu0 %v1673
    %1974 = vmatpush.msra.mxu0 %v1672
    %1975 = vmatpush.msra.mxu0 %v1671
    %1976 = vmatpush.msra.mxu0 %v1670
    %1977 = vmatpush.msra.mxu0 %v1669
    %1978 = vmatpush.msra.mxu0 %v1668
    %1979 = vmatpush.msra.mxu0 %v1667
    %1980 = vmatmul.f32.gmra.mxu0 %v1677
    %v1981 = vpop.f32.mrf.mxu0
    %v1982 = vadd.f32 0.0, %v1981
    %1983 = vmatmul.f32.gmra.mxu0 %v1680
    %v1984 = vpop.f32.mrf.mxu0
    %v1985 = vadd.f32 0.0, %v1984
    %1986 = vmatmul.f32.gmra.mxu0 %v1683
    %v1987 = vpop.f32.mrf.mxu0
    %v1988 = vadd.f32 0.0, %v1987
    %1989 = vmatmul.f32.gmra.mxu0 %v1686
    %v1990 = vpop.f32.mrf.mxu0
    %v1991 = vadd.f32 0.0, %v1990
    %1992 = vmatmul.f32.gmra.mxu0 %v1689
    %v1993 = vpop.f32.mrf.mxu0
    %v1994 = vadd.f32 0.0, %v1993
    %1995 = vmatmul.f32.gmra.mxu0 %v1692
    %v1996 = vpop.f32.mrf.mxu0
    %v1997 = vadd.f32 0.0, %v1996
    %1998 = vmatmul.f32.gmra.mxu0 %v1695
    %v1999 = vpop.f32.mrf.mxu0
    %v2000 = vadd.f32 0.0, %v1999
    %2001 = vmatmul.f32.gmra.mxu0 %v1698
    %v2002 = vpop.f32.mrf.mxu0
    %v2003 = vadd.f32 0.0, %v2002
    %2004 = vmatmul.f32.gmra.mxu0 %v1701
    %v2005 = vpop.f32.mrf.mxu0
    %v2006 = vadd.f32 0.0, %v2005
    %2007 = vmatmul.f32.gmra.mxu0 %v1704
    %v2008 = vpop.f32.mrf.mxu0
    %v2009 = vadd.f32 0.0, %v2008
    %2010 = vmatmul.f32.gmra.mxu0 %v1707
    %v2011 = vpop.f32.mrf.mxu0
    %v2012 = vadd.f32 0.0, %v2011
    %2013 = vmatmul.f32.gmra.mxu0 %v1710
    %v2014 = vpop.f32.mrf.mxu0
    %v2015 = vadd.f32 0.0, %v2014
    %2016 = vmatmul.f32.gmra.mxu0 %v1713
    %v2017 = vpop.f32.mrf.mxu0
    %v2018 = vadd.f32 0.0, %v2017
    %2019 = vmatmul.f32.gmra.mxu0 %v1716
    %v2020 = vpop.f32.mrf.mxu0
    %v2021 = vadd.f32 0.0, %v2020
    %2022 = vmatmul.f32.gmra.mxu0 %v1719
    %v2023 = vpop.f32.mrf.mxu0
    %v2024 = vadd.f32 0.0, %v2023
    %2025 = vmatmul.f32.gmra.mxu0 %v1722
    %v2026 = vpop.f32.mrf.mxu0
    %v2027 = vadd.f32 0.0, %v2026
    %2028 = vmatmul.f32.gmra.mxu0 %v1725
    %v2029 = vpop.f32.mrf.mxu0
    %v2030 = vadd.f32 0.0, %v2029
    %2031 = vmatmul.f32.gmra.mxu0 %v1728
    %v2032 = vpop.f32.mrf.mxu0
    %v2033 = vadd.f32 0.0, %v2032
    %2034 = vmatmul.f32.gmra.mxu0 %v1731
    %v2035 = vpop.f32.mrf.mxu0
    %v2036 = vadd.f32 0.0, %v2035
    %2037 = vmatmul.f32.gmra.mxu0 %v1734
    %v2038 = vpop.f32.mrf.mxu0
    %v2039 = vadd.f32 0.0, %v2038
    %2040 = vmatmul.f32.gmra.mxu0 %v1737
    %v2041 = vpop.f32.mrf.mxu0
    %v2042 = vadd.f32 0.0, %v2041
    %2043 = vmatmul.f32.gmra.mxu0 %v1740
    %v2044 = vpop.f32.mrf.mxu0
    %v2045 = vadd.f32 0.0, %v2044
    %2046 = vmatmul.f32.gmra.mxu0 %v1743
    %v2047 = vpop.f32.mrf.mxu0
    %v2048 = vadd.f32 0.0, %v2047
    %2049 = vmatmul.f32.gmra.mxu0 %v1746
    %v2050 = vpop.f32.mrf.mxu0
    %v2051 = vadd.f32 0.0, %v2050
    %2052 = vmatmul.f32.gmra.mxu0 %v1749
    %v2053 = vpop.f32.mrf.mxu0
    %v2054 = vadd.f32 0.0, %v2053
    %2055 = vmatmul.f32.gmra.mxu0 %v1752
    %v2056 = vpop.f32.mrf.mxu0
    %v2057 = vadd.f32 0.0, %v2056
    %2058 = vmatmul.f32.gmra.mxu0 %v1755
    %v2059 = vpop.f32.mrf.mxu0
    %v2060 = vadd.f32 0.0, %v2059
    %2061 = vmatmul.f32.gmra.mxu0 %v1758
    %v2062 = vpop.f32.mrf.mxu0
    %v2063 = vadd.f32 0.0, %v2062
    %2064 = vmatmul.f32.gmra.mxu0 %v1761
    %v2065 = vpop.f32.mrf.mxu0
    %v2066 = vadd.f32 0.0, %v2065
    %2067 = vmatmul.f32.gmra.mxu0 %v1764
    %v2068 = vpop.f32.mrf.mxu0
    %v2069 = vadd.f32 0.0, %v2068
    %2070 = vmatmul.f32.gmra.mxu0 %v1767
    %v2071 = vpop.f32.mrf.mxu0
    %v2072 = vadd.f32 0.0, %v2071
    %2073 = vmatmul.f32.gmra.mxu0 %v1770
    %v2074 = vpop.f32.mrf.mxu0
    %v2075 = vadd.f32 0.0, %v2074
    %2076 = vmatmul.f32.gmra.mxu0 %v1773
    %v2077 = vpop.f32.mrf.mxu0
    %v2078 = vadd.f32 0.0, %v2077
    %2079 = vmatmul.f32.gmra.mxu0 %v1776
    %v2080 = vpop.f32.mrf.mxu0
    %v2081 = vadd.f32 0.0, %v2080
    %2082 = vmatmul.f32.gmra.mxu0 %v1779
    %v2083 = vpop.f32.mrf.mxu0
    %v2084 = vadd.f32 0.0, %v2083
    %2085 = vmatmul.f32.gmra.mxu0 %v1782
    %v2086 = vpop.f32.mrf.mxu0
    %v2087 = vadd.f32 0.0, %v2086
    %2088 = vmatmul.f32.gmra.mxu0 %v1785
    %v2089 = vpop.f32.mrf.mxu0
    %v2090 = vadd.f32 0.0, %v2089
    %2091 = vmatmul.f32.gmra.mxu0 %v1788
    %v2092 = vpop.f32.mrf.mxu0
    %v2093 = vadd.f32 0.0, %v2092
    %2094 = vmatmul.f32.gmra.mxu0 %v1791
    %v2095 = vpop.f32.mrf.mxu0
    %v2096 = vadd.f32 0.0, %v2095
    %2097 = vmatmul.f32.gmra.mxu0 %v1794
    %v2098 = vpop.f32.mrf.mxu0
    %v2099 = vadd.f32 0.0, %v2098
    %2100 = vmatmul.f32.gmra.mxu0 %v1797
    %v2101 = vpop.f32.mrf.mxu0
    %v2102 = vadd.f32 0.0, %v2101
    %2103 = vmatmul.f32.gmra.mxu0 %v1800
    %v2104 = vpop.f32.mrf.mxu0
    %v2105 = vadd.f32 0.0, %v2104
    %2106 = vmatmul.f32.gmra.mxu0 %v1803
    %v2107 = vpop.f32.mrf.mxu0
    %v2108 = vadd.f32 0.0, %v2107
    %2109 = vmatmul.f32.gmra.mxu0 %v1806
    %v2110 = vpop.f32.mrf.mxu0
    %v2111 = vadd.f32 0.0, %v2110
    %2112 = vmatmul.f32.gmra.mxu0 %v1809
    %v2113 = vpop.f32.mrf.mxu0
    %v2114 = vadd.f32 0.0, %v2113
    %2115 = vmatmul.f32.gmra.mxu0 %v1812
    %v2116 = vpop.f32.mrf.mxu0
    %v2117 = vadd.f32 0.0, %v2116
    %2118 = vmatmul.f32.gmra.mxu0 %v1815
    %v2119 = vpop.f32.mrf.mxu0
    %v2120 = vadd.f32 0.0, %v2119
    %2121 = vmatmul.f32.gmra.mxu0 %v1818
    %v2122 = vpop.f32.mrf.mxu0
    %v2123 = vadd.f32 0.0, %v2122
    %2124 = vmatmul.f32.gmra.mxu0 %v1821
    %v2125 = vpop.f32.mrf.mxu0
    %v2126 = vadd.f32 0.0, %v2125
    %2127 = vmatmul.f32.gmra.mxu0 %v1824
    %v2128 = vpop.f32.mrf.mxu0
    %v2129 = vadd.f32 0.0, %v2128
    %2130 = vmatmul.f32.gmra.mxu0 %v1827
    %v2131 = vpop.f32.mrf.mxu0
    %v2132 = vadd.f32 0.0, %v2131
    %2133 = vmatmul.f32.gmra.mxu0 %v1830
    %v2134 = vpop.f32.mrf.mxu0
    %v2135 = vadd.f32 0.0, %v2134
    %2136 = vmatmul.f32.gmra.mxu0 %v1833
    %v2137 = vpop.f32.mrf.mxu0
    %v2138 = vadd.f32 0.0, %v2137
    %2139 = vmatmul.f32.gmra.mxu0 %v1836
    %v2140 = vpop.f32.mrf.mxu0
    %v2141 = vadd.f32 0.0, %v2140
    %2142 = vmatmul.f32.gmra.mxu0 %v1839
    %v2143 = vpop.f32.mrf.mxu0
    %v2144 = vadd.f32 0.0, %v2143
    %2145 = vmatmul.f32.gmra.mxu0 %v1842
    %v2146 = vpop.f32.mrf.mxu0
    %v2147 = vadd.f32 0.0, %v2146
    %2148 = vmatmul.f32.gmra.mxu0 %v1845
    %v2149 = vpop.f32.mrf.mxu0
    %v2150 = vadd.f32 0.0, %v2149
    %2151 = vmatmul.f32.gmra.mxu0 %v1848
    %v2152 = vpop.f32.mrf.mxu0
    %v2153 = vadd.f32 0.0, %v2152
    %2154 = vmatmul.f32.gmra.mxu0 %v1851
    %v2155 = vpop.f32.mrf.mxu0
    %v2156 = vadd.f32 0.0, %v2155
    %2157 = vmatmul.f32.gmra.mxu0 %v1854
    %v2158 = vpop.f32.mrf.mxu0
    %v2159 = vadd.f32 0.0, %v2158
    %2160 = vmatmul.f32.gmra.mxu0 %v1857
    %v2161 = vpop.f32.mrf.mxu0
    %v2162 = vadd.f32 0.0, %v2161
    %2163 = vmatmul.f32.gmra.mxu0 %v1860
    %v2164 = vpop.f32.mrf.mxu0
    %v2165 = vadd.f32 0.0, %v2164
    %2166 = vmatmul.f32.gmra.mxu0 %v1863
    %v2167 = vpop.f32.mrf.mxu0
    %v2168 = vadd.f32 0.0, %v2167
    %2169 = vmatmul.f32.gmra.mxu0 %v1866
    %v2170 = vpop.f32.mrf.mxu0
    %v2171 = vadd.f32 0.0, %v2170
    %2172 = vmatmul.f32.gmra.mxu0 %v1869
    %v2173 = vpop.f32.mrf.mxu0
    %v2174 = vadd.f32 0.0, %v2173
    %2175 = vmatmul.f32.gmra.mxu0 %v1872
    %v2176 = vpop.f32.mrf.mxu0
    %v2177 = vadd.f32 0.0, %v2176
    %2178 = vmatmul.f32.gmra.mxu0 %v1875
    %v2179 = vpop.f32.mrf.mxu0
    %v2180 = vadd.f32 0.0, %v2179
    %2181 = vmatmul.f32.gmra.mxu0 %v1878
    %v2182 = vpop.f32.mrf.mxu0
    %v2183 = vadd.f32 0.0, %v2182
    %2184 = vmatmul.f32.gmra.mxu0 %v1881
    %v2185 = vpop.f32.mrf.mxu0
    %v2186 = vadd.f32 0.0, %v2185
    %2187 = vmatmul.f32.gmra.mxu0 %v1884
    %v2188 = vpop.f32.mrf.mxu0
    %v2189 = vadd.f32 0.0, %v2188
    %2190 = vmatmul.f32.gmra.mxu0 %v1887
    %v2191 = vpop.f32.mrf.mxu0
    %v2192 = vadd.f32 0.0, %v2191
    %2193 = vmatmul.f32.gmra.mxu0 %v1890
    %v2194 = vpop.f32.mrf.mxu0
    %v2195 = vadd.f32 0.0, %v2194
    %2196 = vmatmul.f32.gmra.mxu0 %v1893
    %v2197 = vpop.f32.mrf.mxu0
    %v2198 = vadd.f32 0.0, %v2197
    %2199 = vmatmul.f32.gmra.mxu0 %v1896
    %v2200 = vpop.f32.mrf.mxu0
    %v2201 = vadd.f32 0.0, %v2200
    %2202 = vmatmul.f32.gmra.mxu0 %v1899
    %v2203 = vpop.f32.mrf.mxu0
    %v2204 = vadd.f32 0.0, %v2203
    %2205 = vmatmul.f32.gmra.mxu0 %v1902
    %v2206 = vpop.f32.mrf.mxu0
    %v2207 = vadd.f32 0.0, %v2206
    %2208 = vmatmul.f32.gmra.mxu0 %v1905
    %v2209 = vpop.f32.mrf.mxu0
    %v2210 = vadd.f32 0.0, %v2209
    %2211 = vmatmul.f32.gmra.mxu0 %v1908
    %v2212 = vpop.f32.mrf.mxu0
    %v2213 = vadd.f32 0.0, %v2212
    %2214 = vmatmul.f32.gmra.mxu0 %v1911
    %v2215 = vpop.f32.mrf.mxu0
    %v2216 = vadd.f32 0.0, %v2215
    %2217 = vmatmul.f32.gmra.mxu0 %v1914
    %v2218 = vpop.f32.mrf.mxu0
    %v2219 = vadd.f32 0.0, %v2218
    %2220 = vmatmul.f32.gmra.mxu0 %v1917
    %v2221 = vpop.f32.mrf.mxu0
    %v2222 = vadd.f32 0.0, %v2221
    %2223 = vmatmul.f32.gmra.mxu0 %v1920
    %v2224 = vpop.f32.mrf.mxu0
    %v2225 = vadd.f32 0.0, %v2224
    %2226 = vmatmul.f32.gmra.mxu0 %v1923
    %v2227 = vpop.f32.mrf.mxu0
    %v2228 = vadd.f32 0.0, %v2227
    %2229 = vmatmul.f32.gmra.mxu0 %v1926
    %v2230 = vpop.f32.mrf.mxu0
    %v2231 = vadd.f32 0.0, %v2230
    %2232 = vmatmul.f32.gmra.mxu0 %v1929
    %v2233 = vpop.f32.mrf.mxu0
    %v2234 = vadd.f32 0.0, %v2233
    %2235 = vmatmul.f32.gmra.mxu0 %v1932
    %v2236 = vpop.f32.mrf.mxu0
    %v2237 = vadd.f32 0.0, %v2236
    %2238 = vmatmul.f32.gmra.mxu0 %v1935
    %v2239 = vpop.f32.mrf.mxu0
    %v2240 = vadd.f32 0.0, %v2239
    %2241 = vmatmul.f32.gmra.mxu0 %v1938
    %v2242 = vpop.f32.mrf.mxu0
    %v2243 = vadd.f32 0.0, %v2242
    %2244 = vmatmul.f32.gmra.mxu0 %v1941
    %v2245 = vpop.f32.mrf.mxu0
    %v2246 = vadd.f32 0.0, %v2245
    %2247 = vmatmul.f32.gmra.mxu0 %v1944
    %v2248 = vpop.f32.mrf.mxu0
    %v2249 = vadd.f32 0.0, %v2248
    %2250 = vmatmul.f32.gmra.mxu0 %v1947
    %v2251 = vpop.f32.mrf.mxu0
    %v2252 = vadd.f32 0.0, %v2251
    %2253 = vmatmul.f32.gmra.mxu0 %v1950
    %v2254 = vpop.f32.mrf.mxu0
    %v2255 = vadd.f32 0.0, %v2254
    %2256 = vmatmul.f32.gmra.mxu0 %v1953
    %v2257 = vpop.f32.mrf.mxu0
    %v2258 = vadd.f32 0.0, %v2257
    %2259 = vmatmul.f32.gmra.mxu0 %v1956
    %v2260 = vpop.f32.mrf.mxu0
    %v2261 = vadd.f32 0.0, %v2260
    %2262 = vmatmul.f32.gmra.mxu0 %v1959
    %v2263 = vpop.f32.mrf.mxu0
    %v2264 = vadd.f32 0.0, %v2263
    %2265 = vmatmul.f32.gmra.mxu0 %v1962
    %v2266 = vpop.f32.mrf.mxu0
    %v2267 = vadd.f32 0.0, %v2266
    %2268 = vdwg.mxu0
    %v2269 = vsel %vm1675, 0.0, 0
    %2271 = vmatpush.msra.mxu0 0.0
    %2272 = vmatpush.msra.mxu0 0.0
    %2273 = vmatpush.msra.mxu0 0.0
    %2274 = vmatpush.msra.mxu0 0.0
    %2275 = vmatpush.msra.mxu0 0.0
    %2276 = vmatpush.msra.mxu0 0.0
    %2277 = vmatpush.msra.mxu0 0.0
    %2278 = vmatpush.msra.mxu0 0.0
    %2279 = vmatpush.msra.mxu0 %v1665
    %2280 = vmatpush.msra.mxu0 %v1664
    %2281 = vmatpush.msra.mxu0 %v1663
    %2282 = vmatpush.msra.mxu0 %v1662
    %2283 = vmatpush.msra.mxu0 %v1661
    %2284 = vmatpush.msra.mxu0 %v1660
    %2285 = vmatpush.msra.mxu0 %v1659
    %2286 = vmatpush.msra.mxu0 %v1658
    %2287 = vmatmul.f32.gmra.mxu0 %v2269
    %v2288 = vpop.f32.mrf.mxu0
    %v2289 = vadd.f32 %v1982, %v2288
    %2290 = vmatmul.f32.gmra.mxu0 %v2269
    %v2291 = vpop.f32.mrf.mxu0
    %v2292 = vadd.f32 %v1985, %v2291
    %2293 = vmatmul.f32.gmra.mxu0 %v2269
    %v2294 = vpop.f32.mrf.mxu0
    %v2295 = vadd.f32 %v1988, %v2294
    %2296 = vmatmul.f32.gmra.mxu0 %v2269
    %v2297 = vpop.f32.mrf.mxu0
    %v2298 = vadd.f32 %v1991, %v2297
    %2299 = vmatmul.f32.gmra.mxu0 %v1677
    %v2300 = vpop.f32.mrf.mxu0
    %v2301 = vadd.f32 %v1994, %v2300
    %2302 = vmatmul.f32.gmra.mxu0 %v1680
    %v2303 = vpop.f32.mrf.mxu0
    %v2304 = vadd.f32 %v1997, %v2303
    %2305 = vmatmul.f32.gmra.mxu0 %v1683
    %v2306 = vpop.f32.mrf.mxu0
    %v2307 = vadd.f32 %v2000, %v2306
    %2308 = vmatmul.f32.gmra.mxu0 %v1686
    %v2309 = vpop.f32.mrf.mxu0
    %v2310 = vadd.f32 %v2003, %v2309
    %2311 = vmatmul.f32.gmra.mxu0 %v1689
    %v2312 = vpop.f32.mrf.mxu0
    %v2313 = vadd.f32 %v2006, %v2312
    %2314 = vmatmul.f32.gmra.mxu0 %v1692
    %v2315 = vpop.f32.mrf.mxu0
    %v2316 = vadd.f32 %v2009, %v2315
    %2317 = vmatmul.f32.gmra.mxu0 %v1695
    %v2318 = vpop.f32.mrf.mxu0
    %v2319 = vadd.f32 %v2012, %v2318
    %2320 = vmatmul.f32.gmra.mxu0 %v1698
    %v2321 = vpop.f32.mrf.mxu0
    %v2322 = vadd.f32 %v2015, %v2321
    %2323 = vmatmul.f32.gmra.mxu0 %v1701
    %v2324 = vpop.f32.mrf.mxu0
    %v2325 = vadd.f32 %v2018, %v2324
    %2326 = vmatmul.f32.gmra.mxu0 %v1704
    %v2327 = vpop.f32.mrf.mxu0
    %v2328 = vadd.f32 %v2021, %v2327
    %2329 = vmatmul.f32.gmra.mxu0 %v1707
    %v2330 = vpop.f32.mrf.mxu0
    %v2331 = vadd.f32 %v2024, %v2330
    %2332 = vmatmul.f32.gmra.mxu0 %v1710
    %v2333 = vpop.f32.mrf.mxu0
    %v2334 = vadd.f32 %v2027, %v2333
    %2335 = vmatmul.f32.gmra.mxu0 %v1713
    %v2336 = vpop.f32.mrf.mxu0
    %v2337 = vadd.f32 %v2030, %v2336
    %2338 = vmatmul.f32.gmra.mxu0 %v1716
    %v2339 = vpop.f32.mrf.mxu0
    %v2340 = vadd.f32 %v2033, %v2339
    %2341 = vmatmul.f32.gmra.mxu0 %v1719
    %v2342 = vpop.f32.mrf.mxu0
    %v2343 = vadd.f32 %v2036, %v2342
    %2344 = vmatmul.f32.gmra.mxu0 %v1722
    %v2345 = vpop.f32.mrf.mxu0
    %v2346 = vadd.f32 %v2039, %v2345
    %2347 = vmatmul.f32.gmra.mxu0 %v1725
    %v2348 = vpop.f32.mrf.mxu0
    %v2349 = vadd.f32 %v2042, %v2348
    %2350 = vmatmul.f32.gmra.mxu0 %v1728
    %v2351 = vpop.f32.mrf.mxu0
    %v2352 = vadd.f32 %v2045, %v2351
    %2353 = vmatmul.f32.gmra.mxu0 %v1731
    %v2354 = vpop.f32.mrf.mxu0
    %v2355 = vadd.f32 %v2048, %v2354
    %2356 = vmatmul.f32.gmra.mxu0 %v1734
    %v2357 = vpop.f32.mrf.mxu0
    %v2358 = vadd.f32 %v2051, %v2357
    %2359 = vmatmul.f32.gmra.mxu0 %v1737
    %v2360 = vpop.f32.mrf.mxu0
    %v2361 = vadd.f32 %v2054, %v2360
    %2362 = vmatmul.f32.gmra.mxu0 %v1740
    %v2363 = vpop.f32.mrf.mxu0
    %v2364 = vadd.f32 %v2057, %v2363
    %2365 = vmatmul.f32.gmra.mxu0 %v1743
    %v2366 = vpop.f32.mrf.mxu0
    %v2367 = vadd.f32 %v2060, %v2366
    %2368 = vmatmul.f32.gmra.mxu0 %v1746
    %v2369 = vpop.f32.mrf.mxu0
    %v2370 = vadd.f32 %v2063, %v2369
    %2371 = vmatmul.f32.gmra.mxu0 %v1749
    %v2372 = vpop.f32.mrf.mxu0
    %v2373 = vadd.f32 %v2066, %v2372
    %2374 = vmatmul.f32.gmra.mxu0 %v1752
    %v2375 = vpop.f32.mrf.mxu0
    %v2376 = vadd.f32 %v2069, %v2375
    %2377 = vmatmul.f32.gmra.mxu0 %v1755
    %v2378 = vpop.f32.mrf.mxu0
    %v2379 = vadd.f32 %v2072, %v2378
    %2380 = vmatmul.f32.gmra.mxu0 %v1758
    %v2381 = vpop.f32.mrf.mxu0
    %v2382 = vadd.f32 %v2075, %v2381
    %2383 = vmatmul.f32.gmra.mxu0 %v1761
    %v2384 = vpop.f32.mrf.mxu0
    %v2385 = vadd.f32 %v2078, %v2384
    %2386 = vmatmul.f32.gmra.mxu0 %v1764
    %v2387 = vpop.f32.mrf.mxu0
    %v2388 = vadd.f32 %v2081, %v2387
    %2389 = vmatmul.f32.gmra.mxu0 %v1767
    %v2390 = vpop.f32.mrf.mxu0
    %v2391 = vadd.f32 %v2084, %v2390
    %2392 = vmatmul.f32.gmra.mxu0 %v1770
    %v2393 = vpop.f32.mrf.mxu0
    %v2394 = vadd.f32 %v2087, %v2393
    %2395 = vmatmul.f32.gmra.mxu0 %v1773
    %v2396 = vpop.f32.mrf.mxu0
    %v2397 = vadd.f32 %v2090, %v2396
    %2398 = vmatmul.f32.gmra.mxu0 %v1776
    %v2399 = vpop.f32.mrf.mxu0
    %v2400 = vadd.f32 %v2093, %v2399
    %2401 = vmatmul.f32.gmra.mxu0 %v1779
    %v2402 = vpop.f32.mrf.mxu0
    %v2403 = vadd.f32 %v2096, %v2402
    %2404 = vmatmul.f32.gmra.mxu0 %v1782
    %v2405 = vpop.f32.mrf.mxu0
    %v2406 = vadd.f32 %v2099, %v2405
    %2407 = vmatmul.f32.gmra.mxu0 %v1785
    %v2408 = vpop.f32.mrf.mxu0
    %v2409 = vadd.f32 %v2102, %v2408
    %2410 = vmatmul.f32.gmra.mxu0 %v1788
    %v2411 = vpop.f32.mrf.mxu0
    %v2412 = vadd.f32 %v2105, %v2411
    %2413 = vmatmul.f32.gmra.mxu0 %v1791
    %v2414 = vpop.f32.mrf.mxu0
    %v2415 = vadd.f32 %v2108, %v2414
    %2416 = vmatmul.f32.gmra.mxu0 %v1794
    %v2417 = vpop.f32.mrf.mxu0
    %v2418 = vadd.f32 %v2111, %v2417
    %2419 = vmatmul.f32.gmra.mxu0 %v1797
    %v2420 = vpop.f32.mrf.mxu0
    %v2421 = vadd.f32 %v2114, %v2420
    %2422 = vmatmul.f32.gmra.mxu0 %v1800
    %v2423 = vpop.f32.mrf.mxu0
    %v2424 = vadd.f32 %v2117, %v2423
    %2425 = vmatmul.f32.gmra.mxu0 %v1803
    %v2426 = vpop.f32.mrf.mxu0
    %v2427 = vadd.f32 %v2120, %v2426
    %2428 = vmatmul.f32.gmra.mxu0 %v1806
    %v2429 = vpop.f32.mrf.mxu0
    %v2430 = vadd.f32 %v2123, %v2429
    %2431 = vmatmul.f32.gmra.mxu0 %v1809
    %v2432 = vpop.f32.mrf.mxu0
    %v2433 = vadd.f32 %v2126, %v2432
    %2434 = vmatmul.f32.gmra.mxu0 %v1812
    %v2435 = vpop.f32.mrf.mxu0
    %v2436 = vadd.f32 %v2129, %v2435
    %2437 = vmatmul.f32.gmra.mxu0 %v1815
    %v2438 = vpop.f32.mrf.mxu0
    %v2439 = vadd.f32 %v2132, %v2438
    %2440 = vmatmul.f32.gmra.mxu0 %v1818
    %v2441 = vpop.f32.mrf.mxu0
    %v2442 = vadd.f32 %v2135, %v2441
    %2443 = vmatmul.f32.gmra.mxu0 %v1821
    %v2444 = vpop.f32.mrf.mxu0
    %v2445 = vadd.f32 %v2138, %v2444
    %2446 = vmatmul.f32.gmra.mxu0 %v1824
    %v2447 = vpop.f32.mrf.mxu0
    %v2448 = vadd.f32 %v2141, %v2447
    %2449 = vmatmul.f32.gmra.mxu0 %v1827
    %v2450 = vpop.f32.mrf.mxu0
    %v2451 = vadd.f32 %v2144, %v2450
    %2452 = vmatmul.f32.gmra.mxu0 %v1830
    %v2453 = vpop.f32.mrf.mxu0
    %v2454 = vadd.f32 %v2147, %v2453
    %2455 = vmatmul.f32.gmra.mxu0 %v1833
    %v2456 = vpop.f32.mrf.mxu0
    %v2457 = vadd.f32 %v2150, %v2456
    %2458 = vmatmul.f32.gmra.mxu0 %v1836
    %v2459 = vpop.f32.mrf.mxu0
    %v2460 = vadd.f32 %v2153, %v2459
    %2461 = vmatmul.f32.gmra.mxu0 %v1839
    %v2462 = vpop.f32.mrf.mxu0
    %v2463 = vadd.f32 %v2156, %v2462
    %2464 = vmatmul.f32.gmra.mxu0 %v1842
    %v2465 = vpop.f32.mrf.mxu0
    %v2466 = vadd.f32 %v2159, %v2465
    %2467 = vmatmul.f32.gmra.mxu0 %v1845
    %v2468 = vpop.f32.mrf.mxu0
    %v2469 = vadd.f32 %v2162, %v2468
    %2470 = vmatmul.f32.gmra.mxu0 %v1848
    %v2471 = vpop.f32.mrf.mxu0
    %v2472 = vadd.f32 %v2165, %v2471
    %2473 = vmatmul.f32.gmra.mxu0 %v1851
    %v2474 = vpop.f32.mrf.mxu0
    %v2475 = vadd.f32 %v2168, %v2474
    %2476 = vmatmul.f32.gmra.mxu0 %v1854
    %v2477 = vpop.f32.mrf.mxu0
    %v2478 = vadd.f32 %v2171, %v2477
    %2479 = vmatmul.f32.gmra.mxu0 %v1857
    %v2480 = vpop.f32.mrf.mxu0
    %v2481 = vadd.f32 %v2174, %v2480
    %2482 = vmatmul.f32.gmra.mxu0 %v1860
    %v2483 = vpop.f32.mrf.mxu0
    %v2484 = vadd.f32 %v2177, %v2483
    %2485 = vmatmul.f32.gmra.mxu0 %v1863
    %v2486 = vpop.f32.mrf.mxu0
    %v2487 = vadd.f32 %v2180, %v2486
    %2488 = vmatmul.f32.gmra.mxu0 %v1866
    %v2489 = vpop.f32.mrf.mxu0
    %v2490 = vadd.f32 %v2183, %v2489
    %2491 = vmatmul.f32.gmra.mxu0 %v1869
    %v2492 = vpop.f32.mrf.mxu0
    %v2493 = vadd.f32 %v2186, %v2492
    %2494 = vmatmul.f32.gmra.mxu0 %v1872
    %v2495 = vpop.f32.mrf.mxu0
    %v2496 = vadd.f32 %v2189, %v2495
    %2497 = vmatmul.f32.gmra.mxu0 %v1875
    %v2498 = vpop.f32.mrf.mxu0
    %v2499 = vadd.f32 %v2192, %v2498
    %2500 = vmatmul.f32.gmra.mxu0 %v1878
    %v2501 = vpop.f32.mrf.mxu0
    %v2502 = vadd.f32 %v2195, %v2501
    %2503 = vmatmul.f32.gmra.mxu0 %v1881
    %v2504 = vpop.f32.mrf.mxu0
    %v2505 = vadd.f32 %v2198, %v2504
    %2506 = vmatmul.f32.gmra.mxu0 %v1884
    %v2507 = vpop.f32.mrf.mxu0
    %v2508 = vadd.f32 %v2201, %v2507
    %2509 = vmatmul.f32.gmra.mxu0 %v1887
    %v2510 = vpop.f32.mrf.mxu0
    %v2511 = vadd.f32 %v2204, %v2510
    %2512 = vmatmul.f32.gmra.mxu0 %v1890
    %v2513 = vpop.f32.mrf.mxu0
    %v2514 = vadd.f32 %v2207, %v2513
    %2515 = vmatmul.f32.gmra.mxu0 %v1893
    %v2516 = vpop.f32.mrf.mxu0
    %v2517 = vadd.f32 %v2210, %v2516
    %2518 = vmatmul.f32.gmra.mxu0 %v1896
    %v2519 = vpop.f32.mrf.mxu0
    %v2520 = vadd.f32 %v2213, %v2519
    %2521 = vmatmul.f32.gmra.mxu0 %v1899
    %v2522 = vpop.f32.mrf.mxu0
    %v2523 = vadd.f32 %v2216, %v2522
    %2524 = vmatmul.f32.gmra.mxu0 %v1902
    %v2525 = vpop.f32.mrf.mxu0
    %v2526 = vadd.f32 %v2219, %v2525
    %2527 = vmatmul.f32.gmra.mxu0 %v1905
    %v2528 = vpop.f32.mrf.mxu0
    %v2529 = vadd.f32 %v2222, %v2528
    %2530 = vmatmul.f32.gmra.mxu0 %v1908
    %v2531 = vpop.f32.mrf.mxu0
    %v2532 = vadd.f32 %v2225, %v2531
    %2533 = vmatmul.f32.gmra.mxu0 %v1911
    %v2534 = vpop.f32.mrf.mxu0
    %v2535 = vadd.f32 %v2228, %v2534
    %2536 = vmatmul.f32.gmra.mxu0 %v1914
    %v2537 = vpop.f32.mrf.mxu0
    %v2538 = vadd.f32 %v2231, %v2537
    %2539 = vmatmul.f32.gmra.mxu0 %v1917
    %v2540 = vpop.f32.mrf.mxu0
    %v2541 = vadd.f32 %v2234, %v2540
    %2542 = vmatmul.f32.gmra.mxu0 %v1920
    %v2543 = vpop.f32.mrf.mxu0
    %v2544 = vadd.f32 %v2237, %v2543
    %2545 = vmatmul.f32.gmra.mxu0 %v1923
    %v2546 = vpop.f32.mrf.mxu0
    %v2547 = vadd.f32 %v2240, %v2546
    %2548 = vmatmul.f32.gmra.mxu0 %v1926
    %v2549 = vpop.f32.mrf.mxu0
    %v2550 = vadd.f32 %v2243, %v2549
    %2551 = vmatmul.f32.gmra.mxu0 %v1929
    %v2552 = vpop.f32.mrf.mxu0
    %v2553 = vadd.f32 %v2246, %v2552
    %2554 = vmatmul.f32.gmra.mxu0 %v1932
    %v2555 = vpop.f32.mrf.mxu0
    %v2556 = vadd.f32 %v2249, %v2555
    %2557 = vmatmul.f32.gmra.mxu0 %v1935
    %v2558 = vpop.f32.mrf.mxu0
    %v2559 = vadd.f32 %v2252, %v2558
    %2560 = vmatmul.f32.gmra.mxu0 %v1938
    %v2561 = vpop.f32.mrf.mxu0
    %v2562 = vadd.f32 %v2255, %v2561
    %2563 = vmatmul.f32.gmra.mxu0 %v1941
    %v2564 = vpop.f32.mrf.mxu0
    %v2565 = vadd.f32 %v2258, %v2564
    %2566 = vmatmul.f32.gmra.mxu0 %v1944
    %v2567 = vpop.f32.mrf.mxu0
    %v2568 = vadd.f32 %v2261, %v2567
    %2569 = vmatmul.f32.gmra.mxu0 %v1947
    %v2570 = vpop.f32.mrf.mxu0
    %v2571 = vadd.f32 %v2264, %v2570
    %2572 = vmatmul.f32.gmra.mxu0 %v1950
    %v2573 = vpop.f32.mrf.mxu0
    %v2574 = vadd.f32 %v2267, %v2573
    %2575 = vdwg.mxu0
    %s2576 = scalar_lea.vmem %s3, 128
    %v2577 = vld [vmem:[%s2576] sm:$0xff]
    %v2578 = vld [vmem:[%s2576 + $0x8] sm:$0xff]
    %v2579 = vld [vmem:[%s2576 + $0x10] sm:$0xff]
    %v2580 = vld [vmem:[%s2576 + $0x18] sm:$0xff]
    %v2581 = vld [vmem:[%s2576 + $0x20] sm:$0xff]
    %v2582 = vld [vmem:[%s2576 + $0x28] sm:$0xff]
    %v2583 = vld [vmem:[%s2576 + $0x30] sm:$0xff]
    %v2584 = vld [vmem:[%s2576 + $0x38] sm:$0xff]
    %2585 = vmatpush.msra.mxu0 0.0
    %2586 = vmatpush.msra.mxu0 0.0
    %2587 = vmatpush.msra.mxu0 0.0
    %2588 = vmatpush.msra.mxu0 0.0
    %2589 = vmatpush.msra.mxu0 0.0
    %2590 = vmatpush.msra.mxu0 0.0
    %2591 = vmatpush.msra.mxu0 0.0
    %2592 = vmatpush.msra.mxu0 0.0
    %2593 = vmatpush.msra.mxu0 %v2584
    %2594 = vmatpush.msra.mxu0 %v2583
    %2595 = vmatpush.msra.mxu0 %v2582
    %2596 = vmatpush.msra.mxu0 %v2581
    %2597 = vmatpush.msra.mxu0 %v2580
    %2598 = vmatpush.msra.mxu0 %v2579
    %2599 = vmatpush.msra.mxu0 %v2578
    %2600 = vmatpush.msra.mxu0 %v2577
    %2601 = vmatmul.f32.gmra.mxu0 %v1689
    %v2602 = vpop.f32.mrf.mxu0
    %v2603 = vadd.f32 0.0, %v2602
    %2604 = vmatmul.f32.gmra.mxu0 %v1692
    %v2605 = vpop.f32.mrf.mxu0
    %v2606 = vadd.f32 0.0, %v2605
    %2607 = vmatmul.f32.gmra.mxu0 %v1695
    %v2608 = vpop.f32.mrf.mxu0
    %v2609 = vadd.f32 0.0, %v2608
    %2610 = vmatmul.f32.gmra.mxu0 %v1698
    %v2611 = vpop.f32.mrf.mxu0
    %v2612 = vadd.f32 0.0, %v2611
    %2613 = vmatmul.f32.gmra.mxu0 %v1701
    %v2614 = vpop.f32.mrf.mxu0
    %v2615 = vadd.f32 0.0, %v2614
    %2616 = vmatmul.f32.gmra.mxu0 %v1704
    %v2617 = vpop.f32.mrf.mxu0
    %v2618 = vadd.f32 0.0, %v2617
    %2619 = vmatmul.f32.gmra.mxu0 %v1707
    %v2620 = vpop.f32.mrf.mxu0
    %v2621 = vadd.f32 0.0, %v2620
    %2622 = vmatmul.f32.gmra.mxu0 %v1710
    %v2623 = vpop.f32.mrf.mxu0
    %v2624 = vadd.f32 0.0, %v2623
    %2625 = vmatmul.f32.gmra.mxu0 %v1713
    %v2626 = vpop.f32.mrf.mxu0
    %v2627 = vadd.f32 0.0, %v2626
    %2628 = vmatmul.f32.gmra.mxu0 %v1716
    %v2629 = vpop.f32.mrf.mxu0
    %v2630 = vadd.f32 0.0, %v2629
    %2631 = vmatmul.f32.gmra.mxu0 %v1719
    %v2632 = vpop.f32.mrf.mxu0
    %v2633 = vadd.f32 0.0, %v2632
    %2634 = vmatmul.f32.gmra.mxu0 %v1722
    %v2635 = vpop.f32.mrf.mxu0
    %v2636 = vadd.f32 0.0, %v2635
    %2637 = vmatmul.f32.gmra.mxu0 %v1725
    %v2638 = vpop.f32.mrf.mxu0
    %v2639 = vadd.f32 0.0, %v2638
    %2640 = vmatmul.f32.gmra.mxu0 %v1728
    %v2641 = vpop.f32.mrf.mxu0
    %v2642 = vadd.f32 0.0, %v2641
    %2643 = vmatmul.f32.gmra.mxu0 %v1731
    %v2644 = vpop.f32.mrf.mxu0
    %v2645 = vadd.f32 0.0, %v2644
    %2646 = vmatmul.f32.gmra.mxu0 %v1734
    %v2647 = vpop.f32.mrf.mxu0
    %v2648 = vadd.f32 0.0, %v2647
    %2649 = vmatmul.f32.gmra.mxu0 %v1737
    %v2650 = vpop.f32.mrf.mxu0
    %v2651 = vadd.f32 0.0, %v2650
    %2652 = vmatmul.f32.gmra.mxu0 %v1740
    %v2653 = vpop.f32.mrf.mxu0
    %v2654 = vadd.f32 0.0, %v2653
    %2655 = vmatmul.f32.gmra.mxu0 %v1743
    %v2656 = vpop.f32.mrf.mxu0
    %v2657 = vadd.f32 0.0, %v2656
    %2658 = vmatmul.f32.gmra.mxu0 %v1746
    %v2659 = vpop.f32.mrf.mxu0
    %v2660 = vadd.f32 0.0, %v2659
    %2661 = vmatmul.f32.gmra.mxu0 %v1749
    %v2662 = vpop.f32.mrf.mxu0
    %v2663 = vadd.f32 0.0, %v2662
    %2664 = vmatmul.f32.gmra.mxu0 %v1752
    %v2665 = vpop.f32.mrf.mxu0
    %v2666 = vadd.f32 0.0, %v2665
    %2667 = vmatmul.f32.gmra.mxu0 %v1755
    %v2668 = vpop.f32.mrf.mxu0
    %v2669 = vadd.f32 0.0, %v2668
    %2670 = vmatmul.f32.gmra.mxu0 %v1758
    %v2671 = vpop.f32.mrf.mxu0
    %v2672 = vadd.f32 0.0, %v2671
    %2673 = vmatmul.f32.gmra.mxu0 %v1761
    %v2674 = vpop.f32.mrf.mxu0
    %v2675 = vadd.f32 0.0, %v2674
    %2676 = vmatmul.f32.gmra.mxu0 %v1764
    %v2677 = vpop.f32.mrf.mxu0
    %v2678 = vadd.f32 0.0, %v2677
    %2679 = vmatmul.f32.gmra.mxu0 %v1767
    %v2680 = vpop.f32.mrf.mxu0
    %v2681 = vadd.f32 0.0, %v2680
    %2682 = vmatmul.f32.gmra.mxu0 %v1770
    %v2683 = vpop.f32.mrf.mxu0
    %v2684 = vadd.f32 0.0, %v2683
    %2685 = vmatmul.f32.gmra.mxu0 %v1773
    %v2686 = vpop.f32.mrf.mxu0
    %v2687 = vadd.f32 0.0, %v2686
    %2688 = vmatmul.f32.gmra.mxu0 %v1776
    %v2689 = vpop.f32.mrf.mxu0
    %v2690 = vadd.f32 0.0, %v2689
    %2691 = vmatmul.f32.gmra.mxu0 %v1779
    %v2692 = vpop.f32.mrf.mxu0
    %v2693 = vadd.f32 0.0, %v2692
    %2694 = vmatmul.f32.gmra.mxu0 %v1782
    %v2695 = vpop.f32.mrf.mxu0
    %v2696 = vadd.f32 0.0, %v2695
    %2697 = vmatmul.f32.gmra.mxu0 %v1785
    %v2698 = vpop.f32.mrf.mxu0
    %v2699 = vadd.f32 0.0, %v2698
    %2700 = vmatmul.f32.gmra.mxu0 %v1788
    %v2701 = vpop.f32.mrf.mxu0
    %v2702 = vadd.f32 0.0, %v2701
    %2703 = vmatmul.f32.gmra.mxu0 %v1791
    %v2704 = vpop.f32.mrf.mxu0
    %v2705 = vadd.f32 0.0, %v2704
    %2706 = vmatmul.f32.gmra.mxu0 %v1794
    %v2707 = vpop.f32.mrf.mxu0
    %v2708 = vadd.f32 0.0, %v2707
    %2709 = vmatmul.f32.gmra.mxu0 %v1797
    %v2710 = vpop.f32.mrf.mxu0
    %v2711 = vadd.f32 0.0, %v2710
    %2712 = vmatmul.f32.gmra.mxu0 %v1800
    %v2713 = vpop.f32.mrf.mxu0
    %v2714 = vadd.f32 0.0, %v2713
    %2715 = vmatmul.f32.gmra.mxu0 %v1803
    %v2716 = vpop.f32.mrf.mxu0
    %v2717 = vadd.f32 0.0, %v2716
    %2718 = vmatmul.f32.gmra.mxu0 %v1806
    %v2719 = vpop.f32.mrf.mxu0
    %v2720 = vadd.f32 0.0, %v2719
    %2721 = vmatmul.f32.gmra.mxu0 %v1809
    %v2722 = vpop.f32.mrf.mxu0
    %v2723 = vadd.f32 0.0, %v2722
    %2724 = vmatmul.f32.gmra.mxu0 %v1812
    %v2725 = vpop.f32.mrf.mxu0
    %v2726 = vadd.f32 0.0, %v2725
    %2727 = vmatmul.f32.gmra.mxu0 %v1815
    %v2728 = vpop.f32.mrf.mxu0
    %v2729 = vadd.f32 0.0, %v2728
    %2730 = vmatmul.f32.gmra.mxu0 %v1818
    %v2731 = vpop.f32.mrf.mxu0
    %v2732 = vadd.f32 0.0, %v2731
    %2733 = vmatmul.f32.gmra.mxu0 %v1821
    %v2734 = vpop.f32.mrf.mxu0
    %v2735 = vadd.f32 0.0, %v2734
    %2736 = vmatmul.f32.gmra.mxu0 %v1824
    %v2737 = vpop.f32.mrf.mxu0
    %v2738 = vadd.f32 0.0, %v2737
    %2739 = vmatmul.f32.gmra.mxu0 %v1827
    %v2740 = vpop.f32.mrf.mxu0
    %v2741 = vadd.f32 0.0, %v2740
    %2742 = vmatmul.f32.gmra.mxu0 %v1830
    %v2743 = vpop.f32.mrf.mxu0
    %v2744 = vadd.f32 0.0, %v2743
    %2745 = vmatmul.f32.gmra.mxu0 %v1833
    %v2746 = vpop.f32.mrf.mxu0
    %v2747 = vadd.f32 0.0, %v2746
    %2748 = vmatmul.f32.gmra.mxu0 %v1836
    %v2749 = vpop.f32.mrf.mxu0
    %v2750 = vadd.f32 0.0, %v2749
    %2751 = vmatmul.f32.gmra.mxu0 %v1839
    %v2752 = vpop.f32.mrf.mxu0
    %v2753 = vadd.f32 0.0, %v2752
    %2754 = vmatmul.f32.gmra.mxu0 %v1842
    %v2755 = vpop.f32.mrf.mxu0
    %v2756 = vadd.f32 0.0, %v2755
    %2757 = vmatmul.f32.gmra.mxu0 %v1845
    %v2758 = vpop.f32.mrf.mxu0
    %v2759 = vadd.f32 0.0, %v2758
    %2760 = vmatmul.f32.gmra.mxu0 %v1848
    %v2761 = vpop.f32.mrf.mxu0
    %v2762 = vadd.f32 0.0, %v2761
    %2763 = vmatmul.f32.gmra.mxu0 %v1851
    %v2764 = vpop.f32.mrf.mxu0
    %v2765 = vadd.f32 0.0, %v2764
    %2766 = vmatmul.f32.gmra.mxu0 %v1854
    %v2767 = vpop.f32.mrf.mxu0
    %v2768 = vadd.f32 0.0, %v2767
    %2769 = vmatmul.f32.gmra.mxu0 %v1857
    %v2770 = vpop.f32.mrf.mxu0
    %v2771 = vadd.f32 0.0, %v2770
    %2772 = vmatmul.f32.gmra.mxu0 %v1860
    %v2773 = vpop.f32.mrf.mxu0
    %v2774 = vadd.f32 0.0, %v2773
    %2775 = vmatmul.f32.gmra.mxu0 %v1863
    %v2776 = vpop.f32.mrf.mxu0
    %v2777 = vadd.f32 0.0, %v2776
    %2778 = vmatmul.f32.gmra.mxu0 %v1866
    %v2779 = vpop.f32.mrf.mxu0
    %v2780 = vadd.f32 0.0, %v2779
    %2781 = vmatmul.f32.gmra.mxu0 %v1869
    %v2782 = vpop.f32.mrf.mxu0
    %v2783 = vadd.f32 0.0, %v2782
    %2784 = vmatmul.f32.gmra.mxu0 %v1872
    %v2785 = vpop.f32.mrf.mxu0
    %v2786 = vadd.f32 0.0, %v2785
    %2787 = vmatmul.f32.gmra.mxu0 %v1875
    %v2788 = vpop.f32.mrf.mxu0
    %v2789 = vadd.f32 0.0, %v2788
    %2790 = vmatmul.f32.gmra.mxu0 %v1878
    %v2791 = vpop.f32.mrf.mxu0
    %v2792 = vadd.f32 0.0, %v2791
    %2793 = vmatmul.f32.gmra.mxu0 %v1881
    %v2794 = vpop.f32.mrf.mxu0
    %v2795 = vadd.f32 0.0, %v2794
    %2796 = vmatmul.f32.gmra.mxu0 %v1884
    %v2797 = vpop.f32.mrf.mxu0
    %v2798 = vadd.f32 0.0, %v2797
    %2799 = vmatmul.f32.gmra.mxu0 %v1887
    %v2800 = vpop.f32.mrf.mxu0
    %v2801 = vadd.f32 0.0, %v2800
    %2802 = vmatmul.f32.gmra.mxu0 %v1890
    %v2803 = vpop.f32.mrf.mxu0
    %v2804 = vadd.f32 0.0, %v2803
    %2805 = vmatmul.f32.gmra.mxu0 %v1893
    %v2806 = vpop.f32.mrf.mxu0
    %v2807 = vadd.f32 0.0, %v2806
    %2808 = vmatmul.f32.gmra.mxu0 %v1896
    %v2809 = vpop.f32.mrf.mxu0
    %v2810 = vadd.f32 0.0, %v2809
    %2811 = vmatmul.f32.gmra.mxu0 %v1899
    %v2812 = vpop.f32.mrf.mxu0
    %v2813 = vadd.f32 0.0, %v2812
    %2814 = vmatmul.f32.gmra.mxu0 %v1902
    %v2815 = vpop.f32.mrf.mxu0
    %v2816 = vadd.f32 0.0, %v2815
    %2817 = vmatmul.f32.gmra.mxu0 %v1905
    %v2818 = vpop.f32.mrf.mxu0
    %v2819 = vadd.f32 0.0, %v2818
    %2820 = vmatmul.f32.gmra.mxu0 %v1908
    %v2821 = vpop.f32.mrf.mxu0
    %v2822 = vadd.f32 0.0, %v2821
    %2823 = vmatmul.f32.gmra.mxu0 %v1911
    %v2824 = vpop.f32.mrf.mxu0
    %v2825 = vadd.f32 0.0, %v2824
    %2826 = vmatmul.f32.gmra.mxu0 %v1914
    %v2827 = vpop.f32.mrf.mxu0
    %v2828 = vadd.f32 0.0, %v2827
    %2829 = vmatmul.f32.gmra.mxu0 %v1917
    %v2830 = vpop.f32.mrf.mxu0
    %v2831 = vadd.f32 0.0, %v2830
    %2832 = vmatmul.f32.gmra.mxu0 %v1920
    %v2833 = vpop.f32.mrf.mxu0
    %v2834 = vadd.f32 0.0, %v2833
    %2835 = vmatmul.f32.gmra.mxu0 %v1923
    %v2836 = vpop.f32.mrf.mxu0
    %v2837 = vadd.f32 0.0, %v2836
    %2838 = vmatmul.f32.gmra.mxu0 %v1926
    %v2839 = vpop.f32.mrf.mxu0
    %v2840 = vadd.f32 0.0, %v2839
    %2841 = vmatmul.f32.gmra.mxu0 %v1929
    %v2842 = vpop.f32.mrf.mxu0
    %v2843 = vadd.f32 0.0, %v2842
    %2844 = vmatmul.f32.gmra.mxu0 %v1932
    %v2845 = vpop.f32.mrf.mxu0
    %v2846 = vadd.f32 0.0, %v2845
    %2847 = vmatmul.f32.gmra.mxu0 %v1935
    %v2848 = vpop.f32.mrf.mxu0
    %v2849 = vadd.f32 0.0, %v2848
    %2850 = vmatmul.f32.gmra.mxu0 %v1938
    %v2851 = vpop.f32.mrf.mxu0
    %v2852 = vadd.f32 0.0, %v2851
    %2853 = vmatmul.f32.gmra.mxu0 %v1941
    %v2854 = vpop.f32.mrf.mxu0
    %v2855 = vadd.f32 0.0, %v2854
    %2856 = vmatmul.f32.gmra.mxu0 %v1944
    %v2857 = vpop.f32.mrf.mxu0
    %v2858 = vadd.f32 0.0, %v2857
    %2859 = vmatmul.f32.gmra.mxu0 %v1947
    %v2860 = vpop.f32.mrf.mxu0
    %v2861 = vadd.f32 0.0, %v2860
    %2862 = vmatmul.f32.gmra.mxu0 %v1950
    %v2863 = vpop.f32.mrf.mxu0
    %v2864 = vadd.f32 0.0, %v2863
    %2865 = vmatmul.f32.gmra.mxu0 %v1953
    %v2866 = vpop.f32.mrf.mxu0
    %v2867 = vadd.f32 0.0, %v2866
    %2868 = vmatmul.f32.gmra.mxu0 %v1956
    %v2869 = vpop.f32.mrf.mxu0
    %v2870 = vadd.f32 0.0, %v2869
    %2871 = vmatmul.f32.gmra.mxu0 %v1959
    %v2872 = vpop.f32.mrf.mxu0
    %v2873 = vadd.f32 0.0, %v2872
    %2874 = vmatmul.f32.gmra.mxu0 %v1962
    %v2875 = vpop.f32.mrf.mxu0
    %v2876 = vadd.f32 0.0, %v2875
    %2877 = vmatmul.f32.gmra.mxu0 %v2269
    %v2878 = vpop.f32.mrf.mxu0
    %v2879 = vadd.f32 0.0, %v2878
    %2880 = vmatmul.f32.gmra.mxu0 %v2269
    %v2881 = vpop.f32.mrf.mxu0
    %v2882 = vadd.f32 0.0, %v2881
    %2883 = vmatmul.f32.gmra.mxu0 %v2269
    %v2884 = vpop.f32.mrf.mxu0
    %v2885 = vadd.f32 0.0, %v2884
    %2886 = vmatmul.f32.gmra.mxu0 %v2269
    %v2887 = vpop.f32.mrf.mxu0
    %v2888 = vadd.f32 0.0, %v2887
    %2889 = vdwg.mxu0
    %v2890 = vadd.f32 %v2289, %v2603
    %v2891 = vadd.f32 %v2292, %v2606
    %v2892 = vadd.f32 %v2295, %v2609
    %v2893 = vadd.f32 %v2298, %v2612
    %v2894 = vadd.f32 %v2301, %v2615
    %v2895 = vadd.f32 %v2304, %v2618
    %v2896 = vadd.f32 %v2307, %v2621
    %v2897 = vadd.f32 %v2310, %v2624
    %v2898 = vadd.f32 %v2313, %v2627
    %v2899 = vadd.f32 %v2316, %v2630
    %v2900 = vadd.f32 %v2319, %v2633
    %v2901 = vadd.f32 %v2322, %v2636
    %v2902 = vadd.f32 %v2325, %v2639
    %v2903 = vadd.f32 %v2328, %v2642
    %v2904 = vadd.f32 %v2331, %v2645
    %v2905 = vadd.f32 %v2334, %v2648
    %v2906 = vadd.f32 %v2337, %v2651
    %v2907 = vadd.f32 %v2340, %v2654
    %v2908 = vadd.f32 %v2343, %v2657
    %v2909 = vadd.f32 %v2346, %v2660
    %v2910 = vadd.f32 %v2349, %v2663
    %v2911 = vadd.f32 %v2352, %v2666
    %v2912 = vadd.f32 %v2355, %v2669
    %v2913 = vadd.f32 %v2358, %v2672
    %v2914 = vadd.f32 %v2361, %v2675
    %v2915 = vadd.f32 %v2364, %v2678
    %v2916 = vadd.f32 %v2367, %v2681
    %v2917 = vadd.f32 %v2370, %v2684
    %v2918 = vadd.f32 %v2373, %v2687
    %v2919 = vadd.f32 %v2376, %v2690
    %v2920 = vadd.f32 %v2379, %v2693
    %v2921 = vadd.f32 %v2382, %v2696
    %v2922 = vadd.f32 %v2385, %v2699
    %v2923 = vadd.f32 %v2388, %v2702
    %v2924 = vadd.f32 %v2391, %v2705
    %v2925 = vadd.f32 %v2394, %v2708
    %v2926 = vadd.f32 %v2397, %v2711
    %v2927 = vadd.f32 %v2400, %v2714
    %v2928 = vadd.f32 %v2403, %v2717
    %v2929 = vadd.f32 %v2406, %v2720
    %v2930 = vadd.f32 %v2409, %v2723
    %v2931 = vadd.f32 %v2412, %v2726
    %v2932 = vadd.f32 %v2415, %v2729
    %v2933 = vadd.f32 %v2418, %v2732
    %v2934 = vadd.f32 %v2421, %v2735
    %v2935 = vadd.f32 %v2424, %v2738
    %v2936 = vadd.f32 %v2427, %v2741
    %v2937 = vadd.f32 %v2430, %v2744
    %v2938 = vadd.f32 %v2433, %v2747
    %v2939 = vadd.f32 %v2436, %v2750
    %v2940 = vadd.f32 %v2439, %v2753
    %v2941 = vadd.f32 %v2442, %v2756
    %v2942 = vadd.f32 %v2445, %v2759
    %v2943 = vadd.f32 %v2448, %v2762
    %v2944 = vadd.f32 %v2451, %v2765
    %v2945 = vadd.f32 %v2454, %v2768
    %v2946 = vadd.f32 %v2457, %v2771
    %v2947 = vadd.f32 %v2460, %v2774
    %v2948 = vadd.f32 %v2463, %v2777
    %v2949 = vadd.f32 %v2466, %v2780
    %v2950 = vadd.f32 %v2469, %v2783
    %v2951 = vadd.f32 %v2472, %v2786
    %v2952 = vadd.f32 %v2475, %v2789
    %v2953 = vadd.f32 %v2478, %v2792
    %v2954 = vadd.f32 %v2481, %v2795
    %v2955 = vadd.f32 %v2484, %v2798
    %v2956 = vadd.f32 %v2487, %v2801
    %v2957 = vadd.f32 %v2490, %v2804
    %v2958 = vadd.f32 %v2493, %v2807
    %v2959 = vadd.f32 %v2496, %v2810
    %v2960 = vadd.f32 %v2499, %v2813
    %v2961 = vadd.f32 %v2502, %v2816
    %v2962 = vadd.f32 %v2505, %v2819
    %v2963 = vadd.f32 %v2508, %v2822
    %v2964 = vadd.f32 %v2511, %v2825
    %v2965 = vadd.f32 %v2514, %v2828
    %v2966 = vadd.f32 %v2517, %v2831
    %v2967 = vadd.f32 %v2520, %v2834
    %v2968 = vadd.f32 %v2523, %v2837
    %v2969 = vadd.f32 %v2526, %v2840
    %v2970 = vadd.f32 %v2529, %v2843
    %v2971 = vadd.f32 %v2532, %v2846
    %v2972 = vadd.f32 %v2535, %v2849
    %v2973 = vadd.f32 %v2538, %v2852
    %v2974 = vadd.f32 %v2541, %v2855
    %v2975 = vadd.f32 %v2544, %v2858
    %v2976 = vadd.f32 %v2547, %v2861
    %v2977 = vadd.f32 %v2550, %v2864
    %v2978 = vadd.f32 %v2553, %v2867
    %v2979 = vadd.f32 %v2556, %v2870
    %v2980 = vadd.f32 %v2559, %v2873
    %v2981 = vadd.f32 %v2562, %v2876
    %v2982 = vadd.f32 %v2565, %v2879
    %v2983 = vadd.f32 %v2568, %v2882
    %v2984 = vadd.f32 %v2571, %v2885
    %v2985 = vadd.f32 %v2574, %v2888
    %v2986 = vld [vmem:[%s4] sm:$0x1]
    %v2988 = vperm.slane %v2986, 0
    %v2990 = vadd.f32 %v2890, %v2988
    %v2991 = vadd.f32 %v2891, %v2988
    %v2992 = vadd.f32 %v2892, %v2988
    %v2993 = vadd.f32 %v2893, %v2988
    %v2994 = vadd.f32 %v2894, %v2988
    %v2995 = vadd.f32 %v2895, %v2988
    %v2996 = vadd.f32 %v2896, %v2988
    %v2997 = vadd.f32 %v2897, %v2988
    %v2998 = vadd.f32 %v2898, %v2988
    %v2999 = vadd.f32 %v2899, %v2988
    %v3000 = vadd.f32 %v2900, %v2988
    %v3001 = vadd.f32 %v2901, %v2988
    %v3002 = vadd.f32 %v2902, %v2988
    %v3003 = vadd.f32 %v2903, %v2988
    %v3004 = vadd.f32 %v2904, %v2988
    %v3005 = vadd.f32 %v2905, %v2988
    %v3006 = vadd.f32 %v2906, %v2988
    %v3007 = vadd.f32 %v2907, %v2988
    %v3008 = vadd.f32 %v2908, %v2988
    %v3009 = vadd.f32 %v2909, %v2988
    %v3010 = vadd.f32 %v2910, %v2988
    %v3011 = vadd.f32 %v2911, %v2988
    %v3012 = vadd.f32 %v2912, %v2988
    %v3013 = vadd.f32 %v2913, %v2988
    %v3014 = vadd.f32 %v2914, %v2988
    %v3015 = vadd.f32 %v2915, %v2988
    %v3016 = vadd.f32 %v2916, %v2988
    %v3017 = vadd.f32 %v2917, %v2988
    %v3018 = vadd.f32 %v2918, %v2988
    %v3019 = vadd.f32 %v2919, %v2988
    %v3020 = vadd.f32 %v2920, %v2988
    %v3021 = vadd.f32 %v2921, %v2988
    %v3022 = vadd.f32 %v2922, %v2988
    %v3023 = vadd.f32 %v2923, %v2988
    %v3024 = vadd.f32 %v2924, %v2988
    %v3025 = vadd.f32 %v2925, %v2988
    %v3026 = vadd.f32 %v2926, %v2988
    %v3027 = vadd.f32 %v2927, %v2988
    %v3028 = vadd.f32 %v2928, %v2988
    %v3029 = vadd.f32 %v2929, %v2988
    %v3030 = vadd.f32 %v2930, %v2988
    %v3031 = vadd.f32 %v2931, %v2988
    %v3032 = vadd.f32 %v2932, %v2988
    %v3033 = vadd.f32 %v2933, %v2988
    %v3034 = vadd.f32 %v2934, %v2988
    %v3035 = vadd.f32 %v2935, %v2988
    %v3036 = vadd.f32 %v2936, %v2988
    %v3037 = vadd.f32 %v2937, %v2988
    %v3038 = vadd.f32 %v2938, %v2988
    %v3039 = vadd.f32 %v2939, %v2988
    %v3040 = vadd.f32 %v2940, %v2988
    %v3041 = vadd.f32 %v2941, %v2988
    %v3042 = vadd.f32 %v2942, %v2988
    %v3043 = vadd.f32 %v2943, %v2988
    %v3044 = vadd.f32 %v2944, %v2988
    %v3045 = vadd.f32 %v2945, %v2988
    %v3046 = vadd.f32 %v2946, %v2988
    %v3047 = vadd.f32 %v2947, %v2988
    %v3048 = vadd.f32 %v2948, %v2988
    %v3049 = vadd.f32 %v2949, %v2988
    %v3050 = vadd.f32 %v2950, %v2988
    %v3051 = vadd.f32 %v2951, %v2988
    %v3052 = vadd.f32 %v2952, %v2988
    %v3053 = vadd.f32 %v2953, %v2988
    %v3054 = vadd.f32 %v2954, %v2988
    %v3055 = vadd.f32 %v2955, %v2988
    %v3056 = vadd.f32 %v2956, %v2988
    %v3057 = vadd.f32 %v2957, %v2988
    %v3058 = vadd.f32 %v2958, %v2988
    %v3059 = vadd.f32 %v2959, %v2988
    %v3060 = vadd.f32 %v2960, %v2988
    %v3061 = vadd.f32 %v2961, %v2988
    %v3062 = vadd.f32 %v2962, %v2988
    %v3063 = vadd.f32 %v2963, %v2988
    %v3064 = vadd.f32 %v2964, %v2988
    %v3065 = vadd.f32 %v2965, %v2988
    %v3066 = vadd.f32 %v2966, %v2988
    %v3067 = vadd.f32 %v2967, %v2988
    %v3068 = vadd.f32 %v2968, %v2988
    %v3069 = vadd.f32 %v2969, %v2988
    %v3070 = vadd.f32 %v2970, %v2988
    %v3071 = vadd.f32 %v2971, %v2988
    %v3072 = vadd.f32 %v2972, %v2988
    %v3073 = vadd.f32 %v2973, %v2988
    %v3074 = vadd.f32 %v2974, %v2988
    %v3075 = vadd.f32 %v2975, %v2988
    %v3076 = vadd.f32 %v2976, %v2988
    %v3077 = vadd.f32 %v2977, %v2988
    %v3078 = vadd.f32 %v2978, %v2988
    %v3079 = vadd.f32 %v2979, %v2988
    %v3080 = vadd.f32 %v2980, %v2988
    %v3081 = vadd.f32 %v2981, %v2988
    %v3082 = vadd.f32 %v2982, %v2988
    %v3083 = vadd.f32 %v2983, %v2988
    %v3084 = vadd.f32 %v2984, %v2988
    %v3085 = vadd.f32 %v2985, %v2988
    %v3086 = vmax.f32 %v2990, 0.0
    %v3087 = vmax.f32 %v2991, 0.0
    %v3088 = vmax.f32 %v2992, 0.0
    %v3089 = vmax.f32 %v2993, 0.0
    %v3090 = vmax.f32 %v2994, 0.0
    %v3091 = vmax.f32 %v2995, 0.0
    %v3092 = vmax.f32 %v2996, 0.0
    %v3093 = vmax.f32 %v2997, 0.0
    %v3094 = vmax.f32 %v2998, 0.0
    %v3095 = vmax.f32 %v2999, 0.0
    %v3096 = vmax.f32 %v3000, 0.0
    %v3097 = vmax.f32 %v3001, 0.0
    %v3098 = vmax.f32 %v3002, 0.0
    %v3099 = vmax.f32 %v3003, 0.0
    %v3100 = vmax.f32 %v3004, 0.0
    %v3101 = vmax.f32 %v3005, 0.0
    %v3102 = vmax.f32 %v3006, 0.0
    %v3103 = vmax.f32 %v3007, 0.0
    %v3104 = vmax.f32 %v3008, 0.0
    %v3105 = vmax.f32 %v3009, 0.0
    %v3106 = vmax.f32 %v3010, 0.0
    %v3107 = vmax.f32 %v3011, 0.0
    %v3108 = vmax.f32 %v3012, 0.0
    %v3109 = vmax.f32 %v3013, 0.0
    %v3110 = vmax.f32 %v3014, 0.0
    %v3111 = vmax.f32 %v3015, 0.0
    %v3112 = vmax.f32 %v3016, 0.0
    %v3113 = vmax.f32 %v3017, 0.0
    %v3114 = vmax.f32 %v3018, 0.0
    %v3115 = vmax.f32 %v3019, 0.0
    %v3116 = vmax.f32 %v3020, 0.0
    %v3117 = vmax.f32 %v3021, 0.0
    %v3118 = vmax.f32 %v3022, 0.0
    %v3119 = vmax.f32 %v3023, 0.0
    %v3120 = vmax.f32 %v3024, 0.0
    %v3121 = vmax.f32 %v3025, 0.0
    %v3122 = vmax.f32 %v3026, 0.0
    %v3123 = vmax.f32 %v3027, 0.0
    %v3124 = vmax.f32 %v3028, 0.0
    %v3125 = vmax.f32 %v3029, 0.0
    %v3126 = vmax.f32 %v3030, 0.0
    %v3127 = vmax.f32 %v3031, 0.0
    %v3128 = vmax.f32 %v3032, 0.0
    %v3129 = vmax.f32 %v3033, 0.0
    %v3130 = vmax.f32 %v3034, 0.0
    %v3131 = vmax.f32 %v3035, 0.0
    %v3132 = vmax.f32 %v3036, 0.0
    %v3133 = vmax.f32 %v3037, 0.0
    %v3134 = vmax.f32 %v3038, 0.0
    %v3135 = vmax.f32 %v3039, 0.0
    %v3136 = vmax.f32 %v3040, 0.0
    %v3137 = vmax.f32 %v3041, 0.0
    %v3138 = vmax.f32 %v3042, 0.0
    %v3139 = vmax.f32 %v3043, 0.0
    %v3140 = vmax.f32 %v3044, 0.0
    %v3141 = vmax.f32 %v3045, 0.0
    %v3142 = vmax.f32 %v3046, 0.0
    %v3143 = vmax.f32 %v3047, 0.0
    %v3144 = vmax.f32 %v3048, 0.0
    %v3145 = vmax.f32 %v3049, 0.0
    %v3146 = vmax.f32 %v3050, 0.0
    %v3147 = vmax.f32 %v3051, 0.0
    %v3148 = vmax.f32 %v3052, 0.0
    %v3149 = vmax.f32 %v3053, 0.0
    %v3150 = vmax.f32 %v3054, 0.0
    %v3151 = vmax.f32 %v3055, 0.0
    %v3152 = vmax.f32 %v3056, 0.0
    %v3153 = vmax.f32 %v3057, 0.0
    %v3154 = vmax.f32 %v3058, 0.0
    %v3155 = vmax.f32 %v3059, 0.0
    %v3156 = vmax.f32 %v3060, 0.0
    %v3157 = vmax.f32 %v3061, 0.0
    %v3158 = vmax.f32 %v3062, 0.0
    %v3159 = vmax.f32 %v3063, 0.0
    %v3160 = vmax.f32 %v3064, 0.0
    %v3161 = vmax.f32 %v3065, 0.0
    %v3162 = vmax.f32 %v3066, 0.0
    %v3163 = vmax.f32 %v3067, 0.0
    %v3164 = vmax.f32 %v3068, 0.0
    %v3165 = vmax.f32 %v3069, 0.0
    %v3166 = vmax.f32 %v3070, 0.0
    %v3167 = vmax.f32 %v3071, 0.0
    %v3168 = vmax.f32 %v3072, 0.0
    %v3169 = vmax.f32 %v3073, 0.0
    %v3170 = vmax.f32 %v3074, 0.0
    %v3171 = vmax.f32 %v3075, 0.0
    %v3172 = vmax.f32 %v3076, 0.0
    %v3173 = vmax.f32 %v3077, 0.0
    %v3174 = vmax.f32 %v3078, 0.0
    %v3175 = vmax.f32 %v3079, 0.0
    %v3176 = vmax.f32 %v3080, 0.0
    %v3177 = vmax.f32 %v3081, 0.0
    %v3178 = vmax.f32 %v3082, 0.0
    %v3179 = vmax.f32 %v3083, 0.0
    %v3180 = vmax.f32 %v3084, 0.0
    %v3181 = vmax.f32 %v3085, 0.0
    %v3182 = vld [vmem:[#allocation2] sm:$0xff]
    %v3183 = vld [vmem:[#allocation2 + $0x8] sm:$0xff]
    %v3184 = vld [vmem:[#allocation2 + $0x10] sm:$0xff]
    %v3185 = vld [vmem:[#allocation2 + $0x18] sm:$0xff]
    %v3186 = vld [vmem:[#allocation2 + $0x20] sm:$0xff]
    %v3187 = vld [vmem:[#allocation2 + $0x28] sm:$0xff]
    %v3188 = vld [vmem:[#allocation2 + $0x30] sm:$0xff]
    %v3189 = vld [vmem:[#allocation2 + $0x38] sm:$0xff]
    %s3190 = scalar_lea.vmem [#allocation2], 64
    %v3191 = vld [vmem:[%s3190] sm:$0xff]
    %v3192 = vld [vmem:[%s3190 + $0x8] sm:$0xff]
    %v3193 = vld [vmem:[%s3190 + $0x10] sm:$0xff]
    %v3194 = vld [vmem:[%s3190 + $0x18] sm:$0xff]
    %v3195 = vld [vmem:[%s3190 + $0x20] sm:$0xff]
    %v3196 = vld [vmem:[%s3190 + $0x28] sm:$0xff]
    %v3197 = vld [vmem:[%s3190 + $0x30] sm:$0xff]
    %v3198 = vld [vmem:[%s3190 + $0x38] sm:$0xff]
    %v3200 = vsel %vm1675, %v3090, 0
    %v3203 = vsel %vm1675, %v3091, 0
    %v3206 = vsel %vm1675, %v3092, 0
    %v3209 = vsel %vm1675, %v3093, 0
    %3211 = vmatpush.msra.mxu0 0.0
    %3212 = vmatpush.msra.mxu0 0.0
    %3213 = vmatpush.msra.mxu0 0.0
    %3214 = vmatpush.msra.mxu0 0.0
    %3215 = vmatpush.msra.mxu0 0.0
    %3216 = vmatpush.msra.mxu0 0.0
    %3217 = vmatpush.msra.mxu0 0.0
    %3218 = vmatpush.msra.mxu0 0.0
    %3219 = vmatpush.msra.mxu0 %v3198
    %3220 = vmatpush.msra.mxu0 %v3197
    %3221 = vmatpush.msra.mxu0 %v3196
    %3222 = vmatpush.msra.mxu0 %v3195
    %3223 = vmatpush.msra.mxu0 %v3194
    %3224 = vmatpush.msra.mxu0 %v3193
    %3225 = vmatpush.msra.mxu0 %v3192
    %3226 = vmatpush.msra.mxu0 %v3191
    %3227 = vmatmul.f32.gmra.mxu0 %v3200
    %v3228 = vpop.f32.mrf.mxu0
    %v3229 = vadd.f32 0.0, %v3228
    %3230 = vmatmul.f32.gmra.mxu0 %v3203
    %v3231 = vpop.f32.mrf.mxu0
    %v3232 = vadd.f32 0.0, %v3231
    %3233 = vmatmul.f32.gmra.mxu0 %v3206
    %v3234 = vpop.f32.mrf.mxu0
    %v3235 = vadd.f32 0.0, %v3234
    %3236 = vmatmul.f32.gmra.mxu0 %v3209
    %v3237 = vpop.f32.mrf.mxu0
    %v3238 = vadd.f32 0.0, %v3237
    %3239 = vdwg.mxu0
    %v3241 = vsel %vm1675, %v3086, 0
    %v3244 = vsel %vm1675, %v3087, 0
    %v3247 = vsel %vm1675, %v3088, 0
    %v3250 = vsel %vm1675, %v3089, 0
    %3252 = vmatpush.msra.mxu0 0.0
    %3253 = vmatpush.msra.mxu0 0.0
    %3254 = vmatpush.msra.mxu0 0.0
    %3255 = vmatpush.msra.mxu0 0.0
    %3256 = vmatpush.msra.mxu0 0.0
    %3257 = vmatpush.msra.mxu0 0.0
    %3258 = vmatpush.msra.mxu0 0.0
    %3259 = vmatpush.msra.mxu0 0.0
    %3260 = vmatpush.msra.mxu0 %v3189
    %3261 = vmatpush.msra.mxu0 %v3188
    %3262 = vmatpush.msra.mxu0 %v3187
    %3263 = vmatpush.msra.mxu0 %v3186
    %3264 = vmatpush.msra.mxu0 %v3185
    %3265 = vmatpush.msra.mxu0 %v3184
    %3266 = vmatpush.msra.mxu0 %v3183
    %3267 = vmatpush.msra.mxu0 %v3182
    %3268 = vmatmul.f32.gmra.mxu0 %v3241
    %v3269 = vpop.f32.mrf.mxu0
    %v3270 = vadd.f32 %v3229, %v3269
    %3271 = vmatmul.f32.gmra.mxu0 %v3244
    %v3272 = vpop.f32.mrf.mxu0
    %v3273 = vadd.f32 %v3232, %v3272
    %3274 = vmatmul.f32.gmra.mxu0 %v3247
    %v3275 = vpop.f32.mrf.mxu0
    %v3276 = vadd.f32 %v3235, %v3275
    %3277 = vmatmul.f32.gmra.mxu0 %v3250
    %v3278 = vpop.f32.mrf.mxu0
    %v3279 = vadd.f32 %v3238, %v3278
    %3280 = vdwg.mxu0
    %s3281 = scalar_lea.vmem [#allocation2], 128
    %v3282 = vld [vmem:[%s3281] sm:$0xff]
    %v3283 = vld [vmem:[%s3281 + $0x8] sm:$0xff]
    %v3284 = vld [vmem:[%s3281 + $0x10] sm:$0xff]
    %v3285 = vld [vmem:[%s3281 + $0x18] sm:$0xff]
    %v3286 = vld [vmem:[%s3281 + $0x20] sm:$0xff]
    %v3287 = vld [vmem:[%s3281 + $0x28] sm:$0xff]
    %v3288 = vld [vmem:[%s3281 + $0x30] sm:$0xff]
    %v3289 = vld [vmem:[%s3281 + $0x38] sm:$0xff]
    %v3291 = vsel %vm1675, %v3094, 0
    %v3294 = vsel %vm1675, %v3095, 0
    %v3297 = vsel %vm1675, %v3096, 0
    %v3300 = vsel %vm1675, %v3097, 0
    %3302 = vmatpush.msra.mxu0 0.0
    %3303 = vmatpush.msra.mxu0 0.0
    %3304 = vmatpush.msra.mxu0 0.0
    %3305 = vmatpush.msra.mxu0 0.0
    %3306 = vmatpush.msra.mxu0 0.0
    %3307 = vmatpush.msra.mxu0 0.0
    %3308 = vmatpush.msra.mxu0 0.0
    %3309 = vmatpush.msra.mxu0 0.0
    %3310 = vmatpush.msra.mxu0 %v3289
    %3311 = vmatpush.msra.mxu0 %v3288
    %3312 = vmatpush.msra.mxu0 %v3287
    %3313 = vmatpush.msra.mxu0 %v3286
    %3314 = vmatpush.msra.mxu0 %v3285
    %3315 = vmatpush.msra.mxu0 %v3284
    %3316 = vmatpush.msra.mxu0 %v3283
    %3317 = vmatpush.msra.mxu0 %v3282
    %3318 = vmatmul.f32.gmra.mxu0 %v3291
    %v3319 = vpop.f32.mrf.mxu0
    %v3320 = vadd.f32 0.0, %v3319
    %3321 = vmatmul.f32.gmra.mxu0 %v3294
    %v3322 = vpop.f32.mrf.mxu0
    %v3323 = vadd.f32 0.0, %v3322
    %3324 = vmatmul.f32.gmra.mxu0 %v3297
    %v3325 = vpop.f32.mrf.mxu0
    %v3326 = vadd.f32 0.0, %v3325
    %3327 = vmatmul.f32.gmra.mxu0 %v3300
    %v3328 = vpop.f32.mrf.mxu0
    %v3329 = vadd.f32 0.0, %v3328
    %3330 = vdwg.mxu0
    %v3331 = vadd.f32 %v3270, %v3320
    %v3332 = vadd.f32 %v3273, %v3323
    %v3333 = vadd.f32 %v3276, %v3326
    %v3334 = vadd.f32 %v3279, %v3329
    %s3335 = scalar_lea.vmem [#allocation2], 192
    %v3336 = vld [vmem:[%s3335] sm:$0xff]
    %v3337 = vld [vmem:[%s3335 + $0x8] sm:$0xff]
    %v3338 = vld [vmem:[%s3335 + $0x10] sm:$0xff]
    %v3339 = vld [vmem:[%s3335 + $0x18] sm:$0xff]
    %v3340 = vld [vmem:[%s3335 + $0x20] sm:$0xff]
    %v3341 = vld [vmem:[%s3335 + $0x28] sm:$0xff]
    %v3342 = vld [vmem:[%s3335 + $0x30] sm:$0xff]
    %v3343 = vld [vmem:[%s3335 + $0x38] sm:$0xff]
    %v3345 = vsel %vm1675, %v3098, 0
    %v3348 = vsel %vm1675, %v3099, 0
    %v3351 = vsel %vm1675, %v3100, 0
    %v3354 = vsel %vm1675, %v3101, 0
    %3356 = vmatpush.msra.mxu0 0.0
    %3357 = vmatpush.msra.mxu0 0.0
    %3358 = vmatpush.msra.mxu0 0.0
    %3359 = vmatpush.msra.mxu0 0.0
    %3360 = vmatpush.msra.mxu0 0.0
    %3361 = vmatpush.msra.mxu0 0.0
    %3362 = vmatpush.msra.mxu0 0.0
    %3363 = vmatpush.msra.mxu0 0.0
    %3364 = vmatpush.msra.mxu0 %v3343
    %3365 = vmatpush.msra.mxu0 %v3342
    %3366 = vmatpush.msra.mxu0 %v3341
    %3367 = vmatpush.msra.mxu0 %v3340
    %3368 = vmatpush.msra.mxu0 %v3339
    %3369 = vmatpush.msra.mxu0 %v3338
    %3370 = vmatpush.msra.mxu0 %v3337
    %3371 = vmatpush.msra.mxu0 %v3336
    %3372 = vmatmul.f32.gmra.mxu0 %v3345
    %v3373 = vpop.f32.mrf.mxu0
    %v3374 = vadd.f32 0.0, %v3373
    %3375 = vmatmul.f32.gmra.mxu0 %v3348
    %v3376 = vpop.f32.mrf.mxu0
    %v3377 = vadd.f32 0.0, %v3376
    %3378 = vmatmul.f32.gmra.mxu0 %v3351
    %v3379 = vpop.f32.mrf.mxu0
    %v3380 = vadd.f32 0.0, %v3379
    %3381 = vmatmul.f32.gmra.mxu0 %v3354
    %v3382 = vpop.f32.mrf.mxu0
    %v3383 = vadd.f32 0.0, %v3382
    %3384 = vdwg.mxu0
    %v3385 = vadd.f32 %v3331, %v3374
    %v3386 = vadd.f32 %v3332, %v3377
    %v3387 = vadd.f32 %v3333, %v3380
    %v3388 = vadd.f32 %v3334, %v3383
    %s3389 = scalar_lea.vmem [#allocation2], 256
    %v3390 = vld [vmem:[%s3389] sm:$0xff]
    %v3391 = vld [vmem:[%s3389 + $0x8] sm:$0xff]
    %v3392 = vld [vmem:[%s3389 + $0x10] sm:$0xff]
    %v3393 = vld [vmem:[%s3389 + $0x18] sm:$0xff]
    %v3394 = vld [vmem:[%s3389 + $0x20] sm:$0xff]
    %v3395 = vld [vmem:[%s3389 + $0x28] sm:$0xff]
    %v3396 = vld [vmem:[%s3389 + $0x30] sm:$0xff]
    %v3397 = vld [vmem:[%s3389 + $0x38] sm:$0xff]
    %v3399 = vsel %vm1675, %v3102, 0
    %v3402 = vsel %vm1675, %v3103, 0
    %v3405 = vsel %vm1675, %v3104, 0
    %v3408 = vsel %vm1675, %v3105, 0
    %3410 = vmatpush.msra.mxu0 0.0
    %3411 = vmatpush.msra.mxu0 0.0
    %3412 = vmatpush.msra.mxu0 0.0
    %3413 = vmatpush.msra.mxu0 0.0
    %3414 = vmatpush.msra.mxu0 0.0
    %3415 = vmatpush.msra.mxu0 0.0
    %3416 = vmatpush.msra.mxu0 0.0
    %3417 = vmatpush.msra.mxu0 0.0
    %3418 = vmatpush.msra.mxu0 %v3397
    %3419 = vmatpush.msra.mxu0 %v3396
    %3420 = vmatpush.msra.mxu0 %v3395
    %3421 = vmatpush.msra.mxu0 %v3394
    %3422 = vmatpush.msra.mxu0 %v3393
    %3423 = vmatpush.msra.mxu0 %v3392
    %3424 = vmatpush.msra.mxu0 %v3391
    %3425 = vmatpush.msra.mxu0 %v3390
    %3426 = vmatmul.f32.gmra.mxu0 %v3399
    %v3427 = vpop.f32.mrf.mxu0
    %v3428 = vadd.f32 0.0, %v3427
    %3429 = vmatmul.f32.gmra.mxu0 %v3402
    %v3430 = vpop.f32.mrf.mxu0
    %v3431 = vadd.f32 0.0, %v3430
    %3432 = vmatmul.f32.gmra.mxu0 %v3405
    %v3433 = vpop.f32.mrf.mxu0
    %v3434 = vadd.f32 0.0, %v3433
    %3435 = vmatmul.f32.gmra.mxu0 %v3408
    %v3436 = vpop.f32.mrf.mxu0
    %v3437 = vadd.f32 0.0, %v3436
    %3438 = vdwg.mxu0
    %v3439 = vadd.f32 %v3385, %v3428
    %v3440 = vadd.f32 %v3386, %v3431
    %v3441 = vadd.f32 %v3387, %v3434
    %v3442 = vadd.f32 %v3388, %v3437
    %s3443 = scalar_lea.vmem [#allocation2], 320
    %v3444 = vld [vmem:[%s3443] sm:$0xff]
    %v3445 = vld [vmem:[%s3443 + $0x8] sm:$0xff]
    %v3446 = vld [vmem:[%s3443 + $0x10] sm:$0xff]
    %v3447 = vld [vmem:[%s3443 + $0x18] sm:$0xff]
    %v3448 = vld [vmem:[%s3443 + $0x20] sm:$0xff]
    %v3449 = vld [vmem:[%s3443 + $0x28] sm:$0xff]
    %v3450 = vld [vmem:[%s3443 + $0x30] sm:$0xff]
    %v3451 = vld [vmem:[%s3443 + $0x38] sm:$0xff]
    %v3453 = vsel %vm1675, %v3106, 0
    %v3456 = vsel %vm1675, %v3107, 0
    %v3459 = vsel %vm1675, %v3108, 0
    %v3462 = vsel %vm1675, %v3109, 0
    %3464 = vmatpush.msra.mxu0 0.0
    %3465 = vmatpush.msra.mxu0 0.0
    %3466 = vmatpush.msra.mxu0 0.0
    %3467 = vmatpush.msra.mxu0 0.0
    %3468 = vmatpush.msra.mxu0 0.0
    %3469 = vmatpush.msra.mxu0 0.0
    %3470 = vmatpush.msra.mxu0 0.0
    %3471 = vmatpush.msra.mxu0 0.0
    %3472 = vmatpush.msra.mxu0 %v3451
    %3473 = vmatpush.msra.mxu0 %v3450
    %3474 = vmatpush.msra.mxu0 %v3449
    %3475 = vmatpush.msra.mxu0 %v3448
    %3476 = vmatpush.msra.mxu0 %v3447
    %3477 = vmatpush.msra.mxu0 %v3446
    %3478 = vmatpush.msra.mxu0 %v3445
    %3479 = vmatpush.msra.mxu0 %v3444
    %3480 = vmatmul.f32.gmra.mxu0 %v3453
    %v3481 = vpop.f32.mrf.mxu0
    %v3482 = vadd.f32 0.0, %v3481
    %3483 = vmatmul.f32.gmra.mxu0 %v3456
    %v3484 = vpop.f32.mrf.mxu0
    %v3485 = vadd.f32 0.0, %v3484
    %3486 = vmatmul.f32.gmra.mxu0 %v3459
    %v3487 = vpop.f32.mrf.mxu0
    %v3488 = vadd.f32 0.0, %v3487
    %3489 = vmatmul.f32.gmra.mxu0 %v3462
    %v3490 = vpop.f32.mrf.mxu0
    %v3491 = vadd.f32 0.0, %v3490
    %3492 = vdwg.mxu0
    %v3493 = vadd.f32 %v3439, %v3482
    %v3494 = vadd.f32 %v3440, %v3485
    %v3495 = vadd.f32 %v3441, %v3488
    %v3496 = vadd.f32 %v3442, %v3491
    %s3497 = scalar_lea.vmem [#allocation2], 384
    %v3498 = vld [vmem:[%s3497] sm:$0xff]
    %v3499 = vld [vmem:[%s3497 + $0x8] sm:$0xff]
    %v3500 = vld [vmem:[%s3497 + $0x10] sm:$0xff]
    %v3501 = vld [vmem:[%s3497 + $0x18] sm:$0xff]
    %v3502 = vld [vmem:[%s3497 + $0x20] sm:$0xff]
    %v3503 = vld [vmem:[%s3497 + $0x28] sm:$0xff]
    %v3504 = vld [vmem:[%s3497 + $0x30] sm:$0xff]
    %v3505 = vld [vmem:[%s3497 + $0x38] sm:$0xff]
    %v3507 = vsel %vm1675, %v3110, 0
    %v3510 = vsel %vm1675, %v3111, 0
    %v3513 = vsel %vm1675, %v3112, 0
    %v3516 = vsel %vm1675, %v3113, 0
    %3518 = vmatpush.msra.mxu0 0.0
    %3519 = vmatpush.msra.mxu0 0.0
    %3520 = vmatpush.msra.mxu0 0.0
    %3521 = vmatpush.msra.mxu0 0.0
    %3522 = vmatpush.msra.mxu0 0.0
    %3523 = vmatpush.msra.mxu0 0.0
    %3524 = vmatpush.msra.mxu0 0.0
    %3525 = vmatpush.msra.mxu0 0.0
    %3526 = vmatpush.msra.mxu0 %v3505
    %3527 = vmatpush.msra.mxu0 %v3504
    %3528 = vmatpush.msra.mxu0 %v3503
    %3529 = vmatpush.msra.mxu0 %v3502
    %3530 = vmatpush.msra.mxu0 %v3501
    %3531 = vmatpush.msra.mxu0 %v3500
    %3532 = vmatpush.msra.mxu0 %v3499
    %3533 = vmatpush.msra.mxu0 %v3498
    %3534 = vmatmul.f32.gmra.mxu0 %v3507
    %v3535 = vpop.f32.mrf.mxu0
    %v3536 = vadd.f32 0.0, %v3535
    %3537 = vmatmul.f32.gmra.mxu0 %v3510
    %v3538 = vpop.f32.mrf.mxu0
    %v3539 = vadd.f32 0.0, %v3538
    %3540 = vmatmul.f32.gmra.mxu0 %v3513
    %v3541 = vpop.f32.mrf.mxu0
    %v3542 = vadd.f32 0.0, %v3541
    %3543 = vmatmul.f32.gmra.mxu0 %v3516
    %v3544 = vpop.f32.mrf.mxu0
    %v3545 = vadd.f32 0.0, %v3544
    %3546 = vdwg.mxu0
    %v3547 = vadd.f32 %v3493, %v3536
    %v3548 = vadd.f32 %v3494, %v3539
    %v3549 = vadd.f32 %v3495, %v3542
    %v3550 = vadd.f32 %v3496, %v3545
    %s3551 = scalar_lea.vmem [#allocation2], 448
    %v3552 = vld [vmem:[%s3551] sm:$0xff]
    %v3553 = vld [vmem:[%s3551 + $0x8] sm:$0xff]
    %v3554 = vld [vmem:[%s3551 + $0x10] sm:$0xff]
    %v3555 = vld [vmem:[%s3551 + $0x18] sm:$0xff]
    %v3556 = vld [vmem:[%s3551 + $0x20] sm:$0xff]
    %v3557 = vld [vmem:[%s3551 + $0x28] sm:$0xff]
    %v3558 = vld [vmem:[%s3551 + $0x30] sm:$0xff]
    %v3559 = vld [vmem:[%s3551 + $0x38] sm:$0xff]
    %v3561 = vsel %vm1675, %v3114, 0
    %v3564 = vsel %vm1675, %v3115, 0
    %v3567 = vsel %vm1675, %v3116, 0
    %v3570 = vsel %vm1675, %v3117, 0
    %3572 = vmatpush.msra.mxu0 0.0
    %3573 = vmatpush.msra.mxu0 0.0
    %3574 = vmatpush.msra.mxu0 0.0
    %3575 = vmatpush.msra.mxu0 0.0
    %3576 = vmatpush.msra.mxu0 0.0
    %3577 = vmatpush.msra.mxu0 0.0
    %3578 = vmatpush.msra.mxu0 0.0
    %3579 = vmatpush.msra.mxu0 0.0
    %3580 = vmatpush.msra.mxu0 %v3559
    %3581 = vmatpush.msra.mxu0 %v3558
    %3582 = vmatpush.msra.mxu0 %v3557
    %3583 = vmatpush.msra.mxu0 %v3556
    %3584 = vmatpush.msra.mxu0 %v3555
    %3585 = vmatpush.msra.mxu0 %v3554
    %3586 = vmatpush.msra.mxu0 %v3553
    %3587 = vmatpush.msra.mxu0 %v3552
    %3588 = vmatmul.f32.gmra.mxu0 %v3561
    %v3589 = vpop.f32.mrf.mxu0
    %v3590 = vadd.f32 0.0, %v3589
    %3591 = vmatmul.f32.gmra.mxu0 %v3564
    %v3592 = vpop.f32.mrf.mxu0
    %v3593 = vadd.f32 0.0, %v3592
    %3594 = vmatmul.f32.gmra.mxu0 %v3567
    %v3595 = vpop.f32.mrf.mxu0
    %v3596 = vadd.f32 0.0, %v3595
    %3597 = vmatmul.f32.gmra.mxu0 %v3570
    %v3598 = vpop.f32.mrf.mxu0
    %v3599 = vadd.f32 0.0, %v3598
    %3600 = vdwg.mxu0
    %v3601 = vadd.f32 %v3547, %v3590
    %v3602 = vadd.f32 %v3548, %v3593
    %v3603 = vadd.f32 %v3549, %v3596
    %v3604 = vadd.f32 %v3550, %v3599
    %s3605 = scalar_lea.vmem [#allocation2], 512
    %v3606 = vld [vmem:[%s3605] sm:$0xff]
    %v3607 = vld [vmem:[%s3605 + $0x8] sm:$0xff]
    %v3608 = vld [vmem:[%s3605 + $0x10] sm:$0xff]
    %v3609 = vld [vmem:[%s3605 + $0x18] sm:$0xff]
    %v3610 = vld [vmem:[%s3605 + $0x20] sm:$0xff]
    %v3611 = vld [vmem:[%s3605 + $0x28] sm:$0xff]
    %v3612 = vld [vmem:[%s3605 + $0x30] sm:$0xff]
    %v3613 = vld [vmem:[%s3605 + $0x38] sm:$0xff]
    %v3615 = vsel %vm1675, %v3118, 0
    %v3618 = vsel %vm1675, %v3119, 0
    %v3621 = vsel %vm1675, %v3120, 0
    %v3624 = vsel %vm1675, %v3121, 0
    %3626 = vmatpush.msra.mxu0 0.0
    %3627 = vmatpush.msra.mxu0 0.0
    %3628 = vmatpush.msra.mxu0 0.0
    %3629 = vmatpush.msra.mxu0 0.0
    %3630 = vmatpush.msra.mxu0 0.0
    %3631 = vmatpush.msra.mxu0 0.0
    %3632 = vmatpush.msra.mxu0 0.0
    %3633 = vmatpush.msra.mxu0 0.0
    %3634 = vmatpush.msra.mxu0 %v3613
    %3635 = vmatpush.msra.mxu0 %v3612
    %3636 = vmatpush.msra.mxu0 %v3611
    %3637 = vmatpush.msra.mxu0 %v3610
    %3638 = vmatpush.msra.mxu0 %v3609
    %3639 = vmatpush.msra.mxu0 %v3608
    %3640 = vmatpush.msra.mxu0 %v3607
    %3641 = vmatpush.msra.mxu0 %v3606
    %3642 = vmatmul.f32.gmra.mxu0 %v3615
    %v3643 = vpop.f32.mrf.mxu0
    %v3644 = vadd.f32 0.0, %v3643
    %3645 = vmatmul.f32.gmra.mxu0 %v3618
    %v3646 = vpop.f32.mrf.mxu0
    %v3647 = vadd.f32 0.0, %v3646
    %3648 = vmatmul.f32.gmra.mxu0 %v3621
    %v3649 = vpop.f32.mrf.mxu0
    %v3650 = vadd.f32 0.0, %v3649
    %3651 = vmatmul.f32.gmra.mxu0 %v3624
    %v3652 = vpop.f32.mrf.mxu0
    %v3653 = vadd.f32 0.0, %v3652
    %3654 = vdwg.mxu0
    %v3655 = vadd.f32 %v3601, %v3644
    %v3656 = vadd.f32 %v3602, %v3647
    %v3657 = vadd.f32 %v3603, %v3650
    %v3658 = vadd.f32 %v3604, %v3653
    %s3659 = scalar_lea.vmem [#allocation2], 576
    %v3660 = vld [vmem:[%s3659] sm:$0xff]
    %v3661 = vld [vmem:[%s3659 + $0x8] sm:$0xff]
    %v3662 = vld [vmem:[%s3659 + $0x10] sm:$0xff]
    %v3663 = vld [vmem:[%s3659 + $0x18] sm:$0xff]
    %v3664 = vld [vmem:[%s3659 + $0x20] sm:$0xff]
    %v3665 = vld [vmem:[%s3659 + $0x28] sm:$0xff]
    %v3666 = vld [vmem:[%s3659 + $0x30] sm:$0xff]
    %v3667 = vld [vmem:[%s3659 + $0x38] sm:$0xff]
    %v3669 = vsel %vm1675, %v3122, 0
    %v3672 = vsel %vm1675, %v3123, 0
    %v3675 = vsel %vm1675, %v3124, 0
    %v3678 = vsel %vm1675, %v3125, 0
    %3680 = vmatpush.msra.mxu0 0.0
    %3681 = vmatpush.msra.mxu0 0.0
    %3682 = vmatpush.msra.mxu0 0.0
    %3683 = vmatpush.msra.mxu0 0.0
    %3684 = vmatpush.msra.mxu0 0.0
    %3685 = vmatpush.msra.mxu0 0.0
    %3686 = vmatpush.msra.mxu0 0.0
    %3687 = vmatpush.msra.mxu0 0.0
    %3688 = vmatpush.msra.mxu0 %v3667
    %3689 = vmatpush.msra.mxu0 %v3666
    %3690 = vmatpush.msra.mxu0 %v3665
    %3691 = vmatpush.msra.mxu0 %v3664
    %3692 = vmatpush.msra.mxu0 %v3663
    %3693 = vmatpush.msra.mxu0 %v3662
    %3694 = vmatpush.msra.mxu0 %v3661
    %3695 = vmatpush.msra.mxu0 %v3660
    %3696 = vmatmul.f32.gmra.mxu0 %v3669
    %v3697 = vpop.f32.mrf.mxu0
    %v3698 = vadd.f32 0.0, %v3697
    %3699 = vmatmul.f32.gmra.mxu0 %v3672
    %v3700 = vpop.f32.mrf.mxu0
    %v3701 = vadd.f32 0.0, %v3700
    %3702 = vmatmul.f32.gmra.mxu0 %v3675
    %v3703 = vpop.f32.mrf.mxu0
    %v3704 = vadd.f32 0.0, %v3703
    %3705 = vmatmul.f32.gmra.mxu0 %v3678
    %v3706 = vpop.f32.mrf.mxu0
    %v3707 = vadd.f32 0.0, %v3706
    %3708 = vdwg.mxu0
    %v3709 = vadd.f32 %v3655, %v3698
    %v3710 = vadd.f32 %v3656, %v3701
    %v3711 = vadd.f32 %v3657, %v3704
    %v3712 = vadd.f32 %v3658, %v3707
    %s3713 = scalar_lea.vmem [#allocation2], 640
    %v3714 = vld [vmem:[%s3713] sm:$0xff]
    %v3715 = vld [vmem:[%s3713 + $0x8] sm:$0xff]
    %v3716 = vld [vmem:[%s3713 + $0x10] sm:$0xff]
    %v3717 = vld [vmem:[%s3713 + $0x18] sm:$0xff]
    %v3718 = vld [vmem:[%s3713 + $0x20] sm:$0xff]
    %v3719 = vld [vmem:[%s3713 + $0x28] sm:$0xff]
    %v3720 = vld [vmem:[%s3713 + $0x30] sm:$0xff]
    %v3721 = vld [vmem:[%s3713 + $0x38] sm:$0xff]
    %v3723 = vsel %vm1675, %v3126, 0
    %v3726 = vsel %vm1675, %v3127, 0
    %v3729 = vsel %vm1675, %v3128, 0
    %v3732 = vsel %vm1675, %v3129, 0
    %3734 = vmatpush.msra.mxu0 0.0
    %3735 = vmatpush.msra.mxu0 0.0
    %3736 = vmatpush.msra.mxu0 0.0
    %3737 = vmatpush.msra.mxu0 0.0
    %3738 = vmatpush.msra.mxu0 0.0
    %3739 = vmatpush.msra.mxu0 0.0
    %3740 = vmatpush.msra.mxu0 0.0
    %3741 = vmatpush.msra.mxu0 0.0
    %3742 = vmatpush.msra.mxu0 %v3721
    %3743 = vmatpush.msra.mxu0 %v3720
    %3744 = vmatpush.msra.mxu0 %v3719
    %3745 = vmatpush.msra.mxu0 %v3718
    %3746 = vmatpush.msra.mxu0 %v3717
    %3747 = vmatpush.msra.mxu0 %v3716
    %3748 = vmatpush.msra.mxu0 %v3715
    %3749 = vmatpush.msra.mxu0 %v3714
    %3750 = vmatmul.f32.gmra.mxu0 %v3723
    %v3751 = vpop.f32.mrf.mxu0
    %v3752 = vadd.f32 0.0, %v3751
    %3753 = vmatmul.f32.gmra.mxu0 %v3726
    %v3754 = vpop.f32.mrf.mxu0
    %v3755 = vadd.f32 0.0, %v3754
    %3756 = vmatmul.f32.gmra.mxu0 %v3729
    %v3757 = vpop.f32.mrf.mxu0
    %v3758 = vadd.f32 0.0, %v3757
    %3759 = vmatmul.f32.gmra.mxu0 %v3732
    %v3760 = vpop.f32.mrf.mxu0
    %v3761 = vadd.f32 0.0, %v3760
    %3762 = vdwg.mxu0
    %v3763 = vadd.f32 %v3709, %v3752
    %v3764 = vadd.f32 %v3710, %v3755
    %v3765 = vadd.f32 %v3711, %v3758
    %v3766 = vadd.f32 %v3712, %v3761
    %s3767 = scalar_lea.vmem [#allocation2], 704
    %v3768 = vld [vmem:[%s3767] sm:$0xff]
    %v3769 = vld [vmem:[%s3767 + $0x8] sm:$0xff]
    %v3770 = vld [vmem:[%s3767 + $0x10] sm:$0xff]
    %v3771 = vld [vmem:[%s3767 + $0x18] sm:$0xff]
    %v3772 = vld [vmem:[%s3767 + $0x20] sm:$0xff]
    %v3773 = vld [vmem:[%s3767 + $0x28] sm:$0xff]
    %v3774 = vld [vmem:[%s3767 + $0x30] sm:$0xff]
    %v3775 = vld [vmem:[%s3767 + $0x38] sm:$0xff]
    %v3777 = vsel %vm1675, %v3130, 0
    %v3780 = vsel %vm1675, %v3131, 0
    %v3783 = vsel %vm1675, %v3132, 0
    %v3786 = vsel %vm1675, %v3133, 0
    %3788 = vmatpush.msra.mxu0 0.0
    %3789 = vmatpush.msra.mxu0 0.0
    %3790 = vmatpush.msra.mxu0 0.0
    %3791 = vmatpush.msra.mxu0 0.0
    %3792 = vmatpush.msra.mxu0 0.0
    %3793 = vmatpush.msra.mxu0 0.0
    %3794 = vmatpush.msra.mxu0 0.0
    %3795 = vmatpush.msra.mxu0 0.0
    %3796 = vmatpush.msra.mxu0 %v3775
    %3797 = vmatpush.msra.mxu0 %v3774
    %3798 = vmatpush.msra.mxu0 %v3773
    %3799 = vmatpush.msra.mxu0 %v3772
    %3800 = vmatpush.msra.mxu0 %v3771
    %3801 = vmatpush.msra.mxu0 %v3770
    %3802 = vmatpush.msra.mxu0 %v3769
    %3803 = vmatpush.msra.mxu0 %v3768
    %3804 = vmatmul.f32.gmra.mxu0 %v3777
    %v3805 = vpop.f32.mrf.mxu0
    %v3806 = vadd.f32 0.0, %v3805
    %3807 = vmatmul.f32.gmra.mxu0 %v3780
    %v3808 = vpop.f32.mrf.mxu0
    %v3809 = vadd.f32 0.0, %v3808
    %3810 = vmatmul.f32.gmra.mxu0 %v3783
    %v3811 = vpop.f32.mrf.mxu0
    %v3812 = vadd.f32 0.0, %v3811
    %3813 = vmatmul.f32.gmra.mxu0 %v3786
    %v3814 = vpop.f32.mrf.mxu0
    %v3815 = vadd.f32 0.0, %v3814
    %3816 = vdwg.mxu0
    %v3817 = vadd.f32 %v3763, %v3806
    %v3818 = vadd.f32 %v3764, %v3809
    %v3819 = vadd.f32 %v3765, %v3812
    %v3820 = vadd.f32 %v3766, %v3815
    %s3821 = scalar_lea.vmem [#allocation2], 768
    %v3822 = vld [vmem:[%s3821] sm:$0xff]
    %v3823 = vld [vmem:[%s3821 + $0x8] sm:$0xff]
    %v3824 = vld [vmem:[%s3821 + $0x10] sm:$0xff]
    %v3825 = vld [vmem:[%s3821 + $0x18] sm:$0xff]
    %v3826 = vld [vmem:[%s3821 + $0x20] sm:$0xff]
    %v3827 = vld [vmem:[%s3821 + $0x28] sm:$0xff]
    %v3828 = vld [vmem:[%s3821 + $0x30] sm:$0xff]
    %v3829 = vld [vmem:[%s3821 + $0x38] sm:$0xff]
    %v3831 = vsel %vm1675, %v3134, 0
    %v3834 = vsel %vm1675, %v3135, 0
    %v3837 = vsel %vm1675, %v3136, 0
    %v3840 = vsel %vm1675, %v3137, 0
    %3842 = vmatpush.msra.mxu0 0.0
    %3843 = vmatpush.msra.mxu0 0.0
    %3844 = vmatpush.msra.mxu0 0.0
    %3845 = vmatpush.msra.mxu0 0.0
    %3846 = vmatpush.msra.mxu0 0.0
    %3847 = vmatpush.msra.mxu0 0.0
    %3848 = vmatpush.msra.mxu0 0.0
    %3849 = vmatpush.msra.mxu0 0.0
    %3850 = vmatpush.msra.mxu0 %v3829
    %3851 = vmatpush.msra.mxu0 %v3828
    %3852 = vmatpush.msra.mxu0 %v3827
    %3853 = vmatpush.msra.mxu0 %v3826
    %3854 = vmatpush.msra.mxu0 %v3825
    %3855 = vmatpush.msra.mxu0 %v3824
    %3856 = vmatpush.msra.mxu0 %v3823
    %3857 = vmatpush.msra.mxu0 %v3822
    %3858 = vmatmul.f32.gmra.mxu0 %v3831
    %v3859 = vpop.f32.mrf.mxu0
    %v3860 = vadd.f32 0.0, %v3859
    %3861 = vmatmul.f32.gmra.mxu0 %v3834
    %v3862 = vpop.f32.mrf.mxu0
    %v3863 = vadd.f32 0.0, %v3862
    %3864 = vmatmul.f32.gmra.mxu0 %v3837
    %v3865 = vpop.f32.mrf.mxu0
    %v3866 = vadd.f32 0.0, %v3865
    %3867 = vmatmul.f32.gmra.mxu0 %v3840
    %v3868 = vpop.f32.mrf.mxu0
    %v3869 = vadd.f32 0.0, %v3868
    %3870 = vdwg.mxu0
    %v3871 = vadd.f32 %v3817, %v3860
    %v3872 = vadd.f32 %v3818, %v3863
    %v3873 = vadd.f32 %v3819, %v3866
    %v3874 = vadd.f32 %v3820, %v3869
    %s3875 = scalar_lea.vmem [#allocation2], 832
    %v3876 = vld [vmem:[%s3875] sm:$0xff]
    %v3877 = vld [vmem:[%s3875 + $0x8] sm:$0xff]
    %v3878 = vld [vmem:[%s3875 + $0x10] sm:$0xff]
    %v3879 = vld [vmem:[%s3875 + $0x18] sm:$0xff]
    %v3880 = vld [vmem:[%s3875 + $0x20] sm:$0xff]
    %v3881 = vld [vmem:[%s3875 + $0x28] sm:$0xff]
    %v3882 = vld [vmem:[%s3875 + $0x30] sm:$0xff]
    %v3883 = vld [vmem:[%s3875 + $0x38] sm:$0xff]
    %v3885 = vsel %vm1675, %v3138, 0
    %v3888 = vsel %vm1675, %v3139, 0
    %v3891 = vsel %vm1675, %v3140, 0
    %v3894 = vsel %vm1675, %v3141, 0
    %3896 = vmatpush.msra.mxu0 0.0
    %3897 = vmatpush.msra.mxu0 0.0
    %3898 = vmatpush.msra.mxu0 0.0
    %3899 = vmatpush.msra.mxu0 0.0
    %3900 = vmatpush.msra.mxu0 0.0
    %3901 = vmatpush.msra.mxu0 0.0
    %3902 = vmatpush.msra.mxu0 0.0
    %3903 = vmatpush.msra.mxu0 0.0
    %3904 = vmatpush.msra.mxu0 %v3883
    %3905 = vmatpush.msra.mxu0 %v3882
    %3906 = vmatpush.msra.mxu0 %v3881
    %3907 = vmatpush.msra.mxu0 %v3880
    %3908 = vmatpush.msra.mxu0 %v3879
    %3909 = vmatpush.msra.mxu0 %v3878
    %3910 = vmatpush.msra.mxu0 %v3877
    %3911 = vmatpush.msra.mxu0 %v3876
    %3912 = vmatmul.f32.gmra.mxu0 %v3885
    %v3913 = vpop.f32.mrf.mxu0
    %v3914 = vadd.f32 0.0, %v3913
    %3915 = vmatmul.f32.gmra.mxu0 %v3888
    %v3916 = vpop.f32.mrf.mxu0
    %v3917 = vadd.f32 0.0, %v3916
    %3918 = vmatmul.f32.gmra.mxu0 %v3891
    %v3919 = vpop.f32.mrf.mxu0
    %v3920 = vadd.f32 0.0, %v3919
    %3921 = vmatmul.f32.gmra.mxu0 %v3894
    %v3922 = vpop.f32.mrf.mxu0
    %v3923 = vadd.f32 0.0, %v3922
    %3924 = vdwg.mxu0
    %v3925 = vadd.f32 %v3871, %v3914
    %v3926 = vadd.f32 %v3872, %v3917
    %v3927 = vadd.f32 %v3873, %v3920
    %v3928 = vadd.f32 %v3874, %v3923
    %s3929 = scalar_lea.vmem [#allocation2], 896
    %v3930 = vld [vmem:[%s3929] sm:$0xff]
    %v3931 = vld [vmem:[%s3929 + $0x8] sm:$0xff]
    %v3932 = vld [vmem:[%s3929 + $0x10] sm:$0xff]
    %v3933 = vld [vmem:[%s3929 + $0x18] sm:$0xff]
    %v3934 = vld [vmem:[%s3929 + $0x20] sm:$0xff]
    %v3935 = vld [vmem:[%s3929 + $0x28] sm:$0xff]
    %v3936 = vld [vmem:[%s3929 + $0x30] sm:$0xff]
    %v3937 = vld [vmem:[%s3929 + $0x38] sm:$0xff]
    %v3939 = vsel %vm1675, %v3142, 0
    %v3942 = vsel %vm1675, %v3143, 0
    %v3945 = vsel %vm1675, %v3144, 0
    %v3948 = vsel %vm1675, %v3145, 0
    %3950 = vmatpush.msra.mxu0 0.0
    %3951 = vmatpush.msra.mxu0 0.0
    %3952 = vmatpush.msra.mxu0 0.0
    %3953 = vmatpush.msra.mxu0 0.0
    %3954 = vmatpush.msra.mxu0 0.0
    %3955 = vmatpush.msra.mxu0 0.0
    %3956 = vmatpush.msra.mxu0 0.0
    %3957 = vmatpush.msra.mxu0 0.0
    %3958 = vmatpush.msra.mxu0 %v3937
    %3959 = vmatpush.msra.mxu0 %v3936
    %3960 = vmatpush.msra.mxu0 %v3935
    %3961 = vmatpush.msra.mxu0 %v3934
    %3962 = vmatpush.msra.mxu0 %v3933
    %3963 = vmatpush.msra.mxu0 %v3932
    %3964 = vmatpush.msra.mxu0 %v3931
    %3965 = vmatpush.msra.mxu0 %v3930
    %3966 = vmatmul.f32.gmra.mxu0 %v3939
    %v3967 = vpop.f32.mrf.mxu0
    %v3968 = vadd.f32 0.0, %v3967
    %3969 = vmatmul.f32.gmra.mxu0 %v3942
    %v3970 = vpop.f32.mrf.mxu0
    %v3971 = vadd.f32 0.0, %v3970
    %3972 = vmatmul.f32.gmra.mxu0 %v3945
    %v3973 = vpop.f32.mrf.mxu0
    %v3974 = vadd.f32 0.0, %v3973
    %3975 = vmatmul.f32.gmra.mxu0 %v3948
    %v3976 = vpop.f32.mrf.mxu0
    %v3977 = vadd.f32 0.0, %v3976
    %3978 = vdwg.mxu0
    %v3979 = vadd.f32 %v3925, %v3968
    %v3980 = vadd.f32 %v3926, %v3971
    %v3981 = vadd.f32 %v3927, %v3974
    %v3982 = vadd.f32 %v3928, %v3977
    %s3983 = scalar_lea.vmem [#allocation2], 960
    %v3984 = vld [vmem:[%s3983] sm:$0xff]
    %v3985 = vld [vmem:[%s3983 + $0x8] sm:$0xff]
    %v3986 = vld [vmem:[%s3983 + $0x10] sm:$0xff]
    %v3987 = vld [vmem:[%s3983 + $0x18] sm:$0xff]
    %v3988 = vld [vmem:[%s3983 + $0x20] sm:$0xff]
    %v3989 = vld [vmem:[%s3983 + $0x28] sm:$0xff]
    %v3990 = vld [vmem:[%s3983 + $0x30] sm:$0xff]
    %v3991 = vld [vmem:[%s3983 + $0x38] sm:$0xff]
    %v3993 = vsel %vm1675, %v3146, 0
    %v3996 = vsel %vm1675, %v3147, 0
    %v3999 = vsel %vm1675, %v3148, 0
    %v4002 = vsel %vm1675, %v3149, 0
    %4004 = vmatpush.msra.mxu0 0.0
    %4005 = vmatpush.msra.mxu0 0.0
    %4006 = vmatpush.msra.mxu0 0.0
    %4007 = vmatpush.msra.mxu0 0.0
    %4008 = vmatpush.msra.mxu0 0.0
    %4009 = vmatpush.msra.mxu0 0.0
    %4010 = vmatpush.msra.mxu0 0.0
    %4011 = vmatpush.msra.mxu0 0.0
    %4012 = vmatpush.msra.mxu0 %v3991
    %4013 = vmatpush.msra.mxu0 %v3990
    %4014 = vmatpush.msra.mxu0 %v3989
    %4015 = vmatpush.msra.mxu0 %v3988
    %4016 = vmatpush.msra.mxu0 %v3987
    %4017 = vmatpush.msra.mxu0 %v3986
    %4018 = vmatpush.msra.mxu0 %v3985
    %4019 = vmatpush.msra.mxu0 %v3984
    %4020 = vmatmul.f32.gmra.mxu0 %v3993
    %v4021 = vpop.f32.mrf.mxu0
    %v4022 = vadd.f32 0.0, %v4021
    %4023 = vmatmul.f32.gmra.mxu0 %v3996
    %v4024 = vpop.f32.mrf.mxu0
    %v4025 = vadd.f32 0.0, %v4024
    %4026 = vmatmul.f32.gmra.mxu0 %v3999
    %v4027 = vpop.f32.mrf.mxu0
    %v4028 = vadd.f32 0.0, %v4027
    %4029 = vmatmul.f32.gmra.mxu0 %v4002
    %v4030 = vpop.f32.mrf.mxu0
    %v4031 = vadd.f32 0.0, %v4030
    %4032 = vdwg.mxu0
    %v4033 = vadd.f32 %v3979, %v4022
    %v4034 = vadd.f32 %v3980, %v4025
    %v4035 = vadd.f32 %v3981, %v4028
    %v4036 = vadd.f32 %v3982, %v4031
    %s4037 = scalar_lea.vmem [#allocation2], 1024
    %v4038 = vld [vmem:[%s4037] sm:$0xff]
    %v4039 = vld [vmem:[%s4037 + $0x8] sm:$0xff]
    %v4040 = vld [vmem:[%s4037 + $0x10] sm:$0xff]
    %v4041 = vld [vmem:[%s4037 + $0x18] sm:$0xff]
    %v4042 = vld [vmem:[%s4037 + $0x20] sm:$0xff]
    %v4043 = vld [vmem:[%s4037 + $0x28] sm:$0xff]
    %v4044 = vld [vmem:[%s4037 + $0x30] sm:$0xff]
    %v4045 = vld [vmem:[%s4037 + $0x38] sm:$0xff]
    %v4047 = vsel %vm1675, %v3150, 0
    %v4050 = vsel %vm1675, %v3151, 0
    %v4053 = vsel %vm1675, %v3152, 0
    %v4056 = vsel %vm1675, %v3153, 0
    %4058 = vmatpush.msra.mxu0 0.0
    %4059 = vmatpush.msra.mxu0 0.0
    %4060 = vmatpush.msra.mxu0 0.0
    %4061 = vmatpush.msra.mxu0 0.0
    %4062 = vmatpush.msra.mxu0 0.0
    %4063 = vmatpush.msra.mxu0 0.0
    %4064 = vmatpush.msra.mxu0 0.0
    %4065 = vmatpush.msra.mxu0 0.0
    %4066 = vmatpush.msra.mxu0 %v4045
    %4067 = vmatpush.msra.mxu0 %v4044
    %4068 = vmatpush.msra.mxu0 %v4043
    %4069 = vmatpush.msra.mxu0 %v4042
    %4070 = vmatpush.msra.mxu0 %v4041
    %4071 = vmatpush.msra.mxu0 %v4040
    %4072 = vmatpush.msra.mxu0 %v4039
    %4073 = vmatpush.msra.mxu0 %v4038
    %4074 = vmatmul.f32.gmra.mxu0 %v4047
    %v4075 = vpop.f32.mrf.mxu0
    %v4076 = vadd.f32 0.0, %v4075
    %4077 = vmatmul.f32.gmra.mxu0 %v4050
    %v4078 = vpop.f32.mrf.mxu0
    %v4079 = vadd.f32 0.0, %v4078
    %4080 = vmatmul.f32.gmra.mxu0 %v4053
    %v4081 = vpop.f32.mrf.mxu0
    %v4082 = vadd.f32 0.0, %v4081
    %4083 = vmatmul.f32.gmra.mxu0 %v4056
    %v4084 = vpop.f32.mrf.mxu0
    %v4085 = vadd.f32 0.0, %v4084
    %4086 = vdwg.mxu0
    %v4087 = vadd.f32 %v4033, %v4076
    %v4088 = vadd.f32 %v4034, %v4079
    %v4089 = vadd.f32 %v4035, %v4082
    %v4090 = vadd.f32 %v4036, %v4085
    %s4091 = scalar_lea.vmem [#allocation2], 1088
    %v4092 = vld [vmem:[%s4091] sm:$0xff]
    %v4093 = vld [vmem:[%s4091 + $0x8] sm:$0xff]
    %v4094 = vld [vmem:[%s4091 + $0x10] sm:$0xff]
    %v4095 = vld [vmem:[%s4091 + $0x18] sm:$0xff]
    %v4096 = vld [vmem:[%s4091 + $0x20] sm:$0xff]
    %v4097 = vld [vmem:[%s4091 + $0x28] sm:$0xff]
    %v4098 = vld [vmem:[%s4091 + $0x30] sm:$0xff]
    %v4099 = vld [vmem:[%s4091 + $0x38] sm:$0xff]
    %v4101 = vsel %vm1675, %v3154, 0
    %v4104 = vsel %vm1675, %v3155, 0
    %v4107 = vsel %vm1675, %v3156, 0
    %v4110 = vsel %vm1675, %v3157, 0
    %4112 = vmatpush.msra.mxu0 0.0
    %4113 = vmatpush.msra.mxu0 0.0
    %4114 = vmatpush.msra.mxu0 0.0
    %4115 = vmatpush.msra.mxu0 0.0
    %4116 = vmatpush.msra.mxu0 0.0
    %4117 = vmatpush.msra.mxu0 0.0
    %4118 = vmatpush.msra.mxu0 0.0
    %4119 = vmatpush.msra.mxu0 0.0
    %4120 = vmatpush.msra.mxu0 %v4099
    %4121 = vmatpush.msra.mxu0 %v4098
    %4122 = vmatpush.msra.mxu0 %v4097
    %4123 = vmatpush.msra.mxu0 %v4096
    %4124 = vmatpush.msra.mxu0 %v4095
    %4125 = vmatpush.msra.mxu0 %v4094
    %4126 = vmatpush.msra.mxu0 %v4093
    %4127 = vmatpush.msra.mxu0 %v4092
    %4128 = vmatmul.f32.gmra.mxu0 %v4101
    %v4129 = vpop.f32.mrf.mxu0
    %v4130 = vadd.f32 0.0, %v4129
    %4131 = vmatmul.f32.gmra.mxu0 %v4104
    %v4132 = vpop.f32.mrf.mxu0
    %v4133 = vadd.f32 0.0, %v4132
    %4134 = vmatmul.f32.gmra.mxu0 %v4107
    %v4135 = vpop.f32.mrf.mxu0
    %v4136 = vadd.f32 0.0, %v4135
    %4137 = vmatmul.f32.gmra.mxu0 %v4110
    %v4138 = vpop.f32.mrf.mxu0
    %v4139 = vadd.f32 0.0, %v4138
    %4140 = vdwg.mxu0
    %v4141 = vadd.f32 %v4087, %v4130
    %v4142 = vadd.f32 %v4088, %v4133
    %v4143 = vadd.f32 %v4089, %v4136
    %v4144 = vadd.f32 %v4090, %v4139
    %s4145 = scalar_lea.vmem [#allocation2], 1152
    %v4146 = vld [vmem:[%s4145] sm:$0xff]
    %v4147 = vld [vmem:[%s4145 + $0x8] sm:$0xff]
    %v4148 = vld [vmem:[%s4145 + $0x10] sm:$0xff]
    %v4149 = vld [vmem:[%s4145 + $0x18] sm:$0xff]
    %v4150 = vld [vmem:[%s4145 + $0x20] sm:$0xff]
    %v4151 = vld [vmem:[%s4145 + $0x28] sm:$0xff]
    %v4152 = vld [vmem:[%s4145 + $0x30] sm:$0xff]
    %v4153 = vld [vmem:[%s4145 + $0x38] sm:$0xff]
    %v4155 = vsel %vm1675, %v3158, 0
    %v4158 = vsel %vm1675, %v3159, 0
    %v4161 = vsel %vm1675, %v3160, 0
    %v4164 = vsel %vm1675, %v3161, 0
    %4166 = vmatpush.msra.mxu0 0.0
    %4167 = vmatpush.msra.mxu0 0.0
    %4168 = vmatpush.msra.mxu0 0.0
    %4169 = vmatpush.msra.mxu0 0.0
    %4170 = vmatpush.msra.mxu0 0.0
    %4171 = vmatpush.msra.mxu0 0.0
    %4172 = vmatpush.msra.mxu0 0.0
    %4173 = vmatpush.msra.mxu0 0.0
    %4174 = vmatpush.msra.mxu0 %v4153
    %4175 = vmatpush.msra.mxu0 %v4152
    %4176 = vmatpush.msra.mxu0 %v4151
    %4177 = vmatpush.msra.mxu0 %v4150
    %4178 = vmatpush.msra.mxu0 %v4149
    %4179 = vmatpush.msra.mxu0 %v4148
    %4180 = vmatpush.msra.mxu0 %v4147
    %4181 = vmatpush.msra.mxu0 %v4146
    %4182 = vmatmul.f32.gmra.mxu0 %v4155
    %v4183 = vpop.f32.mrf.mxu0
    %v4184 = vadd.f32 0.0, %v4183
    %4185 = vmatmul.f32.gmra.mxu0 %v4158
    %v4186 = vpop.f32.mrf.mxu0
    %v4187 = vadd.f32 0.0, %v4186
    %4188 = vmatmul.f32.gmra.mxu0 %v4161
    %v4189 = vpop.f32.mrf.mxu0
    %v4190 = vadd.f32 0.0, %v4189
    %4191 = vmatmul.f32.gmra.mxu0 %v4164
    %v4192 = vpop.f32.mrf.mxu0
    %v4193 = vadd.f32 0.0, %v4192
    %4194 = vdwg.mxu0
    %v4195 = vadd.f32 %v4141, %v4184
    %v4196 = vadd.f32 %v4142, %v4187
    %v4197 = vadd.f32 %v4143, %v4190
    %v4198 = vadd.f32 %v4144, %v4193
    %s4199 = scalar_lea.vmem [#allocation2], 1216
    %v4200 = vld [vmem:[%s4199] sm:$0xff]
    %v4201 = vld [vmem:[%s4199 + $0x8] sm:$0xff]
    %v4202 = vld [vmem:[%s4199 + $0x10] sm:$0xff]
    %v4203 = vld [vmem:[%s4199 + $0x18] sm:$0xff]
    %v4204 = vld [vmem:[%s4199 + $0x20] sm:$0xff]
    %v4205 = vld [vmem:[%s4199 + $0x28] sm:$0xff]
    %v4206 = vld [vmem:[%s4199 + $0x30] sm:$0xff]
    %v4207 = vld [vmem:[%s4199 + $0x38] sm:$0xff]
    %v4209 = vsel %vm1675, %v3162, 0
    %v4212 = vsel %vm1675, %v3163, 0
    %v4215 = vsel %vm1675, %v3164, 0
    %v4218 = vsel %vm1675, %v3165, 0
    %4220 = vmatpush.msra.mxu0 0.0
    %4221 = vmatpush.msra.mxu0 0.0
    %4222 = vmatpush.msra.mxu0 0.0
    %4223 = vmatpush.msra.mxu0 0.0
    %4224 = vmatpush.msra.mxu0 0.0
    %4225 = vmatpush.msra.mxu0 0.0
    %4226 = vmatpush.msra.mxu0 0.0
    %4227 = vmatpush.msra.mxu0 0.0
    %4228 = vmatpush.msra.mxu0 %v4207
    %4229 = vmatpush.msra.mxu0 %v4206
    %4230 = vmatpush.msra.mxu0 %v4205
    %4231 = vmatpush.msra.mxu0 %v4204
    %4232 = vmatpush.msra.mxu0 %v4203
    %4233 = vmatpush.msra.mxu0 %v4202
    %4234 = vmatpush.msra.mxu0 %v4201
    %4235 = vmatpush.msra.mxu0 %v4200
    %4236 = vmatmul.f32.gmra.mxu0 %v4209
    %v4237 = vpop.f32.mrf.mxu0
    %v4238 = vadd.f32 0.0, %v4237
    %4239 = vmatmul.f32.gmra.mxu0 %v4212
    %v4240 = vpop.f32.mrf.mxu0
    %v4241 = vadd.f32 0.0, %v4240
    %4242 = vmatmul.f32.gmra.mxu0 %v4215
    %v4243 = vpop.f32.mrf.mxu0
    %v4244 = vadd.f32 0.0, %v4243
    %4245 = vmatmul.f32.gmra.mxu0 %v4218
    %v4246 = vpop.f32.mrf.mxu0
    %v4247 = vadd.f32 0.0, %v4246
    %4248 = vdwg.mxu0
    %v4249 = vadd.f32 %v4195, %v4238
    %v4250 = vadd.f32 %v4196, %v4241
    %v4251 = vadd.f32 %v4197, %v4244
    %v4252 = vadd.f32 %v4198, %v4247
    %s4253 = scalar_lea.vmem [#allocation2], 1280
    %v4254 = vld [vmem:[%s4253] sm:$0xff]
    %v4255 = vld [vmem:[%s4253 + $0x8] sm:$0xff]
    %v4256 = vld [vmem:[%s4253 + $0x10] sm:$0xff]
    %v4257 = vld [vmem:[%s4253 + $0x18] sm:$0xff]
    %v4258 = vld [vmem:[%s4253 + $0x20] sm:$0xff]
    %v4259 = vld [vmem:[%s4253 + $0x28] sm:$0xff]
    %v4260 = vld [vmem:[%s4253 + $0x30] sm:$0xff]
    %v4261 = vld [vmem:[%s4253 + $0x38] sm:$0xff]
    %v4263 = vsel %vm1675, %v3166, 0
    %v4266 = vsel %vm1675, %v3167, 0
    %v4269 = vsel %vm1675, %v3168, 0
    %v4272 = vsel %vm1675, %v3169, 0
    %4274 = vmatpush.msra.mxu0 0.0
    %4275 = vmatpush.msra.mxu0 0.0
    %4276 = vmatpush.msra.mxu0 0.0
    %4277 = vmatpush.msra.mxu0 0.0
    %4278 = vmatpush.msra.mxu0 0.0
    %4279 = vmatpush.msra.mxu0 0.0
    %4280 = vmatpush.msra.mxu0 0.0
    %4281 = vmatpush.msra.mxu0 0.0
    %4282 = vmatpush.msra.mxu0 %v4261
    %4283 = vmatpush.msra.mxu0 %v4260
    %4284 = vmatpush.msra.mxu0 %v4259
    %4285 = vmatpush.msra.mxu0 %v4258
    %4286 = vmatpush.msra.mxu0 %v4257
    %4287 = vmatpush.msra.mxu0 %v4256
    %4288 = vmatpush.msra.mxu0 %v4255
    %4289 = vmatpush.msra.mxu0 %v4254
    %4290 = vmatmul.f32.gmra.mxu0 %v4263
    %v4291 = vpop.f32.mrf.mxu0
    %v4292 = vadd.f32 0.0, %v4291
    %4293 = vmatmul.f32.gmra.mxu0 %v4266
    %v4294 = vpop.f32.mrf.mxu0
    %v4295 = vadd.f32 0.0, %v4294
    %4296 = vmatmul.f32.gmra.mxu0 %v4269
    %v4297 = vpop.f32.mrf.mxu0
    %v4298 = vadd.f32 0.0, %v4297
    %4299 = vmatmul.f32.gmra.mxu0 %v4272
    %v4300 = vpop.f32.mrf.mxu0
    %v4301 = vadd.f32 0.0, %v4300
    %4302 = vdwg.mxu0
    %v4303 = vadd.f32 %v4249, %v4292
    %v4304 = vadd.f32 %v4250, %v4295
    %v4305 = vadd.f32 %v4251, %v4298
    %v4306 = vadd.f32 %v4252, %v4301
    %s4307 = scalar_lea.vmem [#allocation2], 1344
    %v4308 = vld [vmem:[%s4307] sm:$0xff]
    %v4309 = vld [vmem:[%s4307 + $0x8] sm:$0xff]
    %v4310 = vld [vmem:[%s4307 + $0x10] sm:$0xff]
    %v4311 = vld [vmem:[%s4307 + $0x18] sm:$0xff]
    %v4312 = vld [vmem:[%s4307 + $0x20] sm:$0xff]
    %v4313 = vld [vmem:[%s4307 + $0x28] sm:$0xff]
    %v4314 = vld [vmem:[%s4307 + $0x30] sm:$0xff]
    %v4315 = vld [vmem:[%s4307 + $0x38] sm:$0xff]
    %v4317 = vsel %vm1675, %v3170, 0
    %v4320 = vsel %vm1675, %v3171, 0
    %v4323 = vsel %vm1675, %v3172, 0
    %v4326 = vsel %vm1675, %v3173, 0
    %4328 = vmatpush.msra.mxu0 0.0
    %4329 = vmatpush.msra.mxu0 0.0
    %4330 = vmatpush.msra.mxu0 0.0
    %4331 = vmatpush.msra.mxu0 0.0
    %4332 = vmatpush.msra.mxu0 0.0
    %4333 = vmatpush.msra.mxu0 0.0
    %4334 = vmatpush.msra.mxu0 0.0
    %4335 = vmatpush.msra.mxu0 0.0
    %4336 = vmatpush.msra.mxu0 %v4315
    %4337 = vmatpush.msra.mxu0 %v4314
    %4338 = vmatpush.msra.mxu0 %v4313
    %4339 = vmatpush.msra.mxu0 %v4312
    %4340 = vmatpush.msra.mxu0 %v4311
    %4341 = vmatpush.msra.mxu0 %v4310
    %4342 = vmatpush.msra.mxu0 %v4309
    %4343 = vmatpush.msra.mxu0 %v4308
    %4344 = vmatmul.f32.gmra.mxu0 %v4317
    %v4345 = vpop.f32.mrf.mxu0
    %v4346 = vadd.f32 0.0, %v4345
    %4347 = vmatmul.f32.gmra.mxu0 %v4320
    %v4348 = vpop.f32.mrf.mxu0
    %v4349 = vadd.f32 0.0, %v4348
    %4350 = vmatmul.f32.gmra.mxu0 %v4323
    %v4351 = vpop.f32.mrf.mxu0
    %v4352 = vadd.f32 0.0, %v4351
    %4353 = vmatmul.f32.gmra.mxu0 %v4326
    %v4354 = vpop.f32.mrf.mxu0
    %v4355 = vadd.f32 0.0, %v4354
    %4356 = vdwg.mxu0
    %v4357 = vadd.f32 %v4303, %v4346
    %v4358 = vadd.f32 %v4304, %v4349
    %v4359 = vadd.f32 %v4305, %v4352
    %v4360 = vadd.f32 %v4306, %v4355
    %s4361 = scalar_lea.vmem [#allocation2], 1408
    %v4362 = vld [vmem:[%s4361] sm:$0xff]
    %v4363 = vld [vmem:[%s4361 + $0x8] sm:$0xff]
    %v4364 = vld [vmem:[%s4361 + $0x10] sm:$0xff]
    %v4365 = vld [vmem:[%s4361 + $0x18] sm:$0xff]
    %v4366 = vld [vmem:[%s4361 + $0x20] sm:$0xff]
    %v4367 = vld [vmem:[%s4361 + $0x28] sm:$0xff]
    %v4368 = vld [vmem:[%s4361 + $0x30] sm:$0xff]
    %v4369 = vld [vmem:[%s4361 + $0x38] sm:$0xff]
    %v4371 = vsel %vm1675, %v3174, 0
    %v4374 = vsel %vm1675, %v3175, 0
    %v4377 = vsel %vm1675, %v3176, 0
    %v4380 = vsel %vm1675, %v3177, 0
    %4382 = vmatpush.msra.mxu0 0.0
    %4383 = vmatpush.msra.mxu0 0.0
    %4384 = vmatpush.msra.mxu0 0.0
    %4385 = vmatpush.msra.mxu0 0.0
    %4386 = vmatpush.msra.mxu0 0.0
    %4387 = vmatpush.msra.mxu0 0.0
    %4388 = vmatpush.msra.mxu0 0.0
    %4389 = vmatpush.msra.mxu0 0.0
    %4390 = vmatpush.msra.mxu0 %v4369
    %4391 = vmatpush.msra.mxu0 %v4368
    %4392 = vmatpush.msra.mxu0 %v4367
    %4393 = vmatpush.msra.mxu0 %v4366
    %4394 = vmatpush.msra.mxu0 %v4365
    %4395 = vmatpush.msra.mxu0 %v4364
    %4396 = vmatpush.msra.mxu0 %v4363
    %4397 = vmatpush.msra.mxu0 %v4362
    %4398 = vmatmul.f32.gmra.mxu0 %v4371
    %v4399 = vpop.f32.mrf.mxu0
    %v4400 = vadd.f32 0.0, %v4399
    %4401 = vmatmul.f32.gmra.mxu0 %v4374
    %v4402 = vpop.f32.mrf.mxu0
    %v4403 = vadd.f32 0.0, %v4402
    %4404 = vmatmul.f32.gmra.mxu0 %v4377
    %v4405 = vpop.f32.mrf.mxu0
    %v4406 = vadd.f32 0.0, %v4405
    %4407 = vmatmul.f32.gmra.mxu0 %v4380
    %v4408 = vpop.f32.mrf.mxu0
    %v4409 = vadd.f32 0.0, %v4408
    %4410 = vdwg.mxu0
    %v4411 = vadd.f32 %v4357, %v4400
    %v4412 = vadd.f32 %v4358, %v4403
    %v4413 = vadd.f32 %v4359, %v4406
    %v4414 = vadd.f32 %v4360, %v4409
    %s4415 = scalar_lea.vmem [#allocation2], 1472
    %v4416 = vld [vmem:[%s4415] sm:$0xff]
    %v4417 = vld [vmem:[%s4415 + $0x8] sm:$0xff]
    %v4418 = vld [vmem:[%s4415 + $0x10] sm:$0xff]
    %v4419 = vld [vmem:[%s4415 + $0x18] sm:$0xff]
    %v4420 = vld [vmem:[%s4415 + $0x20] sm:$0xff]
    %v4421 = vld [vmem:[%s4415 + $0x28] sm:$0xff]
    %v4422 = vld [vmem:[%s4415 + $0x30] sm:$0xff]
    %v4423 = vld [vmem:[%s4415 + $0x38] sm:$0xff]
    %v4425 = vsel %vm1675, %v3178, 0
    %v4428 = vsel %vm1675, %v3179, 0
    %v4431 = vsel %vm1675, %v3180, 0
    %v4434 = vsel %vm1675, %v3181, 0
    %4436 = vmatpush.msra.mxu0 0.0
    %4437 = vmatpush.msra.mxu0 0.0
    %4438 = vmatpush.msra.mxu0 0.0
    %4439 = vmatpush.msra.mxu0 0.0
    %4440 = vmatpush.msra.mxu0 0.0
    %4441 = vmatpush.msra.mxu0 0.0
    %4442 = vmatpush.msra.mxu0 0.0
    %4443 = vmatpush.msra.mxu0 0.0
    %4444 = vmatpush.msra.mxu0 %v4423
    %4445 = vmatpush.msra.mxu0 %v4422
    %4446 = vmatpush.msra.mxu0 %v4421
    %4447 = vmatpush.msra.mxu0 %v4420
    %4448 = vmatpush.msra.mxu0 %v4419
    %4449 = vmatpush.msra.mxu0 %v4418
    %4450 = vmatpush.msra.mxu0 %v4417
    %4451 = vmatpush.msra.mxu0 %v4416
    %4452 = vmatmul.f32.gmra.mxu0 %v4425
    %v4453 = vpop.f32.mrf.mxu0
    %v4454 = vadd.f32 0.0, %v4453
    %4455 = vmatmul.f32.gmra.mxu0 %v4428
    %v4456 = vpop.f32.mrf.mxu0
    %v4457 = vadd.f32 0.0, %v4456
    %4458 = vmatmul.f32.gmra.mxu0 %v4431
    %v4459 = vpop.f32.mrf.mxu0
    %v4460 = vadd.f32 0.0, %v4459
    %4461 = vmatmul.f32.gmra.mxu0 %v4434
    %v4462 = vpop.f32.mrf.mxu0
    %v4463 = vadd.f32 0.0, %v4462
    %4464 = vdwg.mxu0
    %v4465 = vadd.f32 %v4411, %v4454
    %v4466 = vadd.f32 %v4412, %v4457
    %v4467 = vadd.f32 %v4413, %v4460
    %v4468 = vadd.f32 %v4414, %v4463
    %v4469 = vld [vmem:[%s6] sm:$0x1]
    %v4471 = vperm.slane %v4469, 0
    %v4473 = vadd.f32 %v4465, %v4471
    %v4474 = vadd.f32 %v4466, %v4471
    %v4475 = vadd.f32 %v4467, %v4471
    %v4476 = vadd.f32 %v4468, %v4471
    %v4477 = vmax.f32 %v4473, 0.0
    %v4478 = vmax.f32 %v4474, 0.0
    %v4479 = vmax.f32 %v4475, 0.0
    %v4480 = vmax.f32 %v4476, 0.0
    %v4481 = vld [vmem:[%s7] sm:$0xff]
    %v4482 = vld [vmem:[%s7 + $0x8] sm:$0xff]
    %v4483 = vld [vmem:[%s7 + $0x10] sm:$0xff]
    %v4484 = vld [vmem:[%s7 + $0x18] sm:$0xff]
    %v4485 = vld [vmem:[%s7 + $0x20] sm:$0xff]
    %v4486 = vld [vmem:[%s7 + $0x28] sm:$0xff]
    %v4487 = vld [vmem:[%s7 + $0x30] sm:$0xff]
    %v4488 = vld [vmem:[%s7 + $0x38] sm:$0xff]
    %v4489 = vld [vmem:[%s7 + $0x40] sm:$0xff]
    %v4490 = vld [vmem:[%s7 + $0x48] sm:$0xff]
    %v4491 = vld [vmem:[%s7 + $0x50] sm:$0xff]
    %v4492 = vld [vmem:[%s7 + $0x58] sm:$0xff]
    %v4493 = vld [vmem:[%s7 + $0x60] sm:$0xff]
    %v4494 = vld [vmem:[%s7 + $0x68] sm:$0xff]
    %v4495 = vld [vmem:[%s7 + $0x70] sm:$0xff]
    %v4496 = vld [vmem:[%s7 + $0x78] sm:$0xff]
    %v4497 = vld [vmem:[%s8] sm:$0x1]
    %v4499 = vperm.slane %v4497, 0
    %4501 = vmatpush.msra.mxu0 %v4496
    %4502 = vmatpush.msra.mxu0 %v4495
    %4503 = vmatpush.msra.mxu0 %v4494
    %4504 = vmatpush.msra.mxu0 %v4493
    %4505 = vmatpush.msra.mxu0 %v4492
    %4506 = vmatpush.msra.mxu0 %v4491
    %4507 = vmatpush.msra.mxu0 %v4490
    %4508 = vmatpush.msra.mxu0 %v4489
    %4509 = vmatpush.msra.mxu0 %v4488
    %4510 = vmatpush.msra.mxu0 %v4487
    %4511 = vmatpush.msra.mxu0 %v4486
    %4512 = vmatpush.msra.mxu0 %v4485
    %4513 = vmatpush.msra.mxu0 %v4484
    %4514 = vmatpush.msra.mxu0 %v4483
    %4515 = vmatpush.msra.mxu0 %v4482
    %4516 = vmatpush.msra.mxu0 %v4481
    %4517 = vmatmul.f32.gmra.mxu0 %v4477
    %v4518 = vpop.f32.mrf.mxu0
    %v4519 = vadd.f32 %v4499, %v4518
    %4520 = vmatmul.f32.gmra.mxu0 %v4478
    %v4521 = vpop.f32.mrf.mxu0
    %v4522 = vadd.f32 %v4499, %v4521
    %4523 = vmatmul.f32.gmra.mxu0 %v4479
    %v4524 = vpop.f32.mrf.mxu0
    %v4525 = vadd.f32 %v4499, %v4524
    %4526 = vmatmul.f32.gmra.mxu0 %v4480
    %v4527 = vpop.f32.mrf.mxu0
    %v4528 = vadd.f32 %v4499, %v4527
    %4529 = vdwg.mxu0
    %vm4530 = vcmask 97280
    %4531 = vst.msk [vmem:[%s9] sm:$0xff] %vm4530, %v4519
    %4532 = vst.msk [vmem:[%s9 + $0x8] sm:$0xff] %vm4530, %v4522
    %4533 = vst.msk [vmem:[%s9 + $0x10] sm:$0xff] %vm4530, %v4525
    %4534 = vst.msk [vmem:[%s9 + $0x18] sm:$0xff] %vm4530, %v4528
    // Predicated region
    $region42: #{dqn_forward.1} parent=1 // pred_check
      _
    $region43: #{dqn_forward.1} parent=1 // pred_check_branch
      %4536 = sbr.rel (0) target = $region45
    $region44: #{dqn_forward.1} parent=1 // pred_region
      _
    $region45: #{dqn_forward.1} parent=1 // pred_fallthru
      _
    // Predicated region
    $region46: #{dqn_forward.1} parent=1 // pred_check
      _
    $region47: #{dqn_forward.1} parent=1 // pred_check_branch
      %4538 = sbr.rel (0) target = $region49
    $region48: #{dqn_forward.1} parent=1 // pred_region
      _
    $region49: #{dqn_forward.1} parent=1 // pred_fallthru
      _
    %4539 = vsyncpa [#allocation3], 1

</llo_original>
